<compile_context>
chip_gen: v5e
topology: v5e:2x2
jax: 0.10.0
libtpu: 0.0.40
codegen_flags: <defaults>
</compile_context>

<pallas_src>
import functools

import jax
import jax.numpy as jnp
from jax import lax
from jax.experimental import pallas as pl
from jax.experimental.pallas import tpu as pltpu

DEFAULT_EPS = 1e-6  # RMSNorm.__init__ default


def _rmsnorm_kernel(x_ref, w_ref, o_ref, *, eps, inv_d):
    # x_ref: (TM, D) tile of rows, w_ref: (1, D) weight (already x dtype),
    # o_ref: (TM, D).
    x32 = x_ref[...].astype(jnp.float32)                  # x.float()
    ss = jnp.sum(x32 * x32, axis=-1, keepdims=True)       # sum of squares (XLU)
    inv = lax.rsqrt(ss * inv_d + eps)                      # rsqrt(mean + eps) (EUP)
    normed = (x32 * inv).astype(o_ref.dtype)               # .type_as(x)
    o_ref[...] = normed * w_ref[...]                        # * self.weight


def _row_alignment(dtype):
    # Sub-32-bit dtypes pack 2 (bf16) / 4 (int8, fp8) rows per sublane.
    itemsize = jnp.dtype(dtype).itemsize
    if itemsize >= 4:
        return 8
    if itemsize == 2:
        return 16
    return 32


def _pick_tm(rows, D, dtype, tm, vmem_budget_bytes):
    """Pick a row tile: as large as the VMEM budget allows, dtype-aligned."""
    align = _row_alignment(dtype)
    itemsize = jnp.dtype(dtype).itemsize
    # Per-row VMEM cost: 2x-buffered input tile + 2x-buffered output tile
    # plus ~3 f32 intermediates (x32, x32*x32, normed).
    per_row_bytes = D * (4 * itemsize + 3 * 4)
    cap = max(align, (vmem_budget_bytes // per_row_bytes) // align * align)
    if tm is None:
        tm = 1024  # sweet spot per measured HBM-roofline data (512–1024)
    tm = max(align, min(tm, cap))
    tm = (tm // align) * align
    # Ensure >= 2 grid programs when rows allow (lets v7x shard across 2 TCs).
    if tm < rows <= 2 * tm:
        half = pl.cdiv(rows, 2)
        tm = max(align, ((half + align - 1) // align) * align)
    return tm


def rmsnorm(x, weight, *, eps=DEFAULT_EPS, tm=None,
            vmem_budget_bytes=48 * 1024 * 1024):
    """x: (B, S, D), weight: (D,). Returns RMSNorm(x), same shape/dtype as x."""
    B, S, D = x.shape
    rows = B * S
    itemsize = jnp.dtype(x.dtype).itemsize
    tm_ = _pick_tm(rows, D, x.dtype, tm, vmem_budget_bytes)

    x2d = x.reshape(rows, D)
    # Pre-cast weight once in the wrapper: removes a per-tile cast from the loop.
    w2d = weight.astype(x.dtype).reshape(1, D)

    # Pad rows to a multiple of tm (zero rows normalize to zero -> safe),
    # then slice the padding back off.
    num_tiles = pl.cdiv(rows, tm_)
    rows_p = num_tiles * tm_
    if rows_p != rows:
        x2d = jnp.pad(x2d, ((0, rows_p - rows), (0, 0)))

    # Advisory cost for XLA scheduling around this memory-bound custom call.
    cost = pl.CostEstimate(
        flops=4 * rows * D,
        transcendentals=rows,
        bytes_accessed=2 * rows * D * itemsize + D * itemsize,
    )

    # Scoped VMEM sized for the big tile: double-buffered in/out + f32 temps,
    # with headroom, capped below v7x's 64 MiB physical VMEM.
    est = tm_ * D * (4 * itemsize + 3 * 4) + 4 * D
    vmem_limit = int(min(56 * 1024 * 1024, max(32 * 1024 * 1024, 2 * est)))

    kernel = functools.partial(_rmsnorm_kernel, eps=float(eps), inv_d=1.0 / D)

    out2d = pl.pallas_call(
        kernel,
        out_shape=jax.ShapeDtypeStruct((rows_p, D), x.dtype),
        grid_spec=pltpu.PrefetchScalarGridSpec(
            num_scalar_prefetch=0,
            grid=(num_tiles,),
            in_specs=[
                pl.BlockSpec((tm_, D), lambda i: (i, 0)),
                pl.BlockSpec((1, D), lambda i: (0, 0)),
            ],
            out_specs=pl.BlockSpec((tm_, D), lambda i: (i, 0)),
        ),
        compiler_params=pltpu.CompilerParams(
            dimension_semantics=("parallel",),
            vmem_limit_bytes=vmem_limit,
        ),
        cost_estimate=cost,
    )(x2d, w2d)

    if rows_p != rows:
        out2d = out2d[:rows]
    return out2d.reshape(B, S, D)


def rmsnorm_ref(x, weight, eps=DEFAULT_EPS):
    x32 = x.astype(jnp.float32)
    inv = lax.rsqrt(jnp.mean(x32 * x32, axis=-1, keepdims=True) + eps)
    return ((x32 * inv).astype(x.dtype)) * weight.astype(x.dtype)


if __name__ == "__main__":
    # Shapes from ModelArgs: (max_batch_size, max_seq_len, dim) = (10, 256, 512).
    # rows = 2560 -> 3 tiles of tm=1024 with a masked/padded last tile.
    B, S, D = 10, 256, 512
    key = jax.random.PRNGKey(0)
    x = jax.random.normal(key, (B, S, D), dtype=jnp.float32)
    # Deterministic parameter init: nn.Parameter(torch.ones(dim))
    weight = jnp.ones((D,), dtype=jnp.float32)

    out = rmsnorm(x, weight)
    out = jax.block_until_ready(out)

    ref = rmsnorm_ref(x, weight)
    assert out.shape == x.shape and out.dtype == x.dtype
    assert jnp.allclose(out, ref, atol=1e-5, rtol=1e-5)
    print("KERNEL_OK")
</pallas_src>

<mosaic_0001>
module attributes {stable_mosaic.version = 11 : i64} {
  func.func @_rmsnorm_kernel(%arg0: i32, %arg1: memref<1024x512xf32, #tpu.memory_space<vmem>>, %arg2: memref<1x512xf32, #tpu.memory_space<vmem>>, %arg3: memref<1024x512xf32, #tpu.memory_space<vmem>>) attributes {dimension_semantics = [#tpu.dimension_semantics<parallel>], iteration_bounds = array<i64: 3>, scalar_prefetch = 0 : i64, scratch_operands = 0 : i64, tpu.core_type = #tpu.core_type<tc>, window_params = [{transform_indices = @transform_0, window_bounds = array<i64: 1024, 512>}, {pipeline_mode = #tpu.pipeline_mode<synchronous>, transform_indices = @transform_1, window_bounds = array<i64: 1, 512>}, {transform_indices = @transform_2, window_bounds = array<i64: 1024, 512>}]} {
    %c0 = arith.constant 0 : index
    %c0_0 = arith.constant 0 : index
    %0 = vector.load %arg1[%c0, %c0_0] : memref<1024x512xf32, #tpu.memory_space<vmem>>, vector<1024x512xf32>
    %1 = arith.mulf %0, %0 : vector<1024x512xf32>
    %cst = arith.constant dense<0.000000e+00> : vector<1024xf32>
    %2 = vector.multi_reduction <add>, %1, %cst [1] : vector<1024x512xf32> to vector<1024xf32>
    %3 = vector.shape_cast %2 : vector<1024xf32> to vector<1024x1xf32>
    %cst_1 = arith.constant 0.001953125 : f32
    %4 = vector.broadcast %cst_1 : f32 to vector<1024x1xf32>
    %5 = arith.mulf %3, %4 : vector<1024x1xf32>
    %cst_2 = arith.constant 9.99999997E-7 : f32
    %6 = vector.broadcast %cst_2 : f32 to vector<1024x1xf32>
    %7 = arith.addf %5, %6 : vector<1024x1xf32>
    %8 = math.rsqrt %7 : vector<1024x1xf32>
    %9 = vector.broadcast %8 : vector<1024x1xf32> to vector<1024x512xf32>
    %10 = arith.mulf %0, %9 : vector<1024x512xf32>
    %c0_3 = arith.constant 0 : index
    %c0_4 = arith.constant 0 : index
    %11 = vector.load %arg2[%c0_3, %c0_4] : memref<1x512xf32, #tpu.memory_space<vmem>>, vector<1x512xf32>
    %12 = vector.broadcast %11 : vector<1x512xf32> to vector<1024x512xf32>
    %13 = arith.mulf %10, %12 : vector<1024x512xf32>
    %c0_5 = arith.constant 0 : index
    %c0_6 = arith.constant 0 : index
    %14 = vector.load %arg3[%c0_5, %c0_6] : memref<1024x512xf32, #tpu.memory_space<vmem>>, vector<1024x512xf32>
    tpu.vector_store %arg3[%c0_5, %c0_6], %13 {strides = array<i32>} : memref<1024x512xf32, #tpu.memory_space<vmem>>, vector<1024x512xf32>,
    return
  }
  func.func @transform_0(%arg0: i32) -> (i32, i32) {
    %c0_i32 = arith.constant 0 : i32
    %c0_i32_0 = arith.constant 0 : i32
    return %arg0, %c0_i32 : i32, i32
  }
  func.func @transform_1(%arg0: i32) -> (i32, i32) {
    %c0_i32 = arith.constant 0 : i32
    %c0_i32_0 = arith.constant 0 : i32
    %c0_i32_1 = arith.constant 0 : i32
    return %c0_i32, %c0_i32_0 : i32, i32
  }
  func.func @transform_2(%arg0: i32) -> (i32, i32) {
    %c0_i32 = arith.constant 0 : i32
    %c0_i32_0 = arith.constant 0 : i32
    return %arg0, %c0_i32 : i32, i32
  }
}

</mosaic_0001>

<llo_original>
// kernel: tpu_custom_call.1
$region0: #{tpu_custom_call.1}
  #allocation0 [shape = 'u32[]', space=smem, size = 0x4, offset = 0x4, fixed_abs, tag = 'smem constant byte address 0x4 - core index']
  #allocation1 [shape = 'u32[72,128]{1,0:T(1,128)}', space=vmem, size = 0x9000, scoped, tag = 'internal scratch']
  %s0 = inlined_call_operand.hbm [shape: f32[3072,512], index: 0, kind: input, shape index: {}]
  %s1 = inlined_call_operand.hbm [shape: f32[1,512], index: 1, kind: input, shape index: {}]
  %s2 = inlined_call_operand.hbm [shape: f32[3072,512], index: 2, kind: output, shape index: {}]
  %s3 = sld [smem:[#allocation0]]
  $region49: #{tpu_custom_call.1} parent=0
    _
  %s5 = ssub.s32 1, %s3
  %s6 = scalar_select 0, %s5, %s3
  $region1: #{tpu_custom_call.1} parent=0
    #allocation2 [shape = 'u8[4194304]{0}', space=vmem, size = 0x400000, scoped, tag = 'input window, operand 0']
    #allocation3 [shape = 's32[2]{0}', space=sflag, size = 0x8, scoped, tag = 'scoped memory for tpu_custom_call.1']
    #allocation4 [shape = 's32[2]{0}', space=sflag, size = 0x8, scoped, tag = 'scoped memory for tpu_custom_call.1']
    #allocation5 [shape = 'u8[2048]{0}', space=vmem, size = 0x800, scoped, tag = 'input window, operand 1, single buffered']
    #allocation6 [shape = 's32[1]{0}', space=sflag, size = 0x4, scoped, tag = 'scoped memory for tpu_custom_call.1']
    #allocation7 [shape = 'u8[4194304]{0}', space=vmem, size = 0x400000, scoped, tag = 'output window, operand 0']
    %7 = vsyncpa [#allocation3], 0
    %s8 = scalar_lea.sflag [#allocation3], 1
    %9 = vsyncpa %s8, 0
    %10 = vsyncpa [#allocation6], 0
    %11 = vsyncpa [#allocation4], 0
    %s12 = scalar_lea.sflag [#allocation4], 1
    %13 = vsyncpa %s12, 0
    loop: start=0, step=1, limit=5
    $region2: #{tpu_custom_call.1} parent=1 // loop_pre_header
      _
    $region3: #{tpu_custom_call.1} parent=1 // loop_header
      %s15 = sphi 0, %s19
      %p16 = scmp.ge.s32.totalorder %s15, 5
      %s25 = sphi 0, %s27
      %s28 = sphi 0, %s25
      %s29 = sphi 0, %s28
      %s45 = sphi 0, %s29
      %s49 = sphi 0, %s49
      %s51 = sphi 0, %s49
      %s52 = sphi 0, %s51
      %s66 = sphi 0, %s52
      %s72 = sphi 0, %s74
      %s75 = sphi 0, %s72
      %s76 = sphi 0, %s75
      %s92 = sphi 0, %s76
    $region4: #{tpu_custom_call.1} parent=1 // loop_header_branch
      %18 = sbr.rel (%p16) target = $region8
    $region5: #{tpu_custom_call.1} parent=1 // loop_body
      %s20 = ssub.s32 %s15, 1
      %s21 = ssub.s32 %s15, 2
      %s22 = sadd.s32 %s15, 1
      %s23 = ssub.s32 %s15, %s22
      %p24 = scmp.eq.s32.totalorder %s23, 0
      %s26 = sadd.s32 %s25, 1
      %s27 = scalar_select %p24, %s25, %s26
      %p30 = pneg %p24
      %p31 = scmp.eq.s32.totalorder %s15, 2
      %p32 = por %p30, %p31
      %p33 = scmp.ne.s32.totalorder %s25, %s28
      %p34 = scmp.eq.s32.totalorder %s15, 0
      %p35 = por %p33, %p34
      %p36 = scmp.ne.s32.totalorder %s25, %s28
      %p37 = scmp.eq.s32.totalorder %s20, 2
      %p38 = por %p36, %p37
      %p39 = scmp.ne.s32.totalorder %s28, %s29
      %p40 = scmp.eq.s32.totalorder %s20, 0
      %p41 = por %p39, %p40
      %p42 = scmp.ne.s32.totalorder %s28, %s29
      %p43 = scmp.eq.s32.totalorder %s21, 2
      %p44 = por %p42, %p43
      %p46 = scmp.ne.s32.totalorder %s29, %s45
      %p47 = scmp.eq.s32.totalorder %s21, 0
      %p48 = por %p46, %p47
      %s50 = sadd.s32 %s49, 1
      %p53 = scmp.eq.s32.totalorder %s15, 2
      %p54 = scmp.ne.s32.totalorder %s49, %s51
      %p55 = scmp.eq.s32.totalorder %s15, 0
      %p56 = por %p54, %p55
      %p57 = scmp.ne.s32.totalorder %s49, %s51
      %p58 = scmp.eq.s32.totalorder %s20, 2
      %p59 = por %p57, %p58
      %p60 = scmp.ne.s32.totalorder %s51, %s52
      %p61 = scmp.eq.s32.totalorder %s20, 0
      %p62 = por %p60, %p61
      %p63 = scmp.ne.s32.totalorder %s51, %s52
      %p64 = scmp.eq.s32.totalorder %s21, 2
      %p65 = por %p63, %p64
      %p67 = scmp.ne.s32.totalorder %s52, %s66
      %p68 = scmp.eq.s32.totalorder %s21, 0
      %p69 = por %p67, %p68
      %s70 = ssub.s32 %s15, %s22
      %p71 = scmp.eq.s32.totalorder %s70, 0
      %s73 = sadd.s32 %s72, 1
      %s74 = scalar_select %p71, %s72, %s73
      %p77 = pneg %p71
      %p78 = scmp.eq.s32.totalorder %s15, 2
      %p79 = por %p77, %p78
      %p80 = scmp.ne.s32.totalorder %s72, %s75
      %p81 = scmp.eq.s32.totalorder %s15, 0
      %p82 = por %p80, %p81
      %p83 = scmp.ne.s32.totalorder %s72, %s75
      %p84 = scmp.eq.s32.totalorder %s20, 2
      %p85 = por %p83, %p84
      %p86 = scmp.ne.s32.totalorder %s75, %s76
      %p87 = scmp.eq.s32.totalorder %s20, 0
      %p88 = por %p86, %p87
      %p89 = scmp.ne.s32.totalorder %s75, %s76
      %p90 = scmp.eq.s32.totalorder %s21, 2
      %p91 = por %p89, %p90
      %p93 = scmp.ne.s32.totalorder %s76, %s92
      %p94 = scmp.eq.s32.totalorder %s21, 0
      %p95 = por %p93, %p94
      %p96 = scmp.le.s32.totalorder 1, %s15
      %p97 = scmp.lt.s32.totalorder %s15, 4
      %p98 = pnand %p96, %p97
      %p99 = pneg %p98
      // Predicated region
      $region9: #{tpu_custom_call.1} parent=5 // pred_check
        _
      $region10: #{tpu_custom_call.1} parent=5 // pred_check_branch
        %101 = sbr.rel (%p98) target = $region12
      $region11: #{tpu_custom_call.1} parent=5 // pred_region
        %s102 = ssub.s32 %s15, 1
        // Predicated region
        $region13: #{tpu_custom_call.1} parent=11 // pred_check
          %p103 = pneg %p62
        $region14: #{tpu_custom_call.1} parent=11 // pred_check_branch
          %105 = sbr.rel (%p103) target = $region16
        $region15: #{tpu_custom_call.1} parent=11 // pred_region
          %107 = vsyncadd [#allocation6], 0
          %s109 = sshll.u32 %s1, 4
          %s110 = int_to_ptr.hbm [resolvable:$true] %s109
          %s111 = sshll.u32 [#allocation5], 4
          %s112 = int_to_ptr.vmem [resolvable:$true] %s111
          %114 = dma.hbm_to_vmem [thread:$0]  %s110, 64, %s112, [#allocation6]
        $region16: #{tpu_custom_call.1} parent=11 // pred_fallthru
          _
      $region12: #{tpu_custom_call.1} parent=5 // pred_fallthru
        _
      %p115 = scmp.lt.s32.totalorder %s15, 3
      // Predicated region
      $region17: #{tpu_custom_call.1} parent=5 // pred_check
        %p116 = pneg %p115
      $region18: #{tpu_custom_call.1} parent=5 // pred_check_branch
        %118 = sbr.rel (%p116) target = $region20
      $region19: #{tpu_custom_call.1} parent=5 // pred_region
        // Predicated region
        $region21: #{tpu_custom_call.1} parent=19 // pred_check
          %p119 = pneg %p35
        $region22: #{tpu_custom_call.1} parent=19 // pred_check_branch
          %121 = sbr.rel (%p119) target = $region24
        $region23: #{tpu_custom_call.1} parent=19 // pred_region
          %s122 = sand.u32 %s25, 1
          %s123 = scalar_lea.sflag [#allocation3], %s122
          %s124 = sand.u32 %s25, 1
          %s125 = smul.addr %s124, 4096
          %s126 = scalar_lea.vmem [#allocation2], %s125
          %s127 = smul.u32 128, %s15
          %129 = vsyncadd %s123, 0
          %s130 = smul.addr %s127, 4
          %s131 = smul.addr %s130, 8
          %s132 = scalar_lea.hbm %s0, %s131
          %s133 = sshll.u32 %s132, 4
          %s134 = int_to_ptr.hbm [resolvable:$true] %s133
          %s135 = sshll.u32 %s126, 4
          %s136 = int_to_ptr.vmem [resolvable:$true] %s135
          %141 = dma.hbm_to_vmem [thread:$0]  %s134, 65536, %s136, %s123, 512, 512, 32
        $region24: #{tpu_custom_call.1} parent=19 // pred_fallthru
          _
      $region20: #{tpu_custom_call.1} parent=5 // pred_fallthru
        _
      %p142 = scmp.le.s32.totalorder 1, %s15
      %p143 = scmp.lt.s32.totalorder %s15, 4
      %p144 = pnand %p142, %p143
      %p145 = pneg %p144
      // Predicated region
      $region25: #{tpu_custom_call.1} parent=5 // pred_check
        _
      $region26: #{tpu_custom_call.1} parent=5 // pred_check_branch
        %147 = sbr.rel (%p144) target = $region28
      $region27: #{tpu_custom_call.1} parent=5 // pred_region
        %s148 = ssub.s32 %s15, 1
        %s149 = sand.u32 %s28, 1
        %s150 = scalar_lea.sflag [#allocation3], %s149
        %s151 = sand.u32 %s28, 1
        %s152 = smul.addr %s151, 4096
        %s153 = scalar_lea.vmem [#allocation2], %s152
        // Predicated region
        $region29: #{tpu_custom_call.1} parent=27 // pred_check
          %p154 = pneg %p41
        $region30: #{tpu_custom_call.1} parent=27 // pred_check_branch
          %156 = sbr.rel (%p154) target = $region32
        $region31: #{tpu_custom_call.1} parent=27 // pred_region
          %158 = dma.done %s150, 65536
        $region32: #{tpu_custom_call.1} parent=27 // pred_fallthru
          _
        // Predicated region
        $region33: #{tpu_custom_call.1} parent=27 // pred_check
          %p159 = pneg %p62
        $region34: #{tpu_custom_call.1} parent=27 // pred_check_branch
          %161 = sbr.rel (%p159) target = $region36
        $region35: #{tpu_custom_call.1} parent=27 // pred_region
          %163 = dma.done [#allocation6], 64
        $region36: #{tpu_custom_call.1} parent=27 // pred_fallthru
          _
        %s164 = sand.u32 %s28, 1
        %s165 = scalar_lea.sflag [#allocation3], %s164
        %s166 = sand.u32 %s28, 1
        %s167 = smul.addr %s166, 4096
        %s168 = scalar_lea.vmem [#allocation2], %s167
        %p169 = pneg %p41
        %p170 = pneg %p38
        %p171 = pneg %p62
        %p172 = pneg %p59
        %p173 = pneg %p88
        %p174 = pneg %p85
        %s175 = sand.u32 %s75, 1
        %s176 = scalar_lea.sflag [#allocation4], %s175
        %s177 = sand.u32 %s75, 1
        %s178 = smul.addr %s177, 4096
        %s179 = scalar_lea.vmem [#allocation7], %s178
        %s180 = smul.u32 128, %s20
        %s181 = smul.u32 128, %s20
        %v182 = vld [vmem:[%s153] sm:$0xff]
        %v183 = vld [vmem:[%s153 + $0x8] sm:$0xff]
        %v184 = vld [vmem:[%s153 + $0x10] sm:$0xff]
        %v185 = vld [vmem:[%s153 + $0x18] sm:$0xff]
        %v186 = vld [vmem:[%s153 + $0x20] sm:$0xff]
        %v187 = vld [vmem:[%s153 + $0x28] sm:$0xff]
        %v188 = vld [vmem:[%s153 + $0x30] sm:$0xff]
        %v189 = vld [vmem:[%s153 + $0x38] sm:$0xff]
        %v190 = vld [vmem:[%s153 + $0x40] sm:$0xff]
        %v191 = vld [vmem:[%s153 + $0x48] sm:$0xff]
        %v192 = vld [vmem:[%s153 + $0x50] sm:$0xff]
        %v193 = vld [vmem:[%s153 + $0x58] sm:$0xff]
        %v194 = vld [vmem:[%s153 + $0x60] sm:$0xff]
        %v195 = vld [vmem:[%s153 + $0x68] sm:$0xff]
        %v196 = vld [vmem:[%s153 + $0x70] sm:$0xff]
        %v197 = vld [vmem:[%s153 + $0x78] sm:$0xff]
        %v198 = vld [vmem:[%s153 + $0x80] sm:$0xff]
        %v199 = vld [vmem:[%s153 + $0x88] sm:$0xff]
        %v200 = vld [vmem:[%s153 + $0x90] sm:$0xff]
        %v201 = vld [vmem:[%s153 + $0x98] sm:$0xff]
        %v202 = vld [vmem:[%s153 + $0xa0] sm:$0xff]
        %v203 = vld [vmem:[%s153 + $0xa8] sm:$0xff]
        %v204 = vld [vmem:[%s153 + $0xb0] sm:$0xff]
        %v205 = vld [vmem:[%s153 + $0xb8] sm:$0xff]
        %v206 = vld [vmem:[%s153 + $0xc0] sm:$0xff]
        %v207 = vld [vmem:[%s153 + $0xc8] sm:$0xff]
        %v208 = vld [vmem:[%s153 + $0xd0] sm:$0xff]
        %v209 = vld [vmem:[%s153 + $0xd8] sm:$0xff]
        %v210 = vld [vmem:[%s153 + $0xe0] sm:$0xff]
        %v211 = vld [vmem:[%s153 + $0xe8] sm:$0xff]
        %v212 = vld [vmem:[%s153 + $0xf0] sm:$0xff]
        %v213 = vld [vmem:[%s153 + $0xf8] sm:$0xff]
        %v214 = vld [vmem:[%s153 + $0x100] sm:$0xff]
        %v215 = vld [vmem:[%s153 + $0x108] sm:$0xff]
        %v216 = vld [vmem:[%s153 + $0x110] sm:$0xff]
        %v217 = vld [vmem:[%s153 + $0x118] sm:$0xff]
        %v218 = vld [vmem:[%s153 + $0x120] sm:$0xff]
        %v219 = vld [vmem:[%s153 + $0x128] sm:$0xff]
        %v220 = vld [vmem:[%s153 + $0x130] sm:$0xff]
        %v221 = vld [vmem:[%s153 + $0x138] sm:$0xff]
        %v222 = vld [vmem:[%s153 + $0x140] sm:$0xff]
        %v223 = vld [vmem:[%s153 + $0x148] sm:$0xff]
        %v224 = vld [vmem:[%s153 + $0x150] sm:$0xff]
        %v225 = vld [vmem:[%s153 + $0x158] sm:$0xff]
        %v226 = vld [vmem:[%s153 + $0x160] sm:$0xff]
        %v227 = vld [vmem:[%s153 + $0x168] sm:$0xff]
        %v228 = vld [vmem:[%s153 + $0x170] sm:$0xff]
        %v229 = vld [vmem:[%s153 + $0x178] sm:$0xff]
        %v230 = vld [vmem:[%s153 + $0x180] sm:$0xff]
        %v231 = vld [vmem:[%s153 + $0x188] sm:$0xff]
        %v232 = vld [vmem:[%s153 + $0x190] sm:$0xff]
        %v233 = vld [vmem:[%s153 + $0x198] sm:$0xff]
        %v234 = vld [vmem:[%s153 + $0x1a0] sm:$0xff]
        %v235 = vld [vmem:[%s153 + $0x1a8] sm:$0xff]
        %v236 = vld [vmem:[%s153 + $0x1b0] sm:$0xff]
        %v237 = vld [vmem:[%s153 + $0x1b8] sm:$0xff]
        %v238 = vld [vmem:[%s153 + $0x1c0] sm:$0xff]
        %v239 = vld [vmem:[%s153 + $0x1c8] sm:$0xff]
        %v240 = vld [vmem:[%s153 + $0x1d0] sm:$0xff]
        %v241 = vld [vmem:[%s153 + $0x1d8] sm:$0xff]
        %v242 = vld [vmem:[%s153 + $0x1e0] sm:$0xff]
        %v243 = vld [vmem:[%s153 + $0x1e8] sm:$0xff]
        %v244 = vld [vmem:[%s153 + $0x1f0] sm:$0xff]
        %v245 = vld [vmem:[%s153 + $0x1f8] sm:$0xff]
        %v246 = vld [vmem:[%s153 + $0x200] sm:$0xff]
        %v247 = vld [vmem:[%s153 + $0x208] sm:$0xff]
        %v248 = vld [vmem:[%s153 + $0x210] sm:$0xff]
        %v249 = vld [vmem:[%s153 + $0x218] sm:$0xff]
        %v250 = vld [vmem:[%s153 + $0x220] sm:$0xff]
        %v251 = vld [vmem:[%s153 + $0x228] sm:$0xff]
        %v252 = vld [vmem:[%s153 + $0x230] sm:$0xff]
        %v253 = vld [vmem:[%s153 + $0x238] sm:$0xff]
        %v254 = vld [vmem:[%s153 + $0x240] sm:$0xff]
        %v255 = vld [vmem:[%s153 + $0x248] sm:$0xff]
        %v256 = vld [vmem:[%s153 + $0x250] sm:$0xff]
        %v257 = vld [vmem:[%s153 + $0x258] sm:$0xff]
        %v258 = vld [vmem:[%s153 + $0x260] sm:$0xff]
        %v259 = vld [vmem:[%s153 + $0x268] sm:$0xff]
        %v260 = vld [vmem:[%s153 + $0x270] sm:$0xff]
        %v261 = vld [vmem:[%s153 + $0x278] sm:$0xff]
        %v262 = vld [vmem:[%s153 + $0x280] sm:$0xff]
        %v263 = vld [vmem:[%s153 + $0x288] sm:$0xff]
        %v264 = vld [vmem:[%s153 + $0x290] sm:$0xff]
        %v265 = vld [vmem:[%s153 + $0x298] sm:$0xff]
        %v266 = vld [vmem:[%s153 + $0x2a0] sm:$0xff]
        %v267 = vld [vmem:[%s153 + $0x2a8] sm:$0xff]
        %v268 = vld [vmem:[%s153 + $0x2b0] sm:$0xff]
        %v269 = vld [vmem:[%s153 + $0x2b8] sm:$0xff]
        %v270 = vld [vmem:[%s153 + $0x2c0] sm:$0xff]
        %v271 = vld [vmem:[%s153 + $0x2c8] sm:$0xff]
        %v272 = vld [vmem:[%s153 + $0x2d0] sm:$0xff]
        %v273 = vld [vmem:[%s153 + $0x2d8] sm:$0xff]
        %v274 = vld [vmem:[%s153 + $0x2e0] sm:$0xff]
        %v275 = vld [vmem:[%s153 + $0x2e8] sm:$0xff]
        %v276 = vld [vmem:[%s153 + $0x2f0] sm:$0xff]
        %v277 = vld [vmem:[%s153 + $0x2f8] sm:$0xff]
        %v278 = vld [vmem:[%s153 + $0x300] sm:$0xff]
        %v279 = vld [vmem:[%s153 + $0x308] sm:$0xff]
        %v280 = vld [vmem:[%s153 + $0x310] sm:$0xff]
        %v281 = vld [vmem:[%s153 + $0x318] sm:$0xff]
        %v282 = vld [vmem:[%s153 + $0x320] sm:$0xff]
        %v283 = vld [vmem:[%s153 + $0x328] sm:$0xff]
        %v284 = vld [vmem:[%s153 + $0x330] sm:$0xff]
        %v285 = vld [vmem:[%s153 + $0x338] sm:$0xff]
        %v286 = vld [vmem:[%s153 + $0x340] sm:$0xff]
        %v287 = vld [vmem:[%s153 + $0x348] sm:$0xff]
        %v288 = vld [vmem:[%s153 + $0x350] sm:$0xff]
        %v289 = vld [vmem:[%s153 + $0x358] sm:$0xff]
        %v290 = vld [vmem:[%s153 + $0x360] sm:$0xff]
        %v291 = vld [vmem:[%s153 + $0x368] sm:$0xff]
        %v292 = vld [vmem:[%s153 + $0x370] sm:$0xff]
        %v293 = vld [vmem:[%s153 + $0x378] sm:$0xff]
        %v294 = vld [vmem:[%s153 + $0x380] sm:$0xff]
        %v295 = vld [vmem:[%s153 + $0x388] sm:$0xff]
        %v296 = vld [vmem:[%s153 + $0x390] sm:$0xff]
        %v297 = vld [vmem:[%s153 + $0x398] sm:$0xff]
        %v298 = vld [vmem:[%s153 + $0x3a0] sm:$0xff]
        %v299 = vld [vmem:[%s153 + $0x3a8] sm:$0xff]
        %v300 = vld [vmem:[%s153 + $0x3b0] sm:$0xff]
        %v301 = vld [vmem:[%s153 + $0x3b8] sm:$0xff]
        %v302 = vld [vmem:[%s153 + $0x3c0] sm:$0xff]
        %v303 = vld [vmem:[%s153 + $0x3c8] sm:$0xff]
        %v304 = vld [vmem:[%s153 + $0x3d0] sm:$0xff]
        %v305 = vld [vmem:[%s153 + $0x3d8] sm:$0xff]
        %v306 = vld [vmem:[%s153 + $0x3e0] sm:$0xff]
        %v307 = vld [vmem:[%s153 + $0x3e8] sm:$0xff]
        %v308 = vld [vmem:[%s153 + $0x3f0] sm:$0xff]
        %v309 = vld [vmem:[%s153 + $0x3f8] sm:$0xff]
        %v310 = vld [vmem:[%s153 + $0x400] sm:$0xff]
        %v311 = vld [vmem:[%s153 + $0x408] sm:$0xff]
        %v312 = vld [vmem:[%s153 + $0x410] sm:$0xff]
        %v313 = vld [vmem:[%s153 + $0x418] sm:$0xff]
        %v314 = vld [vmem:[%s153 + $0x420] sm:$0xff]
        %v315 = vld [vmem:[%s153 + $0x428] sm:$0xff]
        %v316 = vld [vmem:[%s153 + $0x430] sm:$0xff]
        %v317 = vld [vmem:[%s153 + $0x438] sm:$0xff]
        %v318 = vld [vmem:[%s153 + $0x440] sm:$0xff]
        %v319 = vld [vmem:[%s153 + $0x448] sm:$0xff]
        %v320 = vld [vmem:[%s153 + $0x450] sm:$0xff]
        %v321 = vld [vmem:[%s153 + $0x458] sm:$0xff]
        %v322 = vld [vmem:[%s153 + $0x460] sm:$0xff]
        %v323 = vld [vmem:[%s153 + $0x468] sm:$0xff]
        %v324 = vld [vmem:[%s153 + $0x470] sm:$0xff]
        %v325 = vld [vmem:[%s153 + $0x478] sm:$0xff]
        %v326 = vld [vmem:[%s153 + $0x480] sm:$0xff]
        %v327 = vld [vmem:[%s153 + $0x488] sm:$0xff]
        %v328 = vld [vmem:[%s153 + $0x490] sm:$0xff]
        %v329 = vld [vmem:[%s153 + $0x498] sm:$0xff]
        %v330 = vld [vmem:[%s153 + $0x4a0] sm:$0xff]
        %v331 = vld [vmem:[%s153 + $0x4a8] sm:$0xff]
        %v332 = vld [vmem:[%s153 + $0x4b0] sm:$0xff]
        %v333 = vld [vmem:[%s153 + $0x4b8] sm:$0xff]
        %v334 = vld [vmem:[%s153 + $0x4c0] sm:$0xff]
        %v335 = vld [vmem:[%s153 + $0x4c8] sm:$0xff]
        %v336 = vld [vmem:[%s153 + $0x4d0] sm:$0xff]
        %v337 = vld [vmem:[%s153 + $0x4d8] sm:$0xff]
        %v338 = vld [vmem:[%s153 + $0x4e0] sm:$0xff]
        %v339 = vld [vmem:[%s153 + $0x4e8] sm:$0xff]
        %v340 = vld [vmem:[%s153 + $0x4f0] sm:$0xff]
        %v341 = vld [vmem:[%s153 + $0x4f8] sm:$0xff]
        %v342 = vld [vmem:[%s153 + $0x500] sm:$0xff]
        %v343 = vld [vmem:[%s153 + $0x508] sm:$0xff]
        %v344 = vld [vmem:[%s153 + $0x510] sm:$0xff]
        %v345 = vld [vmem:[%s153 + $0x518] sm:$0xff]
        %v346 = vld [vmem:[%s153 + $0x520] sm:$0xff]
        %v347 = vld [vmem:[%s153 + $0x528] sm:$0xff]
        %v348 = vld [vmem:[%s153 + $0x530] sm:$0xff]
        %v349 = vld [vmem:[%s153 + $0x538] sm:$0xff]
        %v350 = vld [vmem:[%s153 + $0x540] sm:$0xff]
        %v351 = vld [vmem:[%s153 + $0x548] sm:$0xff]
        %v352 = vld [vmem:[%s153 + $0x550] sm:$0xff]
        %v353 = vld [vmem:[%s153 + $0x558] sm:$0xff]
        %v354 = vld [vmem:[%s153 + $0x560] sm:$0xff]
        %v355 = vld [vmem:[%s153 + $0x568] sm:$0xff]
        %v356 = vld [vmem:[%s153 + $0x570] sm:$0xff]
        %v357 = vld [vmem:[%s153 + $0x578] sm:$0xff]
        %v358 = vld [vmem:[%s153 + $0x580] sm:$0xff]
        %v359 = vld [vmem:[%s153 + $0x588] sm:$0xff]
        %v360 = vld [vmem:[%s153 + $0x590] sm:$0xff]
        %v361 = vld [vmem:[%s153 + $0x598] sm:$0xff]
        %v362 = vld [vmem:[%s153 + $0x5a0] sm:$0xff]
        %v363 = vld [vmem:[%s153 + $0x5a8] sm:$0xff]
        %v364 = vld [vmem:[%s153 + $0x5b0] sm:$0xff]
        %v365 = vld [vmem:[%s153 + $0x5b8] sm:$0xff]
        %v366 = vld [vmem:[%s153 + $0x5c0] sm:$0xff]
        %v367 = vld [vmem:[%s153 + $0x5c8] sm:$0xff]
        %v368 = vld [vmem:[%s153 + $0x5d0] sm:$0xff]
        %v369 = vld [vmem:[%s153 + $0x5d8] sm:$0xff]
        %v370 = vld [vmem:[%s153 + $0x5e0] sm:$0xff]
        %v371 = vld [vmem:[%s153 + $0x5e8] sm:$0xff]
        %v372 = vld [vmem:[%s153 + $0x5f0] sm:$0xff]
        %v373 = vld [vmem:[%s153 + $0x5f8] sm:$0xff]
        %v374 = vld [vmem:[%s153 + $0x600] sm:$0xff]
        %v375 = vld [vmem:[%s153 + $0x608] sm:$0xff]
        %v376 = vld [vmem:[%s153 + $0x610] sm:$0xff]
        %v377 = vld [vmem:[%s153 + $0x618] sm:$0xff]
        %v378 = vld [vmem:[%s153 + $0x620] sm:$0xff]
        %v379 = vld [vmem:[%s153 + $0x628] sm:$0xff]
        %v380 = vld [vmem:[%s153 + $0x630] sm:$0xff]
        %v381 = vld [vmem:[%s153 + $0x638] sm:$0xff]
        %v382 = vld [vmem:[%s153 + $0x640] sm:$0xff]
        %v383 = vld [vmem:[%s153 + $0x648] sm:$0xff]
        %v384 = vld [vmem:[%s153 + $0x650] sm:$0xff]
        %v385 = vld [vmem:[%s153 + $0x658] sm:$0xff]
        %v386 = vld [vmem:[%s153 + $0x660] sm:$0xff]
        %v387 = vld [vmem:[%s153 + $0x668] sm:$0xff]
        %v388 = vld [vmem:[%s153 + $0x670] sm:$0xff]
        %v389 = vld [vmem:[%s153 + $0x678] sm:$0xff]
        %v390 = vld [vmem:[%s153 + $0x680] sm:$0xff]
        %v391 = vld [vmem:[%s153 + $0x688] sm:$0xff]
        %v392 = vld [vmem:[%s153 + $0x690] sm:$0xff]
        %v393 = vld [vmem:[%s153 + $0x698] sm:$0xff]
        %v394 = vld [vmem:[%s153 + $0x6a0] sm:$0xff]
        %v395 = vld [vmem:[%s153 + $0x6a8] sm:$0xff]
        %v396 = vld [vmem:[%s153 + $0x6b0] sm:$0xff]
        %v397 = vld [vmem:[%s153 + $0x6b8] sm:$0xff]
        %v398 = vld [vmem:[%s153 + $0x6c0] sm:$0xff]
        %v399 = vld [vmem:[%s153 + $0x6c8] sm:$0xff]
        %v400 = vld [vmem:[%s153 + $0x6d0] sm:$0xff]
        %v401 = vld [vmem:[%s153 + $0x6d8] sm:$0xff]
        %v402 = vld [vmem:[%s153 + $0x6e0] sm:$0xff]
        %v403 = vld [vmem:[%s153 + $0x6e8] sm:$0xff]
        %v404 = vld [vmem:[%s153 + $0x6f0] sm:$0xff]
        %v405 = vld [vmem:[%s153 + $0x6f8] sm:$0xff]
        %v406 = vld [vmem:[%s153 + $0x700] sm:$0xff]
        %v407 = vld [vmem:[%s153 + $0x708] sm:$0xff]
        %v408 = vld [vmem:[%s153 + $0x710] sm:$0xff]
        %v409 = vld [vmem:[%s153 + $0x718] sm:$0xff]
        %v410 = vld [vmem:[%s153 + $0x720] sm:$0xff]
        %v411 = vld [vmem:[%s153 + $0x728] sm:$0xff]
        %v412 = vld [vmem:[%s153 + $0x730] sm:$0xff]
        %v413 = vld [vmem:[%s153 + $0x738] sm:$0xff]
        %v414 = vld [vmem:[%s153 + $0x740] sm:$0xff]
        %v415 = vld [vmem:[%s153 + $0x748] sm:$0xff]
        %v416 = vld [vmem:[%s153 + $0x750] sm:$0xff]
        %v417 = vld [vmem:[%s153 + $0x758] sm:$0xff]
        %v418 = vld [vmem:[%s153 + $0x760] sm:$0xff]
        %v419 = vld [vmem:[%s153 + $0x768] sm:$0xff]
        %v420 = vld [vmem:[%s153 + $0x770] sm:$0xff]
        %v421 = vld [vmem:[%s153 + $0x778] sm:$0xff]
        %v422 = vld [vmem:[%s153 + $0x780] sm:$0xff]
        %v423 = vld [vmem:[%s153 + $0x788] sm:$0xff]
        %v424 = vld [vmem:[%s153 + $0x790] sm:$0xff]
        %v425 = vld [vmem:[%s153 + $0x798] sm:$0xff]
        %v426 = vld [vmem:[%s153 + $0x7a0] sm:$0xff]
        %v427 = vld [vmem:[%s153 + $0x7a8] sm:$0xff]
        %v428 = vld [vmem:[%s153 + $0x7b0] sm:$0xff]
        %v429 = vld [vmem:[%s153 + $0x7b8] sm:$0xff]
        %v430 = vld [vmem:[%s153 + $0x7c0] sm:$0xff]
        %v431 = vld [vmem:[%s153 + $0x7c8] sm:$0xff]
        %v432 = vld [vmem:[%s153 + $0x7d0] sm:$0xff]
        %v433 = vld [vmem:[%s153 + $0x7d8] sm:$0xff]
        %v434 = vld [vmem:[%s153 + $0x7e0] sm:$0xff]
        %v435 = vld [vmem:[%s153 + $0x7e8] sm:$0xff]
        %v436 = vld [vmem:[%s153 + $0x7f0] sm:$0xff]
        %v437 = vld [vmem:[%s153 + $0x7f8] sm:$0xff]
        %v438 = vld [vmem:[%s153 + $0x800] sm:$0xff]
        %v439 = vld [vmem:[%s153 + $0x808] sm:$0xff]
        %v440 = vld [vmem:[%s153 + $0x810] sm:$0xff]
        %v441 = vld [vmem:[%s153 + $0x818] sm:$0xff]
        %v442 = vld [vmem:[%s153 + $0x820] sm:$0xff]
        %v443 = vld [vmem:[%s153 + $0x828] sm:$0xff]
        %v444 = vld [vmem:[%s153 + $0x830] sm:$0xff]
        %v445 = vld [vmem:[%s153 + $0x838] sm:$0xff]
        %v446 = vld [vmem:[%s153 + $0x840] sm:$0xff]
        %v447 = vld [vmem:[%s153 + $0x848] sm:$0xff]
        %v448 = vld [vmem:[%s153 + $0x850] sm:$0xff]
        %v449 = vld [vmem:[%s153 + $0x858] sm:$0xff]
        %v450 = vld [vmem:[%s153 + $0x860] sm:$0xff]
        %v451 = vld [vmem:[%s153 + $0x868] sm:$0xff]
        %v452 = vld [vmem:[%s153 + $0x870] sm:$0xff]
        %v453 = vld [vmem:[%s153 + $0x878] sm:$0xff]
        %v454 = vld [vmem:[%s153 + $0x880] sm:$0xff]
        %v455 = vld [vmem:[%s153 + $0x888] sm:$0xff]
        %v456 = vld [vmem:[%s153 + $0x890] sm:$0xff]
        %v457 = vld [vmem:[%s153 + $0x898] sm:$0xff]
        %v458 = vld [vmem:[%s153 + $0x8a0] sm:$0xff]
        %v459 = vld [vmem:[%s153 + $0x8a8] sm:$0xff]
        %v460 = vld [vmem:[%s153 + $0x8b0] sm:$0xff]
        %v461 = vld [vmem:[%s153 + $0x8b8] sm:$0xff]
        %v462 = vld [vmem:[%s153 + $0x8c0] sm:$0xff]
        %v463 = vld [vmem:[%s153 + $0x8c8] sm:$0xff]
        %v464 = vld [vmem:[%s153 + $0x8d0] sm:$0xff]
        %v465 = vld [vmem:[%s153 + $0x8d8] sm:$0xff]
        %v466 = vld [vmem:[%s153 + $0x8e0] sm:$0xff]
        %v467 = vld [vmem:[%s153 + $0x8e8] sm:$0xff]
        %v468 = vld [vmem:[%s153 + $0x8f0] sm:$0xff]
        %v469 = vld [vmem:[%s153 + $0x8f8] sm:$0xff]
        %v470 = vld [vmem:[%s153 + $0x900] sm:$0xff]
        %v471 = vld [vmem:[%s153 + $0x908] sm:$0xff]
        %v472 = vld [vmem:[%s153 + $0x910] sm:$0xff]
        %v473 = vld [vmem:[%s153 + $0x918] sm:$0xff]
        %v474 = vld [vmem:[%s153 + $0x920] sm:$0xff]
        %v475 = vld [vmem:[%s153 + $0x928] sm:$0xff]
        %v476 = vld [vmem:[%s153 + $0x930] sm:$0xff]
        %v477 = vld [vmem:[%s153 + $0x938] sm:$0xff]
        %v478 = vld [vmem:[%s153 + $0x940] sm:$0xff]
        %v479 = vld [vmem:[%s153 + $0x948] sm:$0xff]
        %v480 = vld [vmem:[%s153 + $0x950] sm:$0xff]
        %v481 = vld [vmem:[%s153 + $0x958] sm:$0xff]
        %v482 = vld [vmem:[%s153 + $0x960] sm:$0xff]
        %v483 = vld [vmem:[%s153 + $0x968] sm:$0xff]
        %v484 = vld [vmem:[%s153 + $0x970] sm:$0xff]
        %v485 = vld [vmem:[%s153 + $0x978] sm:$0xff]
        %v486 = vld [vmem:[%s153 + $0x980] sm:$0xff]
        %v487 = vld [vmem:[%s153 + $0x988] sm:$0xff]
        %v488 = vld [vmem:[%s153 + $0x990] sm:$0xff]
        %v489 = vld [vmem:[%s153 + $0x998] sm:$0xff]
        %v490 = vld [vmem:[%s153 + $0x9a0] sm:$0xff]
        %v491 = vld [vmem:[%s153 + $0x9a8] sm:$0xff]
        %v492 = vld [vmem:[%s153 + $0x9b0] sm:$0xff]
        %v493 = vld [vmem:[%s153 + $0x9b8] sm:$0xff]
        %v494 = vld [vmem:[%s153 + $0x9c0] sm:$0xff]
        %v495 = vld [vmem:[%s153 + $0x9c8] sm:$0xff]
        %v496 = vld [vmem:[%s153 + $0x9d0] sm:$0xff]
        %v497 = vld [vmem:[%s153 + $0x9d8] sm:$0xff]
        %v498 = vld [vmem:[%s153 + $0x9e0] sm:$0xff]
        %v499 = vld [vmem:[%s153 + $0x9e8] sm:$0xff]
        %v500 = vld [vmem:[%s153 + $0x9f0] sm:$0xff]
        %v501 = vld [vmem:[%s153 + $0x9f8] sm:$0xff]
        %v502 = vld [vmem:[%s153 + $0xa00] sm:$0xff]
        %v503 = vld [vmem:[%s153 + $0xa08] sm:$0xff]
        %v504 = vld [vmem:[%s153 + $0xa10] sm:$0xff]
        %v505 = vld [vmem:[%s153 + $0xa18] sm:$0xff]
        %v506 = vld [vmem:[%s153 + $0xa20] sm:$0xff]
        %v507 = vld [vmem:[%s153 + $0xa28] sm:$0xff]
        %v508 = vld [vmem:[%s153 + $0xa30] sm:$0xff]
        %v509 = vld [vmem:[%s153 + $0xa38] sm:$0xff]
        %v510 = vld [vmem:[%s153 + $0xa40] sm:$0xff]
        %v511 = vld [vmem:[%s153 + $0xa48] sm:$0xff]
        %v512 = vld [vmem:[%s153 + $0xa50] sm:$0xff]
        %v513 = vld [vmem:[%s153 + $0xa58] sm:$0xff]
        %v514 = vld [vmem:[%s153 + $0xa60] sm:$0xff]
        %v515 = vld [vmem:[%s153 + $0xa68] sm:$0xff]
        %v516 = vld [vmem:[%s153 + $0xa70] sm:$0xff]
        %v517 = vld [vmem:[%s153 + $0xa78] sm:$0xff]
        %v518 = vld [vmem:[%s153 + $0xa80] sm:$0xff]
        %v519 = vld [vmem:[%s153 + $0xa88] sm:$0xff]
        %v520 = vld [vmem:[%s153 + $0xa90] sm:$0xff]
        %v521 = vld [vmem:[%s153 + $0xa98] sm:$0xff]
        %v522 = vld [vmem:[%s153 + $0xaa0] sm:$0xff]
        %v523 = vld [vmem:[%s153 + $0xaa8] sm:$0xff]
        %v524 = vld [vmem:[%s153 + $0xab0] sm:$0xff]
        %v525 = vld [vmem:[%s153 + $0xab8] sm:$0xff]
        %v526 = vld [vmem:[%s153 + $0xac0] sm:$0xff]
        %v527 = vld [vmem:[%s153 + $0xac8] sm:$0xff]
        %v528 = vld [vmem:[%s153 + $0xad0] sm:$0xff]
        %v529 = vld [vmem:[%s153 + $0xad8] sm:$0xff]
        %v530 = vld [vmem:[%s153 + $0xae0] sm:$0xff]
        %v531 = vld [vmem:[%s153 + $0xae8] sm:$0xff]
        %v532 = vld [vmem:[%s153 + $0xaf0] sm:$0xff]
        %v533 = vld [vmem:[%s153 + $0xaf8] sm:$0xff]
        %v534 = vld [vmem:[%s153 + $0xb00] sm:$0xff]
        %v535 = vld [vmem:[%s153 + $0xb08] sm:$0xff]
        %v536 = vld [vmem:[%s153 + $0xb10] sm:$0xff]
        %v537 = vld [vmem:[%s153 + $0xb18] sm:$0xff]
        %v538 = vld [vmem:[%s153 + $0xb20] sm:$0xff]
        %v539 = vld [vmem:[%s153 + $0xb28] sm:$0xff]
        %v540 = vld [vmem:[%s153 + $0xb30] sm:$0xff]
        %v541 = vld [vmem:[%s153 + $0xb38] sm:$0xff]
        %v542 = vld [vmem:[%s153 + $0xb40] sm:$0xff]
        %v543 = vld [vmem:[%s153 + $0xb48] sm:$0xff]
        %v544 = vld [vmem:[%s153 + $0xb50] sm:$0xff]
        %v545 = vld [vmem:[%s153 + $0xb58] sm:$0xff]
        %v546 = vld [vmem:[%s153 + $0xb60] sm:$0xff]
        %v547 = vld [vmem:[%s153 + $0xb68] sm:$0xff]
        %v548 = vld [vmem:[%s153 + $0xb70] sm:$0xff]
        %v549 = vld [vmem:[%s153 + $0xb78] sm:$0xff]
        %v550 = vld [vmem:[%s153 + $0xb80] sm:$0xff]
        %v551 = vld [vmem:[%s153 + $0xb88] sm:$0xff]
        %v552 = vld [vmem:[%s153 + $0xb90] sm:$0xff]
        %v553 = vld [vmem:[%s153 + $0xb98] sm:$0xff]
        %v554 = vld [vmem:[%s153 + $0xba0] sm:$0xff]
        %v555 = vld [vmem:[%s153 + $0xba8] sm:$0xff]
        %v556 = vld [vmem:[%s153 + $0xbb0] sm:$0xff]
        %v557 = vld [vmem:[%s153 + $0xbb8] sm:$0xff]
        %v558 = vld [vmem:[%s153 + $0xbc0] sm:$0xff]
        %v559 = vld [vmem:[%s153 + $0xbc8] sm:$0xff]
        %v560 = vld [vmem:[%s153 + $0xbd0] sm:$0xff]
        %v561 = vld [vmem:[%s153 + $0xbd8] sm:$0xff]
        %v562 = vld [vmem:[%s153 + $0xbe0] sm:$0xff]
        %v563 = vld [vmem:[%s153 + $0xbe8] sm:$0xff]
        %v564 = vld [vmem:[%s153 + $0xbf0] sm:$0xff]
        %v565 = vld [vmem:[%s153 + $0xbf8] sm:$0xff]
        %v566 = vld [vmem:[%s153 + $0xc00] sm:$0xff]
        %v567 = vld [vmem:[%s153 + $0xc08] sm:$0xff]
        %v568 = vld [vmem:[%s153 + $0xc10] sm:$0xff]
        %v569 = vld [vmem:[%s153 + $0xc18] sm:$0xff]
        %v570 = vld [vmem:[%s153 + $0xc20] sm:$0xff]
        %v571 = vld [vmem:[%s153 + $0xc28] sm:$0xff]
        %v572 = vld [vmem:[%s153 + $0xc30] sm:$0xff]
        %v573 = vld [vmem:[%s153 + $0xc38] sm:$0xff]
        %v574 = vld [vmem:[%s153 + $0xc40] sm:$0xff]
        %v575 = vld [vmem:[%s153 + $0xc48] sm:$0xff]
        %v576 = vld [vmem:[%s153 + $0xc50] sm:$0xff]
        %v577 = vld [vmem:[%s153 + $0xc58] sm:$0xff]
        %v578 = vld [vmem:[%s153 + $0xc60] sm:$0xff]
        %v579 = vld [vmem:[%s153 + $0xc68] sm:$0xff]
        %v580 = vld [vmem:[%s153 + $0xc70] sm:$0xff]
        %v581 = vld [vmem:[%s153 + $0xc78] sm:$0xff]
        %v582 = vld [vmem:[%s153 + $0xc80] sm:$0xff]
        %v583 = vld [vmem:[%s153 + $0xc88] sm:$0xff]
        %v584 = vld [vmem:[%s153 + $0xc90] sm:$0xff]
        %v585 = vld [vmem:[%s153 + $0xc98] sm:$0xff]
        %v586 = vld [vmem:[%s153 + $0xca0] sm:$0xff]
        %v587 = vld [vmem:[%s153 + $0xca8] sm:$0xff]
        %v588 = vld [vmem:[%s153 + $0xcb0] sm:$0xff]
        %v589 = vld [vmem:[%s153 + $0xcb8] sm:$0xff]
        %v590 = vld [vmem:[%s153 + $0xcc0] sm:$0xff]
        %v591 = vld [vmem:[%s153 + $0xcc8] sm:$0xff]
        %v592 = vld [vmem:[%s153 + $0xcd0] sm:$0xff]
        %v593 = vld [vmem:[%s153 + $0xcd8] sm:$0xff]
        %v594 = vld [vmem:[%s153 + $0xce0] sm:$0xff]
        %v595 = vld [vmem:[%s153 + $0xce8] sm:$0xff]
        %v596 = vld [vmem:[%s153 + $0xcf0] sm:$0xff]
        %v597 = vld [vmem:[%s153 + $0xcf8] sm:$0xff]
        %v598 = vld [vmem:[%s153 + $0xd00] sm:$0xff]
        %v599 = vld [vmem:[%s153 + $0xd08] sm:$0xff]
        %v600 = vld [vmem:[%s153 + $0xd10] sm:$0xff]
        %v601 = vld [vmem:[%s153 + $0xd18] sm:$0xff]
        %v602 = vld [vmem:[%s153 + $0xd20] sm:$0xff]
        %v603 = vld [vmem:[%s153 + $0xd28] sm:$0xff]
        %v604 = vld [vmem:[%s153 + $0xd30] sm:$0xff]
        %v605 = vld [vmem:[%s153 + $0xd38] sm:$0xff]
        %v606 = vld [vmem:[%s153 + $0xd40] sm:$0xff]
        %v607 = vld [vmem:[%s153 + $0xd48] sm:$0xff]
        %v608 = vld [vmem:[%s153 + $0xd50] sm:$0xff]
        %v609 = vld [vmem:[%s153 + $0xd58] sm:$0xff]
        %v610 = vld [vmem:[%s153 + $0xd60] sm:$0xff]
        %v611 = vld [vmem:[%s153 + $0xd68] sm:$0xff]
        %v612 = vld [vmem:[%s153 + $0xd70] sm:$0xff]
        %v613 = vld [vmem:[%s153 + $0xd78] sm:$0xff]
        %v614 = vld [vmem:[%s153 + $0xd80] sm:$0xff]
        %v615 = vld [vmem:[%s153 + $0xd88] sm:$0xff]
        %v616 = vld [vmem:[%s153 + $0xd90] sm:$0xff]
        %v617 = vld [vmem:[%s153 + $0xd98] sm:$0xff]
        %v618 = vld [vmem:[%s153 + $0xda0] sm:$0xff]
        %v619 = vld [vmem:[%s153 + $0xda8] sm:$0xff]
        %v620 = vld [vmem:[%s153 + $0xdb0] sm:$0xff]
        %v621 = vld [vmem:[%s153 + $0xdb8] sm:$0xff]
        %v622 = vld [vmem:[%s153 + $0xdc0] sm:$0xff]
        %v623 = vld [vmem:[%s153 + $0xdc8] sm:$0xff]
        %v624 = vld [vmem:[%s153 + $0xdd0] sm:$0xff]
        %v625 = vld [vmem:[%s153 + $0xdd8] sm:$0xff]
        %v626 = vld [vmem:[%s153 + $0xde0] sm:$0xff]
        %v627 = vld [vmem:[%s153 + $0xde8] sm:$0xff]
        %v628 = vld [vmem:[%s153 + $0xdf0] sm:$0xff]
        %v629 = vld [vmem:[%s153 + $0xdf8] sm:$0xff]
        %v630 = vld [vmem:[%s153 + $0xe00] sm:$0xff]
        %v631 = vld [vmem:[%s153 + $0xe08] sm:$0xff]
        %v632 = vld [vmem:[%s153 + $0xe10] sm:$0xff]
        %v633 = vld [vmem:[%s153 + $0xe18] sm:$0xff]
        %v634 = vld [vmem:[%s153 + $0xe20] sm:$0xff]
        %v635 = vld [vmem:[%s153 + $0xe28] sm:$0xff]
        %v636 = vld [vmem:[%s153 + $0xe30] sm:$0xff]
        %v637 = vld [vmem:[%s153 + $0xe38] sm:$0xff]
        %v638 = vld [vmem:[%s153 + $0xe40] sm:$0xff]
        %v639 = vld [vmem:[%s153 + $0xe48] sm:$0xff]
        %v640 = vld [vmem:[%s153 + $0xe50] sm:$0xff]
        %v641 = vld [vmem:[%s153 + $0xe58] sm:$0xff]
        %v642 = vld [vmem:[%s153 + $0xe60] sm:$0xff]
        %v643 = vld [vmem:[%s153 + $0xe68] sm:$0xff]
        %v644 = vld [vmem:[%s153 + $0xe70] sm:$0xff]
        %v645 = vld [vmem:[%s153 + $0xe78] sm:$0xff]
        %v646 = vld [vmem:[%s153 + $0xe80] sm:$0xff]
        %v647 = vld [vmem:[%s153 + $0xe88] sm:$0xff]
        %v648 = vld [vmem:[%s153 + $0xe90] sm:$0xff]
        %v649 = vld [vmem:[%s153 + $0xe98] sm:$0xff]
        %v650 = vld [vmem:[%s153 + $0xea0] sm:$0xff]
        %v651 = vld [vmem:[%s153 + $0xea8] sm:$0xff]
        %v652 = vld [vmem:[%s153 + $0xeb0] sm:$0xff]
        %v653 = vld [vmem:[%s153 + $0xeb8] sm:$0xff]
        %v654 = vld [vmem:[%s153 + $0xec0] sm:$0xff]
        %v655 = vld [vmem:[%s153 + $0xec8] sm:$0xff]
        %v656 = vld [vmem:[%s153 + $0xed0] sm:$0xff]
        %v657 = vld [vmem:[%s153 + $0xed8] sm:$0xff]
        %v658 = vld [vmem:[%s153 + $0xee0] sm:$0xff]
        %v659 = vld [vmem:[%s153 + $0xee8] sm:$0xff]
        %v660 = vld [vmem:[%s153 + $0xef0] sm:$0xff]
        %v661 = vld [vmem:[%s153 + $0xef8] sm:$0xff]
        %v662 = vld [vmem:[%s153 + $0xf00] sm:$0xff]
        %v663 = vld [vmem:[%s153 + $0xf08] sm:$0xff]
        %v664 = vld [vmem:[%s153 + $0xf10] sm:$0xff]
        %v665 = vld [vmem:[%s153 + $0xf18] sm:$0xff]
        %v666 = vld [vmem:[%s153 + $0xf20] sm:$0xff]
        %v667 = vld [vmem:[%s153 + $0xf28] sm:$0xff]
        %v668 = vld [vmem:[%s153 + $0xf30] sm:$0xff]
        %v669 = vld [vmem:[%s153 + $0xf38] sm:$0xff]
        %v670 = vld [vmem:[%s153 + $0xf40] sm:$0xff]
        %v671 = vld [vmem:[%s153 + $0xf48] sm:$0xff]
        %v672 = vld [vmem:[%s153 + $0xf50] sm:$0xff]
        %v673 = vld [vmem:[%s153 + $0xf58] sm:$0xff]
        %v674 = vld [vmem:[%s153 + $0xf60] sm:$0xff]
        %v675 = vld [vmem:[%s153 + $0xf68] sm:$0xff]
        %v676 = vld [vmem:[%s153 + $0xf70] sm:$0xff]
        %v677 = vld [vmem:[%s153 + $0xf78] sm:$0xff]
        %v678 = vld [vmem:[%s153 + $0xf80] sm:$0xff]
        %v679 = vld [vmem:[%s153 + $0xf88] sm:$0xff]
        %v680 = vld [vmem:[%s153 + $0xf90] sm:$0xff]
        %v681 = vld [vmem:[%s153 + $0xf98] sm:$0xff]
        %v682 = vld [vmem:[%s153 + $0xfa0] sm:$0xff]
        %v683 = vld [vmem:[%s153 + $0xfa8] sm:$0xff]
        %v684 = vld [vmem:[%s153 + $0xfb0] sm:$0xff]
        %v685 = vld [vmem:[%s153 + $0xfb8] sm:$0xff]
        %v686 = vld [vmem:[%s153 + $0xfc0] sm:$0xff]
        %v687 = vld [vmem:[%s153 + $0xfc8] sm:$0xff]
        %v688 = vld [vmem:[%s153 + $0xfd0] sm:$0xff]
        %v689 = vld [vmem:[%s153 + $0xfd8] sm:$0xff]
        %v690 = vld [vmem:[%s153 + $0xfe0] sm:$0xff]
        %v691 = vld [vmem:[%s153 + $0xfe8] sm:$0xff]
        %v692 = vld [vmem:[%s153 + $0xff0] sm:$0xff]
        %v693 = vld [vmem:[%s153 + $0xff8] sm:$0xff]
        %v694 = vmul.f32 %v182, %v182
        %v695 = vmul.f32 %v183, %v183
        %v696 = vmul.f32 %v184, %v184
        %v697 = vmul.f32 %v185, %v185
        %v698 = vmul.f32 %v186, %v186
        %v699 = vmul.f32 %v187, %v187
        %v700 = vmul.f32 %v188, %v188
        %v701 = vmul.f32 %v189, %v189
        %v702 = vmul.f32 %v190, %v190
        %v703 = vmul.f32 %v191, %v191
        %v704 = vmul.f32 %v192, %v192
        %v705 = vmul.f32 %v193, %v193
        %v706 = vmul.f32 %v194, %v194
        %v707 = vmul.f32 %v195, %v195
        %v708 = vmul.f32 %v196, %v196
        %v709 = vmul.f32 %v197, %v197
        %v710 = vmul.f32 %v198, %v198
        %v711 = vmul.f32 %v199, %v199
        %v712 = vmul.f32 %v200, %v200
        %v713 = vmul.f32 %v201, %v201
        %v714 = vmul.f32 %v202, %v202
        %v715 = vmul.f32 %v203, %v203
        %v716 = vmul.f32 %v204, %v204
        %v717 = vmul.f32 %v205, %v205
        %v718 = vmul.f32 %v206, %v206
        %v719 = vmul.f32 %v207, %v207
        %v720 = vmul.f32 %v208, %v208
        %v721 = vmul.f32 %v209, %v209
        %v722 = vmul.f32 %v210, %v210
        %v723 = vmul.f32 %v211, %v211
        %v724 = vmul.f32 %v212, %v212
        %v725 = vmul.f32 %v213, %v213
        %v726 = vmul.f32 %v214, %v214
        %v727 = vmul.f32 %v215, %v215
        %v728 = vmul.f32 %v216, %v216
        %v729 = vmul.f32 %v217, %v217
        %v730 = vmul.f32 %v218, %v218
        %v731 = vmul.f32 %v219, %v219
        %v732 = vmul.f32 %v220, %v220
        %v733 = vmul.f32 %v221, %v221
        %v734 = vmul.f32 %v222, %v222
        %v735 = vmul.f32 %v223, %v223
        %v736 = vmul.f32 %v224, %v224
        %v737 = vmul.f32 %v225, %v225
        %v738 = vmul.f32 %v226, %v226
        %v739 = vmul.f32 %v227, %v227
        %v740 = vmul.f32 %v228, %v228
        %v741 = vmul.f32 %v229, %v229
        %v742 = vmul.f32 %v230, %v230
        %v743 = vmul.f32 %v231, %v231
        %v744 = vmul.f32 %v232, %v232
        %v745 = vmul.f32 %v233, %v233
        %v746 = vmul.f32 %v234, %v234
        %v747 = vmul.f32 %v235, %v235
        %v748 = vmul.f32 %v236, %v236
        %v749 = vmul.f32 %v237, %v237
        %v750 = vmul.f32 %v238, %v238
        %v751 = vmul.f32 %v239, %v239
        %v752 = vmul.f32 %v240, %v240
        %v753 = vmul.f32 %v241, %v241
        %v754 = vmul.f32 %v242, %v242
        %v755 = vmul.f32 %v243, %v243
        %v756 = vmul.f32 %v244, %v244
        %v757 = vmul.f32 %v245, %v245
        %v758 = vmul.f32 %v246, %v246
        %v759 = vmul.f32 %v247, %v247
        %v760 = vmul.f32 %v248, %v248
        %v761 = vmul.f32 %v249, %v249
        %v762 = vmul.f32 %v250, %v250
        %v763 = vmul.f32 %v251, %v251
        %v764 = vmul.f32 %v252, %v252
        %v765 = vmul.f32 %v253, %v253
        %v766 = vmul.f32 %v254, %v254
        %v767 = vmul.f32 %v255, %v255
        %v768 = vmul.f32 %v256, %v256
        %v769 = vmul.f32 %v257, %v257
        %v770 = vmul.f32 %v258, %v258
        %v771 = vmul.f32 %v259, %v259
        %v772 = vmul.f32 %v260, %v260
        %v773 = vmul.f32 %v261, %v261
        %v774 = vmul.f32 %v262, %v262
        %v775 = vmul.f32 %v263, %v263
        %v776 = vmul.f32 %v264, %v264
        %v777 = vmul.f32 %v265, %v265
        %v778 = vmul.f32 %v266, %v266
        %v779 = vmul.f32 %v267, %v267
        %v780 = vmul.f32 %v268, %v268
        %v781 = vmul.f32 %v269, %v269
        %v782 = vmul.f32 %v270, %v270
        %v783 = vmul.f32 %v271, %v271
        %v784 = vmul.f32 %v272, %v272
        %v785 = vmul.f32 %v273, %v273
        %v786 = vmul.f32 %v274, %v274
        %v787 = vmul.f32 %v275, %v275
        %v788 = vmul.f32 %v276, %v276
        %v789 = vmul.f32 %v277, %v277
        %v790 = vmul.f32 %v278, %v278
        %v791 = vmul.f32 %v279, %v279
        %v792 = vmul.f32 %v280, %v280
        %v793 = vmul.f32 %v281, %v281
        %v794 = vmul.f32 %v282, %v282
        %v795 = vmul.f32 %v283, %v283
        %v796 = vmul.f32 %v284, %v284
        %v797 = vmul.f32 %v285, %v285
        %v798 = vmul.f32 %v286, %v286
        %v799 = vmul.f32 %v287, %v287
        %v800 = vmul.f32 %v288, %v288
        %v801 = vmul.f32 %v289, %v289
        %v802 = vmul.f32 %v290, %v290
        %v803 = vmul.f32 %v291, %v291
        %v804 = vmul.f32 %v292, %v292
        %v805 = vmul.f32 %v293, %v293
        %v806 = vmul.f32 %v294, %v294
        %v807 = vmul.f32 %v295, %v295
        %v808 = vmul.f32 %v296, %v296
        %v809 = vmul.f32 %v297, %v297
        %v810 = vmul.f32 %v298, %v298
        %v811 = vmul.f32 %v299, %v299
        %v812 = vmul.f32 %v300, %v300
        %v813 = vmul.f32 %v301, %v301
        %v814 = vmul.f32 %v302, %v302
        %v815 = vmul.f32 %v303, %v303
        %v816 = vmul.f32 %v304, %v304
        %v817 = vmul.f32 %v305, %v305
        %v818 = vmul.f32 %v306, %v306
        %v819 = vmul.f32 %v307, %v307
        %v820 = vmul.f32 %v308, %v308
        %v821 = vmul.f32 %v309, %v309
        %v822 = vmul.f32 %v310, %v310
        %v823 = vmul.f32 %v311, %v311
        %v824 = vmul.f32 %v312, %v312
        %v825 = vmul.f32 %v313, %v313
        %v826 = vmul.f32 %v314, %v314
        %v827 = vmul.f32 %v315, %v315
        %v828 = vmul.f32 %v316, %v316
        %v829 = vmul.f32 %v317, %v317
        %v830 = vmul.f32 %v318, %v318
        %v831 = vmul.f32 %v319, %v319
        %v832 = vmul.f32 %v320, %v320
        %v833 = vmul.f32 %v321, %v321
        %v834 = vmul.f32 %v322, %v322
        %v835 = vmul.f32 %v323, %v323
        %v836 = vmul.f32 %v324, %v324
        %v837 = vmul.f32 %v325, %v325
        %v838 = vmul.f32 %v326, %v326
        %v839 = vmul.f32 %v327, %v327
        %v840 = vmul.f32 %v328, %v328
        %v841 = vmul.f32 %v329, %v329
        %v842 = vmul.f32 %v330, %v330
        %v843 = vmul.f32 %v331, %v331
        %v844 = vmul.f32 %v332, %v332
        %v845 = vmul.f32 %v333, %v333
        %v846 = vmul.f32 %v334, %v334
        %v847 = vmul.f32 %v335, %v335
        %v848 = vmul.f32 %v336, %v336
        %v849 = vmul.f32 %v337, %v337
        %v850 = vmul.f32 %v338, %v338
        %v851 = vmul.f32 %v339, %v339
        %v852 = vmul.f32 %v340, %v340
        %v853 = vmul.f32 %v341, %v341
        %v854 = vmul.f32 %v342, %v342
        %v855 = vmul.f32 %v343, %v343
        %v856 = vmul.f32 %v344, %v344
        %v857 = vmul.f32 %v345, %v345
        %v858 = vmul.f32 %v346, %v346
        %v859 = vmul.f32 %v347, %v347
        %v860 = vmul.f32 %v348, %v348
        %v861 = vmul.f32 %v349, %v349
        %v862 = vmul.f32 %v350, %v350
        %v863 = vmul.f32 %v351, %v351
        %v864 = vmul.f32 %v352, %v352
        %v865 = vmul.f32 %v353, %v353
        %v866 = vmul.f32 %v354, %v354
        %v867 = vmul.f32 %v355, %v355
        %v868 = vmul.f32 %v356, %v356
        %v869 = vmul.f32 %v357, %v357
        %v870 = vmul.f32 %v358, %v358
        %v871 = vmul.f32 %v359, %v359
        %v872 = vmul.f32 %v360, %v360
        %v873 = vmul.f32 %v361, %v361
        %v874 = vmul.f32 %v362, %v362
        %v875 = vmul.f32 %v363, %v363
        %v876 = vmul.f32 %v364, %v364
        %v877 = vmul.f32 %v365, %v365
        %v878 = vmul.f32 %v366, %v366
        %v879 = vmul.f32 %v367, %v367
        %v880 = vmul.f32 %v368, %v368
        %v881 = vmul.f32 %v369, %v369
        %v882 = vmul.f32 %v370, %v370
        %v883 = vmul.f32 %v371, %v371
        %v884 = vmul.f32 %v372, %v372
        %v885 = vmul.f32 %v373, %v373
        %v886 = vmul.f32 %v374, %v374
        %v887 = vmul.f32 %v375, %v375
        %v888 = vmul.f32 %v376, %v376
        %v889 = vmul.f32 %v377, %v377
        %v890 = vmul.f32 %v378, %v378
        %v891 = vmul.f32 %v379, %v379
        %v892 = vmul.f32 %v380, %v380
        %v893 = vmul.f32 %v381, %v381
        %v894 = vmul.f32 %v382, %v382
        %v895 = vmul.f32 %v383, %v383
        %v896 = vmul.f32 %v384, %v384
        %v897 = vmul.f32 %v385, %v385
        %v898 = vmul.f32 %v386, %v386
        %v899 = vmul.f32 %v387, %v387
        %v900 = vmul.f32 %v388, %v388
        %v901 = vmul.f32 %v389, %v389
        %v902 = vmul.f32 %v390, %v390
        %v903 = vmul.f32 %v391, %v391
        %v904 = vmul.f32 %v392, %v392
        %v905 = vmul.f32 %v393, %v393
        %v906 = vmul.f32 %v394, %v394
        %v907 = vmul.f32 %v395, %v395
        %v908 = vmul.f32 %v396, %v396
        %v909 = vmul.f32 %v397, %v397
        %v910 = vmul.f32 %v398, %v398
        %v911 = vmul.f32 %v399, %v399
        %v912 = vmul.f32 %v400, %v400
        %v913 = vmul.f32 %v401, %v401
        %v914 = vmul.f32 %v402, %v402
        %v915 = vmul.f32 %v403, %v403
        %v916 = vmul.f32 %v404, %v404
        %v917 = vmul.f32 %v405, %v405
        %v918 = vmul.f32 %v406, %v406
        %v919 = vmul.f32 %v407, %v407
        %v920 = vmul.f32 %v408, %v408
        %v921 = vmul.f32 %v409, %v409
        %v922 = vmul.f32 %v410, %v410
        %v923 = vmul.f32 %v411, %v411
        %v924 = vmul.f32 %v412, %v412
        %v925 = vmul.f32 %v413, %v413
        %v926 = vmul.f32 %v414, %v414
        %v927 = vmul.f32 %v415, %v415
        %v928 = vmul.f32 %v416, %v416
        %v929 = vmul.f32 %v417, %v417
        %v930 = vmul.f32 %v418, %v418
        %v931 = vmul.f32 %v419, %v419
        %v932 = vmul.f32 %v420, %v420
        %v933 = vmul.f32 %v421, %v421
        %v934 = vmul.f32 %v422, %v422
        %v935 = vmul.f32 %v423, %v423
        %v936 = vmul.f32 %v424, %v424
        %v937 = vmul.f32 %v425, %v425
        %v938 = vmul.f32 %v426, %v426
        %v939 = vmul.f32 %v427, %v427
        %v940 = vmul.f32 %v428, %v428
        %v941 = vmul.f32 %v429, %v429
        %v942 = vmul.f32 %v430, %v430
        %v943 = vmul.f32 %v431, %v431
        %v944 = vmul.f32 %v432, %v432
        %v945 = vmul.f32 %v433, %v433
        %v946 = vmul.f32 %v434, %v434
        %v947 = vmul.f32 %v435, %v435
        %v948 = vmul.f32 %v436, %v436
        %v949 = vmul.f32 %v437, %v437
        %v950 = vmul.f32 %v438, %v438
        %v951 = vmul.f32 %v439, %v439
        %v952 = vmul.f32 %v440, %v440
        %v953 = vmul.f32 %v441, %v441
        %v954 = vmul.f32 %v442, %v442
        %v955 = vmul.f32 %v443, %v443
        %v956 = vmul.f32 %v444, %v444
        %v957 = vmul.f32 %v445, %v445
        %v958 = vmul.f32 %v446, %v446
        %v959 = vmul.f32 %v447, %v447
        %v960 = vmul.f32 %v448, %v448
        %v961 = vmul.f32 %v449, %v449
        %v962 = vmul.f32 %v450, %v450
        %v963 = vmul.f32 %v451, %v451
        %v964 = vmul.f32 %v452, %v452
        %v965 = vmul.f32 %v453, %v453
        %v966 = vmul.f32 %v454, %v454
        %v967 = vmul.f32 %v455, %v455
        %v968 = vmul.f32 %v456, %v456
        %v969 = vmul.f32 %v457, %v457
        %v970 = vmul.f32 %v458, %v458
        %v971 = vmul.f32 %v459, %v459
        %v972 = vmul.f32 %v460, %v460
        %v973 = vmul.f32 %v461, %v461
        %v974 = vmul.f32 %v462, %v462
        %v975 = vmul.f32 %v463, %v463
        %v976 = vmul.f32 %v464, %v464
        %v977 = vmul.f32 %v465, %v465
        %v978 = vmul.f32 %v466, %v466
        %v979 = vmul.f32 %v467, %v467
        %v980 = vmul.f32 %v468, %v468
        %v981 = vmul.f32 %v469, %v469
        %v982 = vmul.f32 %v470, %v470
        %v983 = vmul.f32 %v471, %v471
        %v984 = vmul.f32 %v472, %v472
        %v985 = vmul.f32 %v473, %v473
        %v986 = vmul.f32 %v474, %v474
        %v987 = vmul.f32 %v475, %v475
        %v988 = vmul.f32 %v476, %v476
        %v989 = vmul.f32 %v477, %v477
        %v990 = vmul.f32 %v478, %v478
        %v991 = vmul.f32 %v479, %v479
        %v992 = vmul.f32 %v480, %v480
        %v993 = vmul.f32 %v481, %v481
        %v994 = vmul.f32 %v482, %v482
        %v995 = vmul.f32 %v483, %v483
        %v996 = vmul.f32 %v484, %v484
        %v997 = vmul.f32 %v485, %v485
        %v998 = vmul.f32 %v486, %v486
        %v999 = vmul.f32 %v487, %v487
        %v1000 = vmul.f32 %v488, %v488
        %v1001 = vmul.f32 %v489, %v489
        %v1002 = vmul.f32 %v490, %v490
        %v1003 = vmul.f32 %v491, %v491
        %v1004 = vmul.f32 %v492, %v492
        %v1005 = vmul.f32 %v493, %v493
        %v1006 = vmul.f32 %v494, %v494
        %v1007 = vmul.f32 %v495, %v495
        %v1008 = vmul.f32 %v496, %v496
        %v1009 = vmul.f32 %v497, %v497
        %v1010 = vmul.f32 %v498, %v498
        %v1011 = vmul.f32 %v499, %v499
        %v1012 = vmul.f32 %v500, %v500
        %v1013 = vmul.f32 %v501, %v501
        %v1014 = vmul.f32 %v502, %v502
        %v1015 = vmul.f32 %v503, %v503
        %v1016 = vmul.f32 %v504, %v504
        %v1017 = vmul.f32 %v505, %v505
        %v1018 = vmul.f32 %v506, %v506
        %v1019 = vmul.f32 %v507, %v507
        %v1020 = vmul.f32 %v508, %v508
        %v1021 = vmul.f32 %v509, %v509
        %v1022 = vmul.f32 %v510, %v510
        %v1023 = vmul.f32 %v511, %v511
        %v1024 = vmul.f32 %v512, %v512
        %v1025 = vmul.f32 %v513, %v513
        %v1026 = vmul.f32 %v514, %v514
        %v1027 = vmul.f32 %v515, %v515
        %v1028 = vmul.f32 %v516, %v516
        %v1029 = vmul.f32 %v517, %v517
        %v1030 = vmul.f32 %v518, %v518
        %v1031 = vmul.f32 %v519, %v519
        %v1032 = vmul.f32 %v520, %v520
        %v1033 = vmul.f32 %v521, %v521
        %v1034 = vmul.f32 %v522, %v522
        %v1035 = vmul.f32 %v523, %v523
        %v1036 = vmul.f32 %v524, %v524
        %v1037 = vmul.f32 %v525, %v525
        %v1038 = vmul.f32 %v526, %v526
        %v1039 = vmul.f32 %v527, %v527
        %v1040 = vmul.f32 %v528, %v528
        %v1041 = vmul.f32 %v529, %v529
        %v1042 = vmul.f32 %v530, %v530
        %v1043 = vmul.f32 %v531, %v531
        %v1044 = vmul.f32 %v532, %v532
        %v1045 = vmul.f32 %v533, %v533
        %v1046 = vmul.f32 %v534, %v534
        %v1047 = vmul.f32 %v535, %v535
        %v1048 = vmul.f32 %v536, %v536
        %v1049 = vmul.f32 %v537, %v537
        %v1050 = vmul.f32 %v538, %v538
        %v1051 = vmul.f32 %v539, %v539
        %v1052 = vmul.f32 %v540, %v540
        %v1053 = vmul.f32 %v541, %v541
        %v1054 = vmul.f32 %v542, %v542
        %v1055 = vmul.f32 %v543, %v543
        %v1056 = vmul.f32 %v544, %v544
        %v1057 = vmul.f32 %v545, %v545
        %v1058 = vmul.f32 %v546, %v546
        %v1059 = vmul.f32 %v547, %v547
        %v1060 = vmul.f32 %v548, %v548
        %v1061 = vmul.f32 %v549, %v549
        %v1062 = vmul.f32 %v550, %v550
        %v1063 = vmul.f32 %v551, %v551
        %v1064 = vmul.f32 %v552, %v552
        %v1065 = vmul.f32 %v553, %v553
        %v1066 = vmul.f32 %v554, %v554
        %v1067 = vmul.f32 %v555, %v555
        %v1068 = vmul.f32 %v556, %v556
        %v1069 = vmul.f32 %v557, %v557
        %v1070 = vmul.f32 %v558, %v558
        %v1071 = vmul.f32 %v559, %v559
        %v1072 = vmul.f32 %v560, %v560
        %v1073 = vmul.f32 %v561, %v561
        %v1074 = vmul.f32 %v562, %v562
        %v1075 = vmul.f32 %v563, %v563
        %v1076 = vmul.f32 %v564, %v564
        %v1077 = vmul.f32 %v565, %v565
        %v1078 = vmul.f32 %v566, %v566
        %v1079 = vmul.f32 %v567, %v567
        %v1080 = vmul.f32 %v568, %v568
        %v1081 = vmul.f32 %v569, %v569
        %v1082 = vmul.f32 %v570, %v570
        %v1083 = vmul.f32 %v571, %v571
        %v1084 = vmul.f32 %v572, %v572
        %v1085 = vmul.f32 %v573, %v573
        %v1086 = vmul.f32 %v574, %v574
        %v1087 = vmul.f32 %v575, %v575
        %v1088 = vmul.f32 %v576, %v576
        %v1089 = vmul.f32 %v577, %v577
        %v1090 = vmul.f32 %v578, %v578
        %v1091 = vmul.f32 %v579, %v579
        %v1092 = vmul.f32 %v580, %v580
        %v1093 = vmul.f32 %v581, %v581
        %v1094 = vmul.f32 %v582, %v582
        %v1095 = vmul.f32 %v583, %v583
        %v1096 = vmul.f32 %v584, %v584
        %v1097 = vmul.f32 %v585, %v585
        %v1098 = vmul.f32 %v586, %v586
        %v1099 = vmul.f32 %v587, %v587
        %v1100 = vmul.f32 %v588, %v588
        %v1101 = vmul.f32 %v589, %v589
        %v1102 = vmul.f32 %v590, %v590
        %v1103 = vmul.f32 %v591, %v591
        %v1104 = vmul.f32 %v592, %v592
        %v1105 = vmul.f32 %v593, %v593
        %v1106 = vmul.f32 %v594, %v594
        %v1107 = vmul.f32 %v595, %v595
        %v1108 = vmul.f32 %v596, %v596
        %v1109 = vmul.f32 %v597, %v597
        %v1110 = vmul.f32 %v598, %v598
        %v1111 = vmul.f32 %v599, %v599
        %v1112 = vmul.f32 %v600, %v600
        %v1113 = vmul.f32 %v601, %v601
        %v1114 = vmul.f32 %v602, %v602
        %v1115 = vmul.f32 %v603, %v603
        %v1116 = vmul.f32 %v604, %v604
        %v1117 = vmul.f32 %v605, %v605
        %v1118 = vmul.f32 %v606, %v606
        %v1119 = vmul.f32 %v607, %v607
        %v1120 = vmul.f32 %v608, %v608
        %v1121 = vmul.f32 %v609, %v609
        %v1122 = vmul.f32 %v610, %v610
        %v1123 = vmul.f32 %v611, %v611
        %v1124 = vmul.f32 %v612, %v612
        %v1125 = vmul.f32 %v613, %v613
        %v1126 = vmul.f32 %v614, %v614
        %v1127 = vmul.f32 %v615, %v615
        %v1128 = vmul.f32 %v616, %v616
        %v1129 = vmul.f32 %v617, %v617
        %v1130 = vmul.f32 %v618, %v618
        %v1131 = vmul.f32 %v619, %v619
        %v1132 = vmul.f32 %v620, %v620
        %v1133 = vmul.f32 %v621, %v621
        %v1134 = vmul.f32 %v622, %v622
        %v1135 = vmul.f32 %v623, %v623
        %v1136 = vmul.f32 %v624, %v624
        %v1137 = vmul.f32 %v625, %v625
        %v1138 = vmul.f32 %v626, %v626
        %v1139 = vmul.f32 %v627, %v627
        %v1140 = vmul.f32 %v628, %v628
        %v1141 = vmul.f32 %v629, %v629
        %v1142 = vmul.f32 %v630, %v630
        %v1143 = vmul.f32 %v631, %v631
        %v1144 = vmul.f32 %v632, %v632
        %v1145 = vmul.f32 %v633, %v633
        %v1146 = vmul.f32 %v634, %v634
        %v1147 = vmul.f32 %v635, %v635
        %v1148 = vmul.f32 %v636, %v636
        %v1149 = vmul.f32 %v637, %v637
        %v1150 = vmul.f32 %v638, %v638
        %v1151 = vmul.f32 %v639, %v639
        %v1152 = vmul.f32 %v640, %v640
        %v1153 = vmul.f32 %v641, %v641
        %v1154 = vmul.f32 %v642, %v642
        %v1155 = vmul.f32 %v643, %v643
        %v1156 = vmul.f32 %v644, %v644
        %v1157 = vmul.f32 %v645, %v645
        %v1158 = vmul.f32 %v646, %v646
        %v1159 = vmul.f32 %v647, %v647
        %v1160 = vmul.f32 %v648, %v648
        %v1161 = vmul.f32 %v649, %v649
        %v1162 = vmul.f32 %v650, %v650
        %v1163 = vmul.f32 %v651, %v651
        %v1164 = vmul.f32 %v652, %v652
        %v1165 = vmul.f32 %v653, %v653
        %v1166 = vmul.f32 %v654, %v654
        %v1167 = vmul.f32 %v655, %v655
        %v1168 = vmul.f32 %v656, %v656
        %v1169 = vmul.f32 %v657, %v657
        %v1170 = vmul.f32 %v658, %v658
        %v1171 = vmul.f32 %v659, %v659
        %v1172 = vmul.f32 %v660, %v660
        %v1173 = vmul.f32 %v661, %v661
        %v1174 = vmul.f32 %v662, %v662
        %v1175 = vmul.f32 %v663, %v663
        %v1176 = vmul.f32 %v664, %v664
        %v1177 = vmul.f32 %v665, %v665
        %v1178 = vmul.f32 %v666, %v666
        %v1179 = vmul.f32 %v667, %v667
        %v1180 = vmul.f32 %v668, %v668
        %v1181 = vmul.f32 %v669, %v669
        %v1182 = vmul.f32 %v670, %v670
        %v1183 = vmul.f32 %v671, %v671
        %v1184 = vmul.f32 %v672, %v672
        %v1185 = vmul.f32 %v673, %v673
        %v1186 = vmul.f32 %v674, %v674
        %v1187 = vmul.f32 %v675, %v675
        %v1188 = vmul.f32 %v676, %v676
        %v1189 = vmul.f32 %v677, %v677
        %v1190 = vmul.f32 %v678, %v678
        %v1191 = vmul.f32 %v679, %v679
        %v1192 = vmul.f32 %v680, %v680
        %v1193 = vmul.f32 %v681, %v681
        %v1194 = vmul.f32 %v682, %v682
        %v1195 = vmul.f32 %v683, %v683
        %v1196 = vmul.f32 %v684, %v684
        %v1197 = vmul.f32 %v685, %v685
        %v1198 = vmul.f32 %v686, %v686
        %v1199 = vmul.f32 %v687, %v687
        %v1200 = vmul.f32 %v688, %v688
        %v1201 = vmul.f32 %v689, %v689
        %v1202 = vmul.f32 %v690, %v690
        %v1203 = vmul.f32 %v691, %v691
        %v1204 = vmul.f32 %v692, %v692
        %v1205 = vmul.f32 %v693, %v693
        %v1206 = vadd.f32 %v694, %v695
        %v1207 = vadd.f32 %v1206, %v696
        %v1208 = vadd.f32 %v1207, %v697
        %1209 = vadd.xlane.f32.xlu0 %v1208
        %v1210 = vpop.xlane.xlu0 %1209
        %v1211 = vadd.f32 %v698, %v699
        %v1212 = vadd.f32 %v1211, %v700
        %v1213 = vadd.f32 %v1212, %v701
        %1214 = vadd.xlane.f32.xlu0 %v1213
        %v1215 = vpop.xlane.xlu0 %1214
        %v1216 = vadd.f32 %v702, %v703
        %v1217 = vadd.f32 %v1216, %v704
        %v1218 = vadd.f32 %v1217, %v705
        %1219 = vadd.xlane.f32.xlu0 %v1218
        %v1220 = vpop.xlane.xlu0 %1219
        %v1221 = vadd.f32 %v706, %v707
        %v1222 = vadd.f32 %v1221, %v708
        %v1223 = vadd.f32 %v1222, %v709
        %1224 = vadd.xlane.f32.xlu0 %v1223
        %v1225 = vpop.xlane.xlu0 %1224
        %v1226 = vadd.f32 %v710, %v711
        %v1227 = vadd.f32 %v1226, %v712
        %v1228 = vadd.f32 %v1227, %v713
        %1229 = vadd.xlane.f32.xlu0 %v1228
        %v1230 = vpop.xlane.xlu0 %1229
        %v1231 = vadd.f32 %v714, %v715
        %v1232 = vadd.f32 %v1231, %v716
        %v1233 = vadd.f32 %v1232, %v717
        %1234 = vadd.xlane.f32.xlu0 %v1233
        %v1235 = vpop.xlane.xlu0 %1234
        %v1236 = vadd.f32 %v718, %v719
        %v1237 = vadd.f32 %v1236, %v720
        %v1238 = vadd.f32 %v1237, %v721
        %1239 = vadd.xlane.f32.xlu0 %v1238
        %v1240 = vpop.xlane.xlu0 %1239
        %v1241 = vadd.f32 %v722, %v723
        %v1242 = vadd.f32 %v1241, %v724
        %v1243 = vadd.f32 %v1242, %v725
        %1244 = vadd.xlane.f32.xlu0 %v1243
        %v1245 = vpop.xlane.xlu0 %1244
        %v1246 = vadd.f32 %v726, %v727
        %v1247 = vadd.f32 %v1246, %v728
        %v1248 = vadd.f32 %v1247, %v729
        %1249 = vadd.xlane.f32.xlu0 %v1248
        %v1250 = vpop.xlane.xlu0 %1249
        %v1251 = vadd.f32 %v730, %v731
        %v1252 = vadd.f32 %v1251, %v732
        %v1253 = vadd.f32 %v1252, %v733
        %1254 = vadd.xlane.f32.xlu0 %v1253
        %v1255 = vpop.xlane.xlu0 %1254
        %v1256 = vadd.f32 %v734, %v735
        %v1257 = vadd.f32 %v1256, %v736
        %v1258 = vadd.f32 %v1257, %v737
        %1259 = vadd.xlane.f32.xlu0 %v1258
        %v1260 = vpop.xlane.xlu0 %1259
        %v1261 = vadd.f32 %v738, %v739
        %v1262 = vadd.f32 %v1261, %v740
        %v1263 = vadd.f32 %v1262, %v741
        %1264 = vadd.xlane.f32.xlu0 %v1263
        %v1265 = vpop.xlane.xlu0 %1264
        %v1266 = vadd.f32 %v742, %v743
        %v1267 = vadd.f32 %v1266, %v744
        %v1268 = vadd.f32 %v1267, %v745
        %1269 = vadd.xlane.f32.xlu0 %v1268
        %v1270 = vpop.xlane.xlu0 %1269
        %v1271 = vadd.f32 %v746, %v747
        %v1272 = vadd.f32 %v1271, %v748
        %v1273 = vadd.f32 %v1272, %v749
        %1274 = vadd.xlane.f32.xlu0 %v1273
        %v1275 = vpop.xlane.xlu0 %1274
        %v1276 = vadd.f32 %v750, %v751
        %v1277 = vadd.f32 %v1276, %v752
        %v1278 = vadd.f32 %v1277, %v753
        %1279 = vadd.xlane.f32.xlu0 %v1278
        %v1280 = vpop.xlane.xlu0 %1279
        %v1281 = vadd.f32 %v754, %v755
        %v1282 = vadd.f32 %v1281, %v756
        %v1283 = vadd.f32 %v1282, %v757
        %1284 = vadd.xlane.f32.xlu0 %v1283
        %v1285 = vpop.xlane.xlu0 %1284
        %v1286 = vadd.f32 %v758, %v759
        %v1287 = vadd.f32 %v1286, %v760
        %v1288 = vadd.f32 %v1287, %v761
        %1289 = vadd.xlane.f32.xlu0 %v1288
        %v1290 = vpop.xlane.xlu0 %1289
        %v1291 = vadd.f32 %v762, %v763
        %v1292 = vadd.f32 %v1291, %v764
        %v1293 = vadd.f32 %v1292, %v765
        %1294 = vadd.xlane.f32.xlu0 %v1293
        %v1295 = vpop.xlane.xlu0 %1294
        %v1296 = vadd.f32 %v766, %v767
        %v1297 = vadd.f32 %v1296, %v768
        %v1298 = vadd.f32 %v1297, %v769
        %1299 = vadd.xlane.f32.xlu0 %v1298
        %v1300 = vpop.xlane.xlu0 %1299
        %v1301 = vadd.f32 %v770, %v771
        %v1302 = vadd.f32 %v1301, %v772
        %v1303 = vadd.f32 %v1302, %v773
        %1304 = vadd.xlane.f32.xlu0 %v1303
        %v1305 = vpop.xlane.xlu0 %1304
        %v1306 = vadd.f32 %v774, %v775
        %v1307 = vadd.f32 %v1306, %v776
        %v1308 = vadd.f32 %v1307, %v777
        %1309 = vadd.xlane.f32.xlu0 %v1308
        %v1310 = vpop.xlane.xlu0 %1309
        %v1311 = vadd.f32 %v778, %v779
        %v1312 = vadd.f32 %v1311, %v780
        %v1313 = vadd.f32 %v1312, %v781
        %1314 = vadd.xlane.f32.xlu0 %v1313
        %v1315 = vpop.xlane.xlu0 %1314
        %v1316 = vadd.f32 %v782, %v783
        %v1317 = vadd.f32 %v1316, %v784
        %v1318 = vadd.f32 %v1317, %v785
        %1319 = vadd.xlane.f32.xlu0 %v1318
        %v1320 = vpop.xlane.xlu0 %1319
        %v1321 = vadd.f32 %v786, %v787
        %v1322 = vadd.f32 %v1321, %v788
        %v1323 = vadd.f32 %v1322, %v789
        %1324 = vadd.xlane.f32.xlu0 %v1323
        %v1325 = vpop.xlane.xlu0 %1324
        %v1326 = vadd.f32 %v790, %v791
        %v1327 = vadd.f32 %v1326, %v792
        %v1328 = vadd.f32 %v1327, %v793
        %1329 = vadd.xlane.f32.xlu0 %v1328
        %v1330 = vpop.xlane.xlu0 %1329
        %v1331 = vadd.f32 %v794, %v795
        %v1332 = vadd.f32 %v1331, %v796
        %v1333 = vadd.f32 %v1332, %v797
        %1334 = vadd.xlane.f32.xlu0 %v1333
        %v1335 = vpop.xlane.xlu0 %1334
        %v1336 = vadd.f32 %v798, %v799
        %v1337 = vadd.f32 %v1336, %v800
        %v1338 = vadd.f32 %v1337, %v801
        %1339 = vadd.xlane.f32.xlu0 %v1338
        %v1340 = vpop.xlane.xlu0 %1339
        %v1341 = vadd.f32 %v802, %v803
        %v1342 = vadd.f32 %v1341, %v804
        %v1343 = vadd.f32 %v1342, %v805
        %1344 = vadd.xlane.f32.xlu0 %v1343
        %v1345 = vpop.xlane.xlu0 %1344
        %v1346 = vadd.f32 %v806, %v807
        %v1347 = vadd.f32 %v1346, %v808
        %v1348 = vadd.f32 %v1347, %v809
        %1349 = vadd.xlane.f32.xlu0 %v1348
        %v1350 = vpop.xlane.xlu0 %1349
        %v1351 = vadd.f32 %v810, %v811
        %v1352 = vadd.f32 %v1351, %v812
        %v1353 = vadd.f32 %v1352, %v813
        %1354 = vadd.xlane.f32.xlu0 %v1353
        %v1355 = vpop.xlane.xlu0 %1354
        %v1356 = vadd.f32 %v814, %v815
        %v1357 = vadd.f32 %v1356, %v816
        %v1358 = vadd.f32 %v1357, %v817
        %1359 = vadd.xlane.f32.xlu0 %v1358
        %v1360 = vpop.xlane.xlu0 %1359
        %v1361 = vadd.f32 %v818, %v819
        %v1362 = vadd.f32 %v1361, %v820
        %v1363 = vadd.f32 %v1362, %v821
        %1364 = vadd.xlane.f32.xlu0 %v1363
        %v1365 = vpop.xlane.xlu0 %1364
        %v1366 = vadd.f32 %v822, %v823
        %v1367 = vadd.f32 %v1366, %v824
        %v1368 = vadd.f32 %v1367, %v825
        %1369 = vadd.xlane.f32.xlu0 %v1368
        %v1370 = vpop.xlane.xlu0 %1369
        %v1371 = vadd.f32 %v826, %v827
        %v1372 = vadd.f32 %v1371, %v828
        %v1373 = vadd.f32 %v1372, %v829
        %1374 = vadd.xlane.f32.xlu0 %v1373
        %v1375 = vpop.xlane.xlu0 %1374
        %v1376 = vadd.f32 %v830, %v831
        %v1377 = vadd.f32 %v1376, %v832
        %v1378 = vadd.f32 %v1377, %v833
        %1379 = vadd.xlane.f32.xlu0 %v1378
        %v1380 = vpop.xlane.xlu0 %1379
        %v1381 = vadd.f32 %v834, %v835
        %v1382 = vadd.f32 %v1381, %v836
        %v1383 = vadd.f32 %v1382, %v837
        %1384 = vadd.xlane.f32.xlu0 %v1383
        %v1385 = vpop.xlane.xlu0 %1384
        %v1386 = vadd.f32 %v838, %v839
        %v1387 = vadd.f32 %v1386, %v840
        %v1388 = vadd.f32 %v1387, %v841
        %1389 = vadd.xlane.f32.xlu0 %v1388
        %v1390 = vpop.xlane.xlu0 %1389
        %v1391 = vadd.f32 %v842, %v843
        %v1392 = vadd.f32 %v1391, %v844
        %v1393 = vadd.f32 %v1392, %v845
        %1394 = vadd.xlane.f32.xlu0 %v1393
        %v1395 = vpop.xlane.xlu0 %1394
        %v1396 = vadd.f32 %v846, %v847
        %v1397 = vadd.f32 %v1396, %v848
        %v1398 = vadd.f32 %v1397, %v849
        %1399 = vadd.xlane.f32.xlu0 %v1398
        %v1400 = vpop.xlane.xlu0 %1399
        %v1401 = vadd.f32 %v850, %v851
        %v1402 = vadd.f32 %v1401, %v852
        %v1403 = vadd.f32 %v1402, %v853
        %1404 = vadd.xlane.f32.xlu0 %v1403
        %v1405 = vpop.xlane.xlu0 %1404
        %v1406 = vadd.f32 %v854, %v855
        %v1407 = vadd.f32 %v1406, %v856
        %v1408 = vadd.f32 %v1407, %v857
        %1409 = vadd.xlane.f32.xlu0 %v1408
        %v1410 = vpop.xlane.xlu0 %1409
        %v1411 = vadd.f32 %v858, %v859
        %v1412 = vadd.f32 %v1411, %v860
        %v1413 = vadd.f32 %v1412, %v861
        %1414 = vadd.xlane.f32.xlu0 %v1413
        %v1415 = vpop.xlane.xlu0 %1414
        %v1416 = vadd.f32 %v862, %v863
        %v1417 = vadd.f32 %v1416, %v864
        %v1418 = vadd.f32 %v1417, %v865
        %1419 = vadd.xlane.f32.xlu0 %v1418
        %v1420 = vpop.xlane.xlu0 %1419
        %v1421 = vadd.f32 %v866, %v867
        %v1422 = vadd.f32 %v1421, %v868
        %v1423 = vadd.f32 %v1422, %v869
        %1424 = vadd.xlane.f32.xlu0 %v1423
        %v1425 = vpop.xlane.xlu0 %1424
        %v1426 = vadd.f32 %v870, %v871
        %v1427 = vadd.f32 %v1426, %v872
        %v1428 = vadd.f32 %v1427, %v873
        %1429 = vadd.xlane.f32.xlu0 %v1428
        %v1430 = vpop.xlane.xlu0 %1429
        %v1431 = vadd.f32 %v874, %v875
        %v1432 = vadd.f32 %v1431, %v876
        %v1433 = vadd.f32 %v1432, %v877
        %1434 = vadd.xlane.f32.xlu0 %v1433
        %v1435 = vpop.xlane.xlu0 %1434
        %v1436 = vadd.f32 %v878, %v879
        %v1437 = vadd.f32 %v1436, %v880
        %v1438 = vadd.f32 %v1437, %v881
        %1439 = vadd.xlane.f32.xlu0 %v1438
        %v1440 = vpop.xlane.xlu0 %1439
        %v1441 = vadd.f32 %v882, %v883
        %v1442 = vadd.f32 %v1441, %v884
        %v1443 = vadd.f32 %v1442, %v885
        %1444 = vadd.xlane.f32.xlu0 %v1443
        %v1445 = vpop.xlane.xlu0 %1444
        %v1446 = vadd.f32 %v886, %v887
        %v1447 = vadd.f32 %v1446, %v888
        %v1448 = vadd.f32 %v1447, %v889
        %1449 = vadd.xlane.f32.xlu0 %v1448
        %v1450 = vpop.xlane.xlu0 %1449
        %v1451 = vadd.f32 %v890, %v891
        %v1452 = vadd.f32 %v1451, %v892
        %v1453 = vadd.f32 %v1452, %v893
        %1454 = vadd.xlane.f32.xlu0 %v1453
        %v1455 = vpop.xlane.xlu0 %1454
        %v1456 = vadd.f32 %v894, %v895
        %v1457 = vadd.f32 %v1456, %v896
        %v1458 = vadd.f32 %v1457, %v897
        %1459 = vadd.xlane.f32.xlu0 %v1458
        %v1460 = vpop.xlane.xlu0 %1459
        %v1461 = vadd.f32 %v898, %v899
        %v1462 = vadd.f32 %v1461, %v900
        %v1463 = vadd.f32 %v1462, %v901
        %1464 = vadd.xlane.f32.xlu0 %v1463
        %v1465 = vpop.xlane.xlu0 %1464
        %v1466 = vadd.f32 %v902, %v903
        %v1467 = vadd.f32 %v1466, %v904
        %v1468 = vadd.f32 %v1467, %v905
        %1469 = vadd.xlane.f32.xlu0 %v1468
        %v1470 = vpop.xlane.xlu0 %1469
        %v1471 = vadd.f32 %v906, %v907
        %v1472 = vadd.f32 %v1471, %v908
        %v1473 = vadd.f32 %v1472, %v909
        %1474 = vadd.xlane.f32.xlu0 %v1473
        %v1475 = vpop.xlane.xlu0 %1474
        %v1476 = vadd.f32 %v910, %v911
        %v1477 = vadd.f32 %v1476, %v912
        %v1478 = vadd.f32 %v1477, %v913
        %1479 = vadd.xlane.f32.xlu0 %v1478
        %v1480 = vpop.xlane.xlu0 %1479
        %v1481 = vadd.f32 %v914, %v915
        %v1482 = vadd.f32 %v1481, %v916
        %v1483 = vadd.f32 %v1482, %v917
        %1484 = vadd.xlane.f32.xlu0 %v1483
        %v1485 = vpop.xlane.xlu0 %1484
        %v1486 = vadd.f32 %v918, %v919
        %v1487 = vadd.f32 %v1486, %v920
        %v1488 = vadd.f32 %v1487, %v921
        %1489 = vadd.xlane.f32.xlu0 %v1488
        %v1490 = vpop.xlane.xlu0 %1489
        %v1491 = vadd.f32 %v922, %v923
        %v1492 = vadd.f32 %v1491, %v924
        %v1493 = vadd.f32 %v1492, %v925
        %1494 = vadd.xlane.f32.xlu0 %v1493
        %v1495 = vpop.xlane.xlu0 %1494
        %v1496 = vadd.f32 %v926, %v927
        %v1497 = vadd.f32 %v1496, %v928
        %v1498 = vadd.f32 %v1497, %v929
        %1499 = vadd.xlane.f32.xlu0 %v1498
        %v1500 = vpop.xlane.xlu0 %1499
        %v1501 = vadd.f32 %v930, %v931
        %v1502 = vadd.f32 %v1501, %v932
        %v1503 = vadd.f32 %v1502, %v933
        %1504 = vadd.xlane.f32.xlu0 %v1503
        %v1505 = vpop.xlane.xlu0 %1504
        %v1506 = vadd.f32 %v934, %v935
        %v1507 = vadd.f32 %v1506, %v936
        %v1508 = vadd.f32 %v1507, %v937
        %1509 = vadd.xlane.f32.xlu0 %v1508
        %v1510 = vpop.xlane.xlu0 %1509
        %v1511 = vadd.f32 %v938, %v939
        %v1512 = vadd.f32 %v1511, %v940
        %v1513 = vadd.f32 %v1512, %v941
        %1514 = vadd.xlane.f32.xlu0 %v1513
        %v1515 = vpop.xlane.xlu0 %1514
        %v1516 = vadd.f32 %v942, %v943
        %v1517 = vadd.f32 %v1516, %v944
        %v1518 = vadd.f32 %v1517, %v945
        %1519 = vadd.xlane.f32.xlu0 %v1518
        %v1520 = vpop.xlane.xlu0 %1519
        %v1521 = vadd.f32 %v946, %v947
        %v1522 = vadd.f32 %v1521, %v948
        %v1523 = vadd.f32 %v1522, %v949
        %1524 = vadd.xlane.f32.xlu0 %v1523
        %v1525 = vpop.xlane.xlu0 %1524
        %v1526 = vadd.f32 %v950, %v951
        %v1527 = vadd.f32 %v1526, %v952
        %v1528 = vadd.f32 %v1527, %v953
        %1529 = vadd.xlane.f32.xlu0 %v1528
        %v1530 = vpop.xlane.xlu0 %1529
        %v1531 = vadd.f32 %v954, %v955
        %v1532 = vadd.f32 %v1531, %v956
        %v1533 = vadd.f32 %v1532, %v957
        %1534 = vadd.xlane.f32.xlu0 %v1533
        %v1535 = vpop.xlane.xlu0 %1534
        %v1536 = vadd.f32 %v958, %v959
        %v1537 = vadd.f32 %v1536, %v960
        %v1538 = vadd.f32 %v1537, %v961
        %1539 = vadd.xlane.f32.xlu0 %v1538
        %v1540 = vpop.xlane.xlu0 %1539
        %v1541 = vadd.f32 %v962, %v963
        %v1542 = vadd.f32 %v1541, %v964
        %v1543 = vadd.f32 %v1542, %v965
        %1544 = vadd.xlane.f32.xlu0 %v1543
        %v1545 = vpop.xlane.xlu0 %1544
        %v1546 = vadd.f32 %v966, %v967
        %v1547 = vadd.f32 %v1546, %v968
        %v1548 = vadd.f32 %v1547, %v969
        %1549 = vadd.xlane.f32.xlu0 %v1548
        %v1550 = vpop.xlane.xlu0 %1549
        %v1551 = vadd.f32 %v970, %v971
        %v1552 = vadd.f32 %v1551, %v972
        %v1553 = vadd.f32 %v1552, %v973
        %1554 = vadd.xlane.f32.xlu0 %v1553
        %v1555 = vpop.xlane.xlu0 %1554
        %v1556 = vadd.f32 %v974, %v975
        %v1557 = vadd.f32 %v1556, %v976
        %v1558 = vadd.f32 %v1557, %v977
        %1559 = vadd.xlane.f32.xlu0 %v1558
        %v1560 = vpop.xlane.xlu0 %1559
        %v1561 = vadd.f32 %v978, %v979
        %v1562 = vadd.f32 %v1561, %v980
        %v1563 = vadd.f32 %v1562, %v981
        %1564 = vadd.xlane.f32.xlu0 %v1563
        %v1565 = vpop.xlane.xlu0 %1564
        %v1566 = vadd.f32 %v982, %v983
        %v1567 = vadd.f32 %v1566, %v984
        %v1568 = vadd.f32 %v1567, %v985
        %1569 = vadd.xlane.f32.xlu0 %v1568
        %v1570 = vpop.xlane.xlu0 %1569
        %v1571 = vadd.f32 %v986, %v987
        %v1572 = vadd.f32 %v1571, %v988
        %v1573 = vadd.f32 %v1572, %v989
        %1574 = vadd.xlane.f32.xlu0 %v1573
        %v1575 = vpop.xlane.xlu0 %1574
        %v1576 = vadd.f32 %v990, %v991
        %v1577 = vadd.f32 %v1576, %v992
        %v1578 = vadd.f32 %v1577, %v993
        %1579 = vadd.xlane.f32.xlu0 %v1578
        %v1580 = vpop.xlane.xlu0 %1579
        %v1581 = vadd.f32 %v994, %v995
        %v1582 = vadd.f32 %v1581, %v996
        %v1583 = vadd.f32 %v1582, %v997
        %1584 = vadd.xlane.f32.xlu0 %v1583
        %v1585 = vpop.xlane.xlu0 %1584
        %v1586 = vadd.f32 %v998, %v999
        %v1587 = vadd.f32 %v1586, %v1000
        %v1588 = vadd.f32 %v1587, %v1001
        %1589 = vadd.xlane.f32.xlu0 %v1588
        %v1590 = vpop.xlane.xlu0 %1589
        %v1591 = vadd.f32 %v1002, %v1003
        %v1592 = vadd.f32 %v1591, %v1004
        %v1593 = vadd.f32 %v1592, %v1005
        %1594 = vadd.xlane.f32.xlu0 %v1593
        %v1595 = vpop.xlane.xlu0 %1594
        %v1596 = vadd.f32 %v1006, %v1007
        %v1597 = vadd.f32 %v1596, %v1008
        %v1598 = vadd.f32 %v1597, %v1009
        %1599 = vadd.xlane.f32.xlu0 %v1598
        %v1600 = vpop.xlane.xlu0 %1599
        %v1601 = vadd.f32 %v1010, %v1011
        %v1602 = vadd.f32 %v1601, %v1012
        %v1603 = vadd.f32 %v1602, %v1013
        %1604 = vadd.xlane.f32.xlu0 %v1603
        %v1605 = vpop.xlane.xlu0 %1604
        %v1606 = vadd.f32 %v1014, %v1015
        %v1607 = vadd.f32 %v1606, %v1016
        %v1608 = vadd.f32 %v1607, %v1017
        %1609 = vadd.xlane.f32.xlu0 %v1608
        %v1610 = vpop.xlane.xlu0 %1609
        %v1611 = vadd.f32 %v1018, %v1019
        %v1612 = vadd.f32 %v1611, %v1020
        %v1613 = vadd.f32 %v1612, %v1021
        %1614 = vadd.xlane.f32.xlu0 %v1613
        %v1615 = vpop.xlane.xlu0 %1614
        %v1616 = vadd.f32 %v1022, %v1023
        %v1617 = vadd.f32 %v1616, %v1024
        %v1618 = vadd.f32 %v1617, %v1025
        %1619 = vadd.xlane.f32.xlu0 %v1618
        %v1620 = vpop.xlane.xlu0 %1619
        %v1621 = vadd.f32 %v1026, %v1027
        %v1622 = vadd.f32 %v1621, %v1028
        %v1623 = vadd.f32 %v1622, %v1029
        %1624 = vadd.xlane.f32.xlu0 %v1623
        %v1625 = vpop.xlane.xlu0 %1624
        %v1626 = vadd.f32 %v1030, %v1031
        %v1627 = vadd.f32 %v1626, %v1032
        %v1628 = vadd.f32 %v1627, %v1033
        %1629 = vadd.xlane.f32.xlu0 %v1628
        %v1630 = vpop.xlane.xlu0 %1629
        %v1631 = vadd.f32 %v1034, %v1035
        %v1632 = vadd.f32 %v1631, %v1036
        %v1633 = vadd.f32 %v1632, %v1037
        %1634 = vadd.xlane.f32.xlu0 %v1633
        %v1635 = vpop.xlane.xlu0 %1634
        %v1636 = vadd.f32 %v1038, %v1039
        %v1637 = vadd.f32 %v1636, %v1040
        %v1638 = vadd.f32 %v1637, %v1041
        %1639 = vadd.xlane.f32.xlu0 %v1638
        %v1640 = vpop.xlane.xlu0 %1639
        %v1641 = vadd.f32 %v1042, %v1043
        %v1642 = vadd.f32 %v1641, %v1044
        %v1643 = vadd.f32 %v1642, %v1045
        %1644 = vadd.xlane.f32.xlu0 %v1643
        %v1645 = vpop.xlane.xlu0 %1644
        %v1646 = vadd.f32 %v1046, %v1047
        %v1647 = vadd.f32 %v1646, %v1048
        %v1648 = vadd.f32 %v1647, %v1049
        %1649 = vadd.xlane.f32.xlu0 %v1648
        %v1650 = vpop.xlane.xlu0 %1649
        %v1651 = vadd.f32 %v1050, %v1051
        %v1652 = vadd.f32 %v1651, %v1052
        %v1653 = vadd.f32 %v1652, %v1053
        %1654 = vadd.xlane.f32.xlu0 %v1653
        %v1655 = vpop.xlane.xlu0 %1654
        %v1656 = vadd.f32 %v1054, %v1055
        %v1657 = vadd.f32 %v1656, %v1056
        %v1658 = vadd.f32 %v1657, %v1057
        %1659 = vadd.xlane.f32.xlu0 %v1658
        %v1660 = vpop.xlane.xlu0 %1659
        %v1661 = vadd.f32 %v1058, %v1059
        %v1662 = vadd.f32 %v1661, %v1060
        %v1663 = vadd.f32 %v1662, %v1061
        %1664 = vadd.xlane.f32.xlu0 %v1663
        %v1665 = vpop.xlane.xlu0 %1664
        %v1666 = vadd.f32 %v1062, %v1063
        %v1667 = vadd.f32 %v1666, %v1064
        %v1668 = vadd.f32 %v1667, %v1065
        %1669 = vadd.xlane.f32.xlu0 %v1668
        %v1670 = vpop.xlane.xlu0 %1669
        %v1671 = vadd.f32 %v1066, %v1067
        %v1672 = vadd.f32 %v1671, %v1068
        %v1673 = vadd.f32 %v1672, %v1069
        %1674 = vadd.xlane.f32.xlu0 %v1673
        %v1675 = vpop.xlane.xlu0 %1674
        %v1676 = vadd.f32 %v1070, %v1071
        %v1677 = vadd.f32 %v1676, %v1072
        %v1678 = vadd.f32 %v1677, %v1073
        %1679 = vadd.xlane.f32.xlu0 %v1678
        %v1680 = vpop.xlane.xlu0 %1679
        %v1681 = vadd.f32 %v1074, %v1075
        %v1682 = vadd.f32 %v1681, %v1076
        %v1683 = vadd.f32 %v1682, %v1077
        %1684 = vadd.xlane.f32.xlu0 %v1683
        %v1685 = vpop.xlane.xlu0 %1684
        %v1686 = vadd.f32 %v1078, %v1079
        %v1687 = vadd.f32 %v1686, %v1080
        %v1688 = vadd.f32 %v1687, %v1081
        %1689 = vadd.xlane.f32.xlu0 %v1688
        %v1690 = vpop.xlane.xlu0 %1689
        %v1691 = vadd.f32 %v1082, %v1083
        %v1692 = vadd.f32 %v1691, %v1084
        %v1693 = vadd.f32 %v1692, %v1085
        %1694 = vadd.xlane.f32.xlu0 %v1693
        %v1695 = vpop.xlane.xlu0 %1694
        %v1696 = vadd.f32 %v1086, %v1087
        %v1697 = vadd.f32 %v1696, %v1088
        %v1698 = vadd.f32 %v1697, %v1089
        %1699 = vadd.xlane.f32.xlu0 %v1698
        %v1700 = vpop.xlane.xlu0 %1699
        %v1701 = vadd.f32 %v1090, %v1091
        %v1702 = vadd.f32 %v1701, %v1092
        %v1703 = vadd.f32 %v1702, %v1093
        %1704 = vadd.xlane.f32.xlu0 %v1703
        %v1705 = vpop.xlane.xlu0 %1704
        %v1706 = vadd.f32 %v1094, %v1095
        %v1707 = vadd.f32 %v1706, %v1096
        %v1708 = vadd.f32 %v1707, %v1097
        %1709 = vadd.xlane.f32.xlu0 %v1708
        %v1710 = vpop.xlane.xlu0 %1709
        %v1711 = vadd.f32 %v1098, %v1099
        %v1712 = vadd.f32 %v1711, %v1100
        %v1713 = vadd.f32 %v1712, %v1101
        %1714 = vadd.xlane.f32.xlu0 %v1713
        %v1715 = vpop.xlane.xlu0 %1714
        %v1716 = vadd.f32 %v1102, %v1103
        %v1717 = vadd.f32 %v1716, %v1104
        %v1718 = vadd.f32 %v1717, %v1105
        %1719 = vadd.xlane.f32.xlu0 %v1718
        %v1720 = vpop.xlane.xlu0 %1719
        %v1721 = vadd.f32 %v1106, %v1107
        %v1722 = vadd.f32 %v1721, %v1108
        %v1723 = vadd.f32 %v1722, %v1109
        %1724 = vadd.xlane.f32.xlu0 %v1723
        %v1725 = vpop.xlane.xlu0 %1724
        %v1726 = vadd.f32 %v1110, %v1111
        %v1727 = vadd.f32 %v1726, %v1112
        %v1728 = vadd.f32 %v1727, %v1113
        %1729 = vadd.xlane.f32.xlu0 %v1728
        %v1730 = vpop.xlane.xlu0 %1729
        %v1731 = vadd.f32 %v1114, %v1115
        %v1732 = vadd.f32 %v1731, %v1116
        %v1733 = vadd.f32 %v1732, %v1117
        %1734 = vadd.xlane.f32.xlu0 %v1733
        %v1735 = vpop.xlane.xlu0 %1734
        %v1736 = vadd.f32 %v1118, %v1119
        %v1737 = vadd.f32 %v1736, %v1120
        %v1738 = vadd.f32 %v1737, %v1121
        %1739 = vadd.xlane.f32.xlu0 %v1738
        %v1740 = vpop.xlane.xlu0 %1739
        %v1741 = vadd.f32 %v1122, %v1123
        %v1742 = vadd.f32 %v1741, %v1124
        %v1743 = vadd.f32 %v1742, %v1125
        %1744 = vadd.xlane.f32.xlu0 %v1743
        %v1745 = vpop.xlane.xlu0 %1744
        %v1746 = vadd.f32 %v1126, %v1127
        %v1747 = vadd.f32 %v1746, %v1128
        %v1748 = vadd.f32 %v1747, %v1129
        %1749 = vadd.xlane.f32.xlu0 %v1748
        %v1750 = vpop.xlane.xlu0 %1749
        %v1751 = vadd.f32 %v1130, %v1131
        %v1752 = vadd.f32 %v1751, %v1132
        %v1753 = vadd.f32 %v1752, %v1133
        %1754 = vadd.xlane.f32.xlu0 %v1753
        %v1755 = vpop.xlane.xlu0 %1754
        %v1756 = vadd.f32 %v1134, %v1135
        %v1757 = vadd.f32 %v1756, %v1136
        %v1758 = vadd.f32 %v1757, %v1137
        %1759 = vadd.xlane.f32.xlu0 %v1758
        %v1760 = vpop.xlane.xlu0 %1759
        %v1761 = vadd.f32 %v1138, %v1139
        %v1762 = vadd.f32 %v1761, %v1140
        %v1763 = vadd.f32 %v1762, %v1141
        %1764 = vadd.xlane.f32.xlu0 %v1763
        %v1765 = vpop.xlane.xlu0 %1764
        %v1766 = vadd.f32 %v1142, %v1143
        %v1767 = vadd.f32 %v1766, %v1144
        %v1768 = vadd.f32 %v1767, %v1145
        %1769 = vadd.xlane.f32.xlu0 %v1768
        %v1770 = vpop.xlane.xlu0 %1769
        %v1771 = vadd.f32 %v1146, %v1147
        %v1772 = vadd.f32 %v1771, %v1148
        %v1773 = vadd.f32 %v1772, %v1149
        %1774 = vadd.xlane.f32.xlu0 %v1773
        %v1775 = vpop.xlane.xlu0 %1774
        %v1776 = vadd.f32 %v1150, %v1151
        %v1777 = vadd.f32 %v1776, %v1152
        %v1778 = vadd.f32 %v1777, %v1153
        %1779 = vadd.xlane.f32.xlu0 %v1778
        %v1780 = vpop.xlane.xlu0 %1779
        %v1781 = vadd.f32 %v1154, %v1155
        %v1782 = vadd.f32 %v1781, %v1156
        %v1783 = vadd.f32 %v1782, %v1157
        %1784 = vadd.xlane.f32.xlu0 %v1783
        %v1785 = vpop.xlane.xlu0 %1784
        %v1786 = vadd.f32 %v1158, %v1159
        %v1787 = vadd.f32 %v1786, %v1160
        %v1788 = vadd.f32 %v1787, %v1161
        %1789 = vadd.xlane.f32.xlu0 %v1788
        %v1790 = vpop.xlane.xlu0 %1789
        %v1791 = vadd.f32 %v1162, %v1163
        %v1792 = vadd.f32 %v1791, %v1164
        %v1793 = vadd.f32 %v1792, %v1165
        %1794 = vadd.xlane.f32.xlu0 %v1793
        %v1795 = vpop.xlane.xlu0 %1794
        %v1796 = vadd.f32 %v1166, %v1167
        %v1797 = vadd.f32 %v1796, %v1168
        %v1798 = vadd.f32 %v1797, %v1169
        %1799 = vadd.xlane.f32.xlu0 %v1798
        %v1800 = vpop.xlane.xlu0 %1799
        %v1801 = vadd.f32 %v1170, %v1171
        %v1802 = vadd.f32 %v1801, %v1172
        %v1803 = vadd.f32 %v1802, %v1173
        %1804 = vadd.xlane.f32.xlu0 %v1803
        %v1805 = vpop.xlane.xlu0 %1804
        %v1806 = vadd.f32 %v1174, %v1175
        %v1807 = vadd.f32 %v1806, %v1176
        %v1808 = vadd.f32 %v1807, %v1177
        %1809 = vadd.xlane.f32.xlu0 %v1808
        %v1810 = vpop.xlane.xlu0 %1809
        %v1811 = vadd.f32 %v1178, %v1179
        %v1812 = vadd.f32 %v1811, %v1180
        %v1813 = vadd.f32 %v1812, %v1181
        %1814 = vadd.xlane.f32.xlu0 %v1813
        %v1815 = vpop.xlane.xlu0 %1814
        %v1816 = vadd.f32 %v1182, %v1183
        %v1817 = vadd.f32 %v1816, %v1184
        %v1818 = vadd.f32 %v1817, %v1185
        %1819 = vadd.xlane.f32.xlu0 %v1818
        %v1820 = vpop.xlane.xlu0 %1819
        %v1821 = vadd.f32 %v1186, %v1187
        %v1822 = vadd.f32 %v1821, %v1188
        %v1823 = vadd.f32 %v1822, %v1189
        %1824 = vadd.xlane.f32.xlu0 %v1823
        %v1825 = vpop.xlane.xlu0 %1824
        %v1826 = vadd.f32 %v1190, %v1191
        %v1827 = vadd.f32 %v1826, %v1192
        %v1828 = vadd.f32 %v1827, %v1193
        %1829 = vadd.xlane.f32.xlu0 %v1828
        %v1830 = vpop.xlane.xlu0 %1829
        %v1831 = vadd.f32 %v1194, %v1195
        %v1832 = vadd.f32 %v1831, %v1196
        %v1833 = vadd.f32 %v1832, %v1197
        %1834 = vadd.xlane.f32.xlu0 %v1833
        %v1835 = vpop.xlane.xlu0 %1834
        %v1836 = vadd.f32 %v1198, %v1199
        %v1837 = vadd.f32 %v1836, %v1200
        %v1838 = vadd.f32 %v1837, %v1201
        %1839 = vadd.xlane.f32.xlu0 %v1838
        %v1840 = vpop.xlane.xlu0 %1839
        %v1841 = vadd.f32 %v1202, %v1203
        %v1842 = vadd.f32 %v1841, %v1204
        %v1843 = vadd.f32 %v1842, %v1205
        %1844 = vadd.xlane.f32.xlu0 %v1843
        %v1845 = vpop.xlane.xlu0 %1844
        %v1846 = vmul.f32 %v1210, 0.001953125
        %v1847 = vmul.f32 %v1215, 0.001953125
        %v1848 = vmul.f32 %v1220, 0.001953125
        %v1849 = vmul.f32 %v1225, 0.001953125
        %v1850 = vmul.f32 %v1230, 0.001953125
        %v1851 = vmul.f32 %v1235, 0.001953125
        %v1852 = vmul.f32 %v1240, 0.001953125
        %v1853 = vmul.f32 %v1245, 0.001953125
        %v1854 = vmul.f32 %v1250, 0.001953125
        %v1855 = vmul.f32 %v1255, 0.001953125
        %v1856 = vmul.f32 %v1260, 0.001953125
        %v1857 = vmul.f32 %v1265, 0.001953125
        %v1858 = vmul.f32 %v1270, 0.001953125
        %v1859 = vmul.f32 %v1275, 0.001953125
        %v1860 = vmul.f32 %v1280, 0.001953125
        %v1861 = vmul.f32 %v1285, 0.001953125
        %v1862 = vmul.f32 %v1290, 0.001953125
        %v1863 = vmul.f32 %v1295, 0.001953125
        %v1864 = vmul.f32 %v1300, 0.001953125
        %v1865 = vmul.f32 %v1305, 0.001953125
        %v1866 = vmul.f32 %v1310, 0.001953125
        %v1867 = vmul.f32 %v1315, 0.001953125
        %v1868 = vmul.f32 %v1320, 0.001953125
        %v1869 = vmul.f32 %v1325, 0.001953125
        %v1870 = vmul.f32 %v1330, 0.001953125
        %v1871 = vmul.f32 %v1335, 0.001953125
        %v1872 = vmul.f32 %v1340, 0.001953125
        %v1873 = vmul.f32 %v1345, 0.001953125
        %v1874 = vmul.f32 %v1350, 0.001953125
        %v1875 = vmul.f32 %v1355, 0.001953125
        %v1876 = vmul.f32 %v1360, 0.001953125
        %v1877 = vmul.f32 %v1365, 0.001953125
        %v1878 = vmul.f32 %v1370, 0.001953125
        %v1879 = vmul.f32 %v1375, 0.001953125
        %v1880 = vmul.f32 %v1380, 0.001953125
        %v1881 = vmul.f32 %v1385, 0.001953125
        %v1882 = vmul.f32 %v1390, 0.001953125
        %v1883 = vmul.f32 %v1395, 0.001953125
        %v1884 = vmul.f32 %v1400, 0.001953125
        %v1885 = vmul.f32 %v1405, 0.001953125
        %v1886 = vmul.f32 %v1410, 0.001953125
        %v1887 = vmul.f32 %v1415, 0.001953125
        %v1888 = vmul.f32 %v1420, 0.001953125
        %v1889 = vmul.f32 %v1425, 0.001953125
        %v1890 = vmul.f32 %v1430, 0.001953125
        %v1891 = vmul.f32 %v1435, 0.001953125
        %v1892 = vmul.f32 %v1440, 0.001953125
        %v1893 = vmul.f32 %v1445, 0.001953125
        %v1894 = vmul.f32 %v1450, 0.001953125
        %v1895 = vmul.f32 %v1455, 0.001953125
        %v1896 = vmul.f32 %v1460, 0.001953125
        %v1897 = vmul.f32 %v1465, 0.001953125
        %v1898 = vmul.f32 %v1470, 0.001953125
        %v1899 = vmul.f32 %v1475, 0.001953125
        %v1900 = vmul.f32 %v1480, 0.001953125
        %v1901 = vmul.f32 %v1485, 0.001953125
        %v1902 = vmul.f32 %v1490, 0.001953125
        %v1903 = vmul.f32 %v1495, 0.001953125
        %v1904 = vmul.f32 %v1500, 0.001953125
        %v1905 = vmul.f32 %v1505, 0.001953125
        %v1906 = vmul.f32 %v1510, 0.001953125
        %v1907 = vmul.f32 %v1515, 0.001953125
        %v1908 = vmul.f32 %v1520, 0.001953125
        %v1909 = vmul.f32 %v1525, 0.001953125
        %v1910 = vmul.f32 %v1530, 0.001953125
        %v1911 = vmul.f32 %v1535, 0.001953125
        %v1912 = vmul.f32 %v1540, 0.001953125
        %v1913 = vmul.f32 %v1545, 0.001953125
        %v1914 = vmul.f32 %v1550, 0.001953125
        %v1915 = vmul.f32 %v1555, 0.001953125
        %v1916 = vmul.f32 %v1560, 0.001953125
        %v1917 = vmul.f32 %v1565, 0.001953125
        %v1918 = vmul.f32 %v1570, 0.001953125
        %v1919 = vmul.f32 %v1575, 0.001953125
        %v1920 = vmul.f32 %v1580, 0.001953125
        %v1921 = vmul.f32 %v1585, 0.001953125
        %v1922 = vmul.f32 %v1590, 0.001953125
        %v1923 = vmul.f32 %v1595, 0.001953125
        %v1924 = vmul.f32 %v1600, 0.001953125
        %v1925 = vmul.f32 %v1605, 0.001953125
        %v1926 = vmul.f32 %v1610, 0.001953125
        %v1927 = vmul.f32 %v1615, 0.001953125
        %v1928 = vmul.f32 %v1620, 0.001953125
        %v1929 = vmul.f32 %v1625, 0.001953125
        %v1930 = vmul.f32 %v1630, 0.001953125
        %v1931 = vmul.f32 %v1635, 0.001953125
        %v1932 = vmul.f32 %v1640, 0.001953125
        %v1933 = vmul.f32 %v1645, 0.001953125
        %v1934 = vmul.f32 %v1650, 0.001953125
        %v1935 = vmul.f32 %v1655, 0.001953125
        %v1936 = vmul.f32 %v1660, 0.001953125
        %v1937 = vmul.f32 %v1665, 0.001953125
        %v1938 = vmul.f32 %v1670, 0.001953125
        %v1939 = vmul.f32 %v1675, 0.001953125
        %v1940 = vmul.f32 %v1680, 0.001953125
        %v1941 = vmul.f32 %v1685, 0.001953125
        %v1942 = vmul.f32 %v1690, 0.001953125
        %v1943 = vmul.f32 %v1695, 0.001953125
        %v1944 = vmul.f32 %v1700, 0.001953125
        %v1945 = vmul.f32 %v1705, 0.001953125
        %v1946 = vmul.f32 %v1710, 0.001953125
        %v1947 = vmul.f32 %v1715, 0.001953125
        %v1948 = vmul.f32 %v1720, 0.001953125
        %v1949 = vmul.f32 %v1725, 0.001953125
        %v1950 = vmul.f32 %v1730, 0.001953125
        %v1951 = vmul.f32 %v1735, 0.001953125
        %v1952 = vmul.f32 %v1740, 0.001953125
        %v1953 = vmul.f32 %v1745, 0.001953125
        %v1954 = vmul.f32 %v1750, 0.001953125
        %v1955 = vmul.f32 %v1755, 0.001953125
        %v1956 = vmul.f32 %v1760, 0.001953125
        %v1957 = vmul.f32 %v1765, 0.001953125
        %v1958 = vmul.f32 %v1770, 0.001953125
        %v1959 = vmul.f32 %v1775, 0.001953125
        %v1960 = vmul.f32 %v1780, 0.001953125
        %v1961 = vmul.f32 %v1785, 0.001953125
        %v1962 = vmul.f32 %v1790, 0.001953125
        %v1963 = vmul.f32 %v1795, 0.001953125
        %v1964 = vmul.f32 %v1800, 0.001953125
        %v1965 = vmul.f32 %v1805, 0.001953125
        %v1966 = vmul.f32 %v1810, 0.001953125
        %v1967 = vmul.f32 %v1815, 0.001953125
        %v1968 = vmul.f32 %v1820, 0.001953125
        %v1969 = vmul.f32 %v1825, 0.001953125
        %v1970 = vmul.f32 %v1830, 0.001953125
        %v1971 = vmul.f32 %v1835, 0.001953125
        %v1972 = vmul.f32 %v1840, 0.001953125
        %v1973 = vmul.f32 %v1845, 0.001953125
        %v1974 = vadd.f32 %v1846, 1e-06
        %v1975 = vadd.f32 %v1847, 1e-06
        %v1976 = vadd.f32 %v1848, 1e-06
        %v1977 = vadd.f32 %v1849, 1e-06
        %v1978 = vadd.f32 %v1850, 1e-06
        %v1979 = vadd.f32 %v1851, 1e-06
        %v1980 = vadd.f32 %v1852, 1e-06
        %v1981 = vadd.f32 %v1853, 1e-06
        %v1982 = vadd.f32 %v1854, 1e-06
        %v1983 = vadd.f32 %v1855, 1e-06
        %v1984 = vadd.f32 %v1856, 1e-06
        %v1985 = vadd.f32 %v1857, 1e-06
        %v1986 = vadd.f32 %v1858, 1e-06
        %v1987 = vadd.f32 %v1859, 1e-06
        %v1988 = vadd.f32 %v1860, 1e-06
        %v1989 = vadd.f32 %v1861, 1e-06
        %v1990 = vadd.f32 %v1862, 1e-06
        %v1991 = vadd.f32 %v1863, 1e-06
        %v1992 = vadd.f32 %v1864, 1e-06
        %v1993 = vadd.f32 %v1865, 1e-06
        %v1994 = vadd.f32 %v1866, 1e-06
        %v1995 = vadd.f32 %v1867, 1e-06
        %v1996 = vadd.f32 %v1868, 1e-06
        %v1997 = vadd.f32 %v1869, 1e-06
        %v1998 = vadd.f32 %v1870, 1e-06
        %v1999 = vadd.f32 %v1871, 1e-06
        %v2000 = vadd.f32 %v1872, 1e-06
        %v2001 = vadd.f32 %v1873, 1e-06
        %v2002 = vadd.f32 %v1874, 1e-06
        %v2003 = vadd.f32 %v1875, 1e-06
        %v2004 = vadd.f32 %v1876, 1e-06
        %v2005 = vadd.f32 %v1877, 1e-06
        %v2006 = vadd.f32 %v1878, 1e-06
        %v2007 = vadd.f32 %v1879, 1e-06
        %v2008 = vadd.f32 %v1880, 1e-06
        %v2009 = vadd.f32 %v1881, 1e-06
        %v2010 = vadd.f32 %v1882, 1e-06
        %v2011 = vadd.f32 %v1883, 1e-06
        %v2012 = vadd.f32 %v1884, 1e-06
        %v2013 = vadd.f32 %v1885, 1e-06
        %v2014 = vadd.f32 %v1886, 1e-06
        %v2015 = vadd.f32 %v1887, 1e-06
        %v2016 = vadd.f32 %v1888, 1e-06
        %v2017 = vadd.f32 %v1889, 1e-06
        %v2018 = vadd.f32 %v1890, 1e-06
        %v2019 = vadd.f32 %v1891, 1e-06
        %v2020 = vadd.f32 %v1892, 1e-06
        %v2021 = vadd.f32 %v1893, 1e-06
        %v2022 = vadd.f32 %v1894, 1e-06
        %v2023 = vadd.f32 %v1895, 1e-06
        %v2024 = vadd.f32 %v1896, 1e-06
        %v2025 = vadd.f32 %v1897, 1e-06
        %v2026 = vadd.f32 %v1898, 1e-06
        %v2027 = vadd.f32 %v1899, 1e-06
        %v2028 = vadd.f32 %v1900, 1e-06
        %v2029 = vadd.f32 %v1901, 1e-06
        %v2030 = vadd.f32 %v1902, 1e-06
        %v2031 = vadd.f32 %v1903, 1e-06
        %v2032 = vadd.f32 %v1904, 1e-06
        %v2033 = vadd.f32 %v1905, 1e-06
        %v2034 = vadd.f32 %v1906, 1e-06
        %v2035 = vadd.f32 %v1907, 1e-06
        %v2036 = vadd.f32 %v1908, 1e-06
        %v2037 = vadd.f32 %v1909, 1e-06
        %v2038 = vadd.f32 %v1910, 1e-06
        %v2039 = vadd.f32 %v1911, 1e-06
        %v2040 = vadd.f32 %v1912, 1e-06
        %v2041 = vadd.f32 %v1913, 1e-06
        %v2042 = vadd.f32 %v1914, 1e-06
        %v2043 = vadd.f32 %v1915, 1e-06
        %v2044 = vadd.f32 %v1916, 1e-06
        %v2045 = vadd.f32 %v1917, 1e-06
        %v2046 = vadd.f32 %v1918, 1e-06
        %v2047 = vadd.f32 %v1919, 1e-06
        %v2048 = vadd.f32 %v1920, 1e-06
        %v2049 = vadd.f32 %v1921, 1e-06
        %v2050 = vadd.f32 %v1922, 1e-06
        %v2051 = vadd.f32 %v1923, 1e-06
        %v2052 = vadd.f32 %v1924, 1e-06
        %v2053 = vadd.f32 %v1925, 1e-06
        %v2054 = vadd.f32 %v1926, 1e-06
        %v2055 = vadd.f32 %v1927, 1e-06
        %v2056 = vadd.f32 %v1928, 1e-06
        %v2057 = vadd.f32 %v1929, 1e-06
        %v2058 = vadd.f32 %v1930, 1e-06
        %v2059 = vadd.f32 %v1931, 1e-06
        %v2060 = vadd.f32 %v1932, 1e-06
        %v2061 = vadd.f32 %v1933, 1e-06
        %v2062 = vadd.f32 %v1934, 1e-06
        %v2063 = vadd.f32 %v1935, 1e-06
        %v2064 = vadd.f32 %v1936, 1e-06
        %v2065 = vadd.f32 %v1937, 1e-06
        %v2066 = vadd.f32 %v1938, 1e-06
        %v2067 = vadd.f32 %v1939, 1e-06
        %v2068 = vadd.f32 %v1940, 1e-06
        %v2069 = vadd.f32 %v1941, 1e-06
        %v2070 = vadd.f32 %v1942, 1e-06
        %v2071 = vadd.f32 %v1943, 1e-06
        %v2072 = vadd.f32 %v1944, 1e-06
        %v2073 = vadd.f32 %v1945, 1e-06
        %v2074 = vadd.f32 %v1946, 1e-06
        %v2075 = vadd.f32 %v1947, 1e-06
        %v2076 = vadd.f32 %v1948, 1e-06
        %v2077 = vadd.f32 %v1949, 1e-06
        %v2078 = vadd.f32 %v1950, 1e-06
        %v2079 = vadd.f32 %v1951, 1e-06
        %v2080 = vadd.f32 %v1952, 1e-06
        %v2081 = vadd.f32 %v1953, 1e-06
        %v2082 = vadd.f32 %v1954, 1e-06
        %v2083 = vadd.f32 %v1955, 1e-06
        %v2084 = vadd.f32 %v1956, 1e-06
        %v2085 = vadd.f32 %v1957, 1e-06
        %v2086 = vadd.f32 %v1958, 1e-06
        %v2087 = vadd.f32 %v1959, 1e-06
        %v2088 = vadd.f32 %v1960, 1e-06
        %v2089 = vadd.f32 %v1961, 1e-06
        %v2090 = vadd.f32 %v1962, 1e-06
        %v2091 = vadd.f32 %v1963, 1e-06
        %v2092 = vadd.f32 %v1964, 1e-06
        %v2093 = vadd.f32 %v1965, 1e-06
        %v2094 = vadd.f32 %v1966, 1e-06
        %v2095 = vadd.f32 %v1967, 1e-06
        %v2096 = vadd.f32 %v1968, 1e-06
        %v2097 = vadd.f32 %v1969, 1e-06
        %v2098 = vadd.f32 %v1970, 1e-06
        %v2099 = vadd.f32 %v1971, 1e-06
        %v2100 = vadd.f32 %v1972, 1e-06
        %v2101 = vadd.f32 %v1973, 1e-06
        %v2102 = vrsqrt.pop %v1974
        %v2103 = vmul.f32 %v2102, %v1974
        %v2104 = vmul.f32 %v2103, %v2102
        %v2105 = vmul.f32 0.5, %v2104
        %v2106 = vsub.f32 1.5, %v2105
        %v2107 = vmul.f32 %v2102, %v2106
        %vm2108 = vweird.f32 %v1974
        %vm2109 = vweird.f32 %v2102
        %vm2110 = vmor %vm2108, %vm2109
        %v2111 = vsel %vm2110, %v2102, %v2107
        %v2112 = vrsqrt.pop %v1975
        %v2113 = vmul.f32 %v2112, %v1975
        %v2114 = vmul.f32 %v2113, %v2112
        %v2115 = vmul.f32 0.5, %v2114
        %v2116 = vsub.f32 1.5, %v2115
        %v2117 = vmul.f32 %v2112, %v2116
        %vm2118 = vweird.f32 %v1975
        %vm2119 = vweird.f32 %v2112
        %vm2120 = vmor %vm2118, %vm2119
        %v2121 = vsel %vm2120, %v2112, %v2117
        %v2122 = vrsqrt.pop %v1976
        %v2123 = vmul.f32 %v2122, %v1976
        %v2124 = vmul.f32 %v2123, %v2122
        %v2125 = vmul.f32 0.5, %v2124
        %v2126 = vsub.f32 1.5, %v2125
        %v2127 = vmul.f32 %v2122, %v2126
        %vm2128 = vweird.f32 %v1976
        %vm2129 = vweird.f32 %v2122
        %vm2130 = vmor %vm2128, %vm2129
        %v2131 = vsel %vm2130, %v2122, %v2127
        %v2132 = vrsqrt.pop %v1977
        %v2133 = vmul.f32 %v2132, %v1977
        %v2134 = vmul.f32 %v2133, %v2132
        %v2135 = vmul.f32 0.5, %v2134
        %v2136 = vsub.f32 1.5, %v2135
        %v2137 = vmul.f32 %v2132, %v2136
        %vm2138 = vweird.f32 %v1977
        %vm2139 = vweird.f32 %v2132
        %vm2140 = vmor %vm2138, %vm2139
        %v2141 = vsel %vm2140, %v2132, %v2137
        %v2142 = vrsqrt.pop %v1978
        %v2143 = vmul.f32 %v2142, %v1978
        %v2144 = vmul.f32 %v2143, %v2142
        %v2145 = vmul.f32 0.5, %v2144
        %v2146 = vsub.f32 1.5, %v2145
        %v2147 = vmul.f32 %v2142, %v2146
        %vm2148 = vweird.f32 %v1978
        %vm2149 = vweird.f32 %v2142
        %vm2150 = vmor %vm2148, %vm2149
        %v2151 = vsel %vm2150, %v2142, %v2147
        %v2152 = vrsqrt.pop %v1979
        %v2153 = vmul.f32 %v2152, %v1979
        %v2154 = vmul.f32 %v2153, %v2152
        %v2155 = vmul.f32 0.5, %v2154
        %v2156 = vsub.f32 1.5, %v2155
        %v2157 = vmul.f32 %v2152, %v2156
        %vm2158 = vweird.f32 %v1979
        %vm2159 = vweird.f32 %v2152
        %vm2160 = vmor %vm2158, %vm2159
        %v2161 = vsel %vm2160, %v2152, %v2157
        %v2162 = vrsqrt.pop %v1980
        %v2163 = vmul.f32 %v2162, %v1980
        %v2164 = vmul.f32 %v2163, %v2162
        %v2165 = vmul.f32 0.5, %v2164
        %v2166 = vsub.f32 1.5, %v2165
        %v2167 = vmul.f32 %v2162, %v2166
        %vm2168 = vweird.f32 %v1980
        %vm2169 = vweird.f32 %v2162
        %vm2170 = vmor %vm2168, %vm2169
        %v2171 = vsel %vm2170, %v2162, %v2167
        %v2172 = vrsqrt.pop %v1981
        %v2173 = vmul.f32 %v2172, %v1981
        %v2174 = vmul.f32 %v2173, %v2172
        %v2175 = vmul.f32 0.5, %v2174
        %v2176 = vsub.f32 1.5, %v2175
        %v2177 = vmul.f32 %v2172, %v2176
        %vm2178 = vweird.f32 %v1981
        %vm2179 = vweird.f32 %v2172
        %vm2180 = vmor %vm2178, %vm2179
        %v2181 = vsel %vm2180, %v2172, %v2177
        %v2182 = vrsqrt.pop %v1982
        %v2183 = vmul.f32 %v2182, %v1982
        %v2184 = vmul.f32 %v2183, %v2182
        %v2185 = vmul.f32 0.5, %v2184
        %v2186 = vsub.f32 1.5, %v2185
        %v2187 = vmul.f32 %v2182, %v2186
        %vm2188 = vweird.f32 %v1982
        %vm2189 = vweird.f32 %v2182
        %vm2190 = vmor %vm2188, %vm2189
        %v2191 = vsel %vm2190, %v2182, %v2187
        %v2192 = vrsqrt.pop %v1983
        %v2193 = vmul.f32 %v2192, %v1983
        %v2194 = vmul.f32 %v2193, %v2192
        %v2195 = vmul.f32 0.5, %v2194
        %v2196 = vsub.f32 1.5, %v2195
        %v2197 = vmul.f32 %v2192, %v2196
        %vm2198 = vweird.f32 %v1983
        %vm2199 = vweird.f32 %v2192
        %vm2200 = vmor %vm2198, %vm2199
        %v2201 = vsel %vm2200, %v2192, %v2197
        %v2202 = vrsqrt.pop %v1984
        %v2203 = vmul.f32 %v2202, %v1984
        %v2204 = vmul.f32 %v2203, %v2202
        %v2205 = vmul.f32 0.5, %v2204
        %v2206 = vsub.f32 1.5, %v2205
        %v2207 = vmul.f32 %v2202, %v2206
        %vm2208 = vweird.f32 %v1984
        %vm2209 = vweird.f32 %v2202
        %vm2210 = vmor %vm2208, %vm2209
        %v2211 = vsel %vm2210, %v2202, %v2207
        %v2212 = vrsqrt.pop %v1985
        %v2213 = vmul.f32 %v2212, %v1985
        %v2214 = vmul.f32 %v2213, %v2212
        %v2215 = vmul.f32 0.5, %v2214
        %v2216 = vsub.f32 1.5, %v2215
        %v2217 = vmul.f32 %v2212, %v2216
        %vm2218 = vweird.f32 %v1985
        %vm2219 = vweird.f32 %v2212
        %vm2220 = vmor %vm2218, %vm2219
        %v2221 = vsel %vm2220, %v2212, %v2217
        %v2222 = vrsqrt.pop %v1986
        %v2223 = vmul.f32 %v2222, %v1986
        %v2224 = vmul.f32 %v2223, %v2222
        %v2225 = vmul.f32 0.5, %v2224
        %v2226 = vsub.f32 1.5, %v2225
        %v2227 = vmul.f32 %v2222, %v2226
        %vm2228 = vweird.f32 %v1986
        %vm2229 = vweird.f32 %v2222
        %vm2230 = vmor %vm2228, %vm2229
        %v2231 = vsel %vm2230, %v2222, %v2227
        %v2232 = vrsqrt.pop %v1987
        %v2233 = vmul.f32 %v2232, %v1987
        %v2234 = vmul.f32 %v2233, %v2232
        %v2235 = vmul.f32 0.5, %v2234
        %v2236 = vsub.f32 1.5, %v2235
        %v2237 = vmul.f32 %v2232, %v2236
        %vm2238 = vweird.f32 %v1987
        %vm2239 = vweird.f32 %v2232
        %vm2240 = vmor %vm2238, %vm2239
        %v2241 = vsel %vm2240, %v2232, %v2237
        %v2242 = vrsqrt.pop %v1988
        %v2243 = vmul.f32 %v2242, %v1988
        %v2244 = vmul.f32 %v2243, %v2242
        %v2245 = vmul.f32 0.5, %v2244
        %v2246 = vsub.f32 1.5, %v2245
        %v2247 = vmul.f32 %v2242, %v2246
        %vm2248 = vweird.f32 %v1988
        %vm2249 = vweird.f32 %v2242
        %vm2250 = vmor %vm2248, %vm2249
        %v2251 = vsel %vm2250, %v2242, %v2247
        %v2252 = vrsqrt.pop %v1989
        %v2253 = vmul.f32 %v2252, %v1989
        %v2254 = vmul.f32 %v2253, %v2252
        %v2255 = vmul.f32 0.5, %v2254
        %v2256 = vsub.f32 1.5, %v2255
        %v2257 = vmul.f32 %v2252, %v2256
        %vm2258 = vweird.f32 %v1989
        %vm2259 = vweird.f32 %v2252
        %vm2260 = vmor %vm2258, %vm2259
        %v2261 = vsel %vm2260, %v2252, %v2257
        %v2262 = vrsqrt.pop %v1990
        %v2263 = vmul.f32 %v2262, %v1990
        %v2264 = vmul.f32 %v2263, %v2262
        %v2265 = vmul.f32 0.5, %v2264
        %v2266 = vsub.f32 1.5, %v2265
        %v2267 = vmul.f32 %v2262, %v2266
        %vm2268 = vweird.f32 %v1990
        %vm2269 = vweird.f32 %v2262
        %vm2270 = vmor %vm2268, %vm2269
        %v2271 = vsel %vm2270, %v2262, %v2267
        %v2272 = vrsqrt.pop %v1991
        %v2273 = vmul.f32 %v2272, %v1991
        %v2274 = vmul.f32 %v2273, %v2272
        %v2275 = vmul.f32 0.5, %v2274
        %v2276 = vsub.f32 1.5, %v2275
        %v2277 = vmul.f32 %v2272, %v2276
        %vm2278 = vweird.f32 %v1991
        %vm2279 = vweird.f32 %v2272
        %vm2280 = vmor %vm2278, %vm2279
        %v2281 = vsel %vm2280, %v2272, %v2277
        %v2282 = vrsqrt.pop %v1992
        %v2283 = vmul.f32 %v2282, %v1992
        %v2284 = vmul.f32 %v2283, %v2282
        %v2285 = vmul.f32 0.5, %v2284
        %v2286 = vsub.f32 1.5, %v2285
        %v2287 = vmul.f32 %v2282, %v2286
        %vm2288 = vweird.f32 %v1992
        %vm2289 = vweird.f32 %v2282
        %vm2290 = vmor %vm2288, %vm2289
        %v2291 = vsel %vm2290, %v2282, %v2287
        %v2292 = vrsqrt.pop %v1993
        %v2293 = vmul.f32 %v2292, %v1993
        %v2294 = vmul.f32 %v2293, %v2292
        %v2295 = vmul.f32 0.5, %v2294
        %v2296 = vsub.f32 1.5, %v2295
        %v2297 = vmul.f32 %v2292, %v2296
        %vm2298 = vweird.f32 %v1993
        %vm2299 = vweird.f32 %v2292
        %vm2300 = vmor %vm2298, %vm2299
        %v2301 = vsel %vm2300, %v2292, %v2297
        %v2302 = vrsqrt.pop %v1994
        %v2303 = vmul.f32 %v2302, %v1994
        %v2304 = vmul.f32 %v2303, %v2302
        %v2305 = vmul.f32 0.5, %v2304
        %v2306 = vsub.f32 1.5, %v2305
        %v2307 = vmul.f32 %v2302, %v2306
        %vm2308 = vweird.f32 %v1994
        %vm2309 = vweird.f32 %v2302
        %vm2310 = vmor %vm2308, %vm2309
        %v2311 = vsel %vm2310, %v2302, %v2307
        %v2312 = vrsqrt.pop %v1995
        %v2313 = vmul.f32 %v2312, %v1995
        %v2314 = vmul.f32 %v2313, %v2312
        %v2315 = vmul.f32 0.5, %v2314
        %v2316 = vsub.f32 1.5, %v2315
        %v2317 = vmul.f32 %v2312, %v2316
        %vm2318 = vweird.f32 %v1995
        %vm2319 = vweird.f32 %v2312
        %vm2320 = vmor %vm2318, %vm2319
        %v2321 = vsel %vm2320, %v2312, %v2317
        %v2322 = vrsqrt.pop %v1996
        %v2323 = vmul.f32 %v2322, %v1996
        %v2324 = vmul.f32 %v2323, %v2322
        %v2325 = vmul.f32 0.5, %v2324
        %v2326 = vsub.f32 1.5, %v2325
        %v2327 = vmul.f32 %v2322, %v2326
        %vm2328 = vweird.f32 %v1996
        %vm2329 = vweird.f32 %v2322
        %vm2330 = vmor %vm2328, %vm2329
        %v2331 = vsel %vm2330, %v2322, %v2327
        %v2332 = vrsqrt.pop %v1997
        %v2333 = vmul.f32 %v2332, %v1997
        %v2334 = vmul.f32 %v2333, %v2332
        %v2335 = vmul.f32 0.5, %v2334
        %v2336 = vsub.f32 1.5, %v2335
        %v2337 = vmul.f32 %v2332, %v2336
        %vm2338 = vweird.f32 %v1997
        %vm2339 = vweird.f32 %v2332
        %vm2340 = vmor %vm2338, %vm2339
        %v2341 = vsel %vm2340, %v2332, %v2337
        %v2342 = vrsqrt.pop %v1998
        %v2343 = vmul.f32 %v2342, %v1998
        %v2344 = vmul.f32 %v2343, %v2342
        %v2345 = vmul.f32 0.5, %v2344
        %v2346 = vsub.f32 1.5, %v2345
        %v2347 = vmul.f32 %v2342, %v2346
        %vm2348 = vweird.f32 %v1998
        %vm2349 = vweird.f32 %v2342
        %vm2350 = vmor %vm2348, %vm2349
        %v2351 = vsel %vm2350, %v2342, %v2347
        %v2352 = vrsqrt.pop %v1999
        %v2353 = vmul.f32 %v2352, %v1999
        %v2354 = vmul.f32 %v2353, %v2352
        %v2355 = vmul.f32 0.5, %v2354
        %v2356 = vsub.f32 1.5, %v2355
        %v2357 = vmul.f32 %v2352, %v2356
        %vm2358 = vweird.f32 %v1999
        %vm2359 = vweird.f32 %v2352
        %vm2360 = vmor %vm2358, %vm2359
        %v2361 = vsel %vm2360, %v2352, %v2357
        %v2362 = vrsqrt.pop %v2000
        %v2363 = vmul.f32 %v2362, %v2000
        %v2364 = vmul.f32 %v2363, %v2362
        %v2365 = vmul.f32 0.5, %v2364
        %v2366 = vsub.f32 1.5, %v2365
        %v2367 = vmul.f32 %v2362, %v2366
        %vm2368 = vweird.f32 %v2000
        %vm2369 = vweird.f32 %v2362
        %vm2370 = vmor %vm2368, %vm2369
        %v2371 = vsel %vm2370, %v2362, %v2367
        %v2372 = vrsqrt.pop %v2001
        %v2373 = vmul.f32 %v2372, %v2001
        %v2374 = vmul.f32 %v2373, %v2372
        %v2375 = vmul.f32 0.5, %v2374
        %v2376 = vsub.f32 1.5, %v2375
        %v2377 = vmul.f32 %v2372, %v2376
        %vm2378 = vweird.f32 %v2001
        %vm2379 = vweird.f32 %v2372
        %vm2380 = vmor %vm2378, %vm2379
        %v2381 = vsel %vm2380, %v2372, %v2377
        %v2382 = vrsqrt.pop %v2002
        %v2383 = vmul.f32 %v2382, %v2002
        %v2384 = vmul.f32 %v2383, %v2382
        %v2385 = vmul.f32 0.5, %v2384
        %v2386 = vsub.f32 1.5, %v2385
        %v2387 = vmul.f32 %v2382, %v2386
        %vm2388 = vweird.f32 %v2002
        %vm2389 = vweird.f32 %v2382
        %vm2390 = vmor %vm2388, %vm2389
        %v2391 = vsel %vm2390, %v2382, %v2387
        %v2392 = vrsqrt.pop %v2003
        %v2393 = vmul.f32 %v2392, %v2003
        %v2394 = vmul.f32 %v2393, %v2392
        %v2395 = vmul.f32 0.5, %v2394
        %v2396 = vsub.f32 1.5, %v2395
        %v2397 = vmul.f32 %v2392, %v2396
        %vm2398 = vweird.f32 %v2003
        %vm2399 = vweird.f32 %v2392
        %vm2400 = vmor %vm2398, %vm2399
        %v2401 = vsel %vm2400, %v2392, %v2397
        %v2402 = vrsqrt.pop %v2004
        %v2403 = vmul.f32 %v2402, %v2004
        %v2404 = vmul.f32 %v2403, %v2402
        %v2405 = vmul.f32 0.5, %v2404
        %v2406 = vsub.f32 1.5, %v2405
        %v2407 = vmul.f32 %v2402, %v2406
        %vm2408 = vweird.f32 %v2004
        %vm2409 = vweird.f32 %v2402
        %vm2410 = vmor %vm2408, %vm2409
        %v2411 = vsel %vm2410, %v2402, %v2407
        %v2412 = vrsqrt.pop %v2005
        %v2413 = vmul.f32 %v2412, %v2005
        %v2414 = vmul.f32 %v2413, %v2412
        %v2415 = vmul.f32 0.5, %v2414
        %v2416 = vsub.f32 1.5, %v2415
        %v2417 = vmul.f32 %v2412, %v2416
        %vm2418 = vweird.f32 %v2005
        %vm2419 = vweird.f32 %v2412
        %vm2420 = vmor %vm2418, %vm2419
        %v2421 = vsel %vm2420, %v2412, %v2417
        %v2422 = vrsqrt.pop %v2006
        %v2423 = vmul.f32 %v2422, %v2006
        %v2424 = vmul.f32 %v2423, %v2422
        %v2425 = vmul.f32 0.5, %v2424
        %v2426 = vsub.f32 1.5, %v2425
        %v2427 = vmul.f32 %v2422, %v2426
        %vm2428 = vweird.f32 %v2006
        %vm2429 = vweird.f32 %v2422
        %vm2430 = vmor %vm2428, %vm2429
        %v2431 = vsel %vm2430, %v2422, %v2427
        %v2432 = vrsqrt.pop %v2007
        %v2433 = vmul.f32 %v2432, %v2007
        %v2434 = vmul.f32 %v2433, %v2432
        %v2435 = vmul.f32 0.5, %v2434
        %v2436 = vsub.f32 1.5, %v2435
        %v2437 = vmul.f32 %v2432, %v2436
        %vm2438 = vweird.f32 %v2007
        %vm2439 = vweird.f32 %v2432
        %vm2440 = vmor %vm2438, %vm2439
        %v2441 = vsel %vm2440, %v2432, %v2437
        %v2442 = vrsqrt.pop %v2008
        %v2443 = vmul.f32 %v2442, %v2008
        %v2444 = vmul.f32 %v2443, %v2442
        %v2445 = vmul.f32 0.5, %v2444
        %v2446 = vsub.f32 1.5, %v2445
        %v2447 = vmul.f32 %v2442, %v2446
        %vm2448 = vweird.f32 %v2008
        %vm2449 = vweird.f32 %v2442
        %vm2450 = vmor %vm2448, %vm2449
        %v2451 = vsel %vm2450, %v2442, %v2447
        %v2452 = vrsqrt.pop %v2009
        %v2453 = vmul.f32 %v2452, %v2009
        %v2454 = vmul.f32 %v2453, %v2452
        %v2455 = vmul.f32 0.5, %v2454
        %v2456 = vsub.f32 1.5, %v2455
        %v2457 = vmul.f32 %v2452, %v2456
        %vm2458 = vweird.f32 %v2009
        %vm2459 = vweird.f32 %v2452
        %vm2460 = vmor %vm2458, %vm2459
        %v2461 = vsel %vm2460, %v2452, %v2457
        %v2462 = vrsqrt.pop %v2010
        %v2463 = vmul.f32 %v2462, %v2010
        %v2464 = vmul.f32 %v2463, %v2462
        %v2465 = vmul.f32 0.5, %v2464
        %v2466 = vsub.f32 1.5, %v2465
        %v2467 = vmul.f32 %v2462, %v2466
        %vm2468 = vweird.f32 %v2010
        %vm2469 = vweird.f32 %v2462
        %vm2470 = vmor %vm2468, %vm2469
        %v2471 = vsel %vm2470, %v2462, %v2467
        %v2472 = vrsqrt.pop %v2011
        %v2473 = vmul.f32 %v2472, %v2011
        %v2474 = vmul.f32 %v2473, %v2472
        %v2475 = vmul.f32 0.5, %v2474
        %v2476 = vsub.f32 1.5, %v2475
        %v2477 = vmul.f32 %v2472, %v2476
        %vm2478 = vweird.f32 %v2011
        %vm2479 = vweird.f32 %v2472
        %vm2480 = vmor %vm2478, %vm2479
        %v2481 = vsel %vm2480, %v2472, %v2477
        %v2482 = vrsqrt.pop %v2012
        %v2483 = vmul.f32 %v2482, %v2012
        %v2484 = vmul.f32 %v2483, %v2482
        %v2485 = vmul.f32 0.5, %v2484
        %v2486 = vsub.f32 1.5, %v2485
        %v2487 = vmul.f32 %v2482, %v2486
        %vm2488 = vweird.f32 %v2012
        %vm2489 = vweird.f32 %v2482
        %vm2490 = vmor %vm2488, %vm2489
        %v2491 = vsel %vm2490, %v2482, %v2487
        %v2492 = vrsqrt.pop %v2013
        %v2493 = vmul.f32 %v2492, %v2013
        %v2494 = vmul.f32 %v2493, %v2492
        %v2495 = vmul.f32 0.5, %v2494
        %v2496 = vsub.f32 1.5, %v2495
        %v2497 = vmul.f32 %v2492, %v2496
        %vm2498 = vweird.f32 %v2013
        %vm2499 = vweird.f32 %v2492
        %vm2500 = vmor %vm2498, %vm2499
        %v2501 = vsel %vm2500, %v2492, %v2497
        %v2502 = vrsqrt.pop %v2014
        %v2503 = vmul.f32 %v2502, %v2014
        %v2504 = vmul.f32 %v2503, %v2502
        %v2505 = vmul.f32 0.5, %v2504
        %v2506 = vsub.f32 1.5, %v2505
        %v2507 = vmul.f32 %v2502, %v2506
        %vm2508 = vweird.f32 %v2014
        %vm2509 = vweird.f32 %v2502
        %vm2510 = vmor %vm2508, %vm2509
        %v2511 = vsel %vm2510, %v2502, %v2507
        %v2512 = vrsqrt.pop %v2015
        %v2513 = vmul.f32 %v2512, %v2015
        %v2514 = vmul.f32 %v2513, %v2512
        %v2515 = vmul.f32 0.5, %v2514
        %v2516 = vsub.f32 1.5, %v2515
        %v2517 = vmul.f32 %v2512, %v2516
        %vm2518 = vweird.f32 %v2015
        %vm2519 = vweird.f32 %v2512
        %vm2520 = vmor %vm2518, %vm2519
        %v2521 = vsel %vm2520, %v2512, %v2517
        %v2522 = vrsqrt.pop %v2016
        %v2523 = vmul.f32 %v2522, %v2016
        %v2524 = vmul.f32 %v2523, %v2522
        %v2525 = vmul.f32 0.5, %v2524
        %v2526 = vsub.f32 1.5, %v2525
        %v2527 = vmul.f32 %v2522, %v2526
        %vm2528 = vweird.f32 %v2016
        %vm2529 = vweird.f32 %v2522
        %vm2530 = vmor %vm2528, %vm2529
        %v2531 = vsel %vm2530, %v2522, %v2527
        %v2532 = vrsqrt.pop %v2017
        %v2533 = vmul.f32 %v2532, %v2017
        %v2534 = vmul.f32 %v2533, %v2532
        %v2535 = vmul.f32 0.5, %v2534
        %v2536 = vsub.f32 1.5, %v2535
        %v2537 = vmul.f32 %v2532, %v2536
        %vm2538 = vweird.f32 %v2017
        %vm2539 = vweird.f32 %v2532
        %vm2540 = vmor %vm2538, %vm2539
        %v2541 = vsel %vm2540, %v2532, %v2537
        %v2542 = vrsqrt.pop %v2018
        %v2543 = vmul.f32 %v2542, %v2018
        %v2544 = vmul.f32 %v2543, %v2542
        %v2545 = vmul.f32 0.5, %v2544
        %v2546 = vsub.f32 1.5, %v2545
        %v2547 = vmul.f32 %v2542, %v2546
        %vm2548 = vweird.f32 %v2018
        %vm2549 = vweird.f32 %v2542
        %vm2550 = vmor %vm2548, %vm2549
        %v2551 = vsel %vm2550, %v2542, %v2547
        %v2552 = vrsqrt.pop %v2019
        %v2553 = vmul.f32 %v2552, %v2019
        %v2554 = vmul.f32 %v2553, %v2552
        %v2555 = vmul.f32 0.5, %v2554
        %v2556 = vsub.f32 1.5, %v2555
        %v2557 = vmul.f32 %v2552, %v2556
        %vm2558 = vweird.f32 %v2019
        %vm2559 = vweird.f32 %v2552
        %vm2560 = vmor %vm2558, %vm2559
        %v2561 = vsel %vm2560, %v2552, %v2557
        %v2562 = vrsqrt.pop %v2020
        %v2563 = vmul.f32 %v2562, %v2020
        %v2564 = vmul.f32 %v2563, %v2562
        %v2565 = vmul.f32 0.5, %v2564
        %v2566 = vsub.f32 1.5, %v2565
        %v2567 = vmul.f32 %v2562, %v2566
        %vm2568 = vweird.f32 %v2020
        %vm2569 = vweird.f32 %v2562
        %vm2570 = vmor %vm2568, %vm2569
        %v2571 = vsel %vm2570, %v2562, %v2567
        %v2572 = vrsqrt.pop %v2021
        %v2573 = vmul.f32 %v2572, %v2021
        %v2574 = vmul.f32 %v2573, %v2572
        %v2575 = vmul.f32 0.5, %v2574
        %v2576 = vsub.f32 1.5, %v2575
        %v2577 = vmul.f32 %v2572, %v2576
        %vm2578 = vweird.f32 %v2021
        %vm2579 = vweird.f32 %v2572
        %vm2580 = vmor %vm2578, %vm2579
        %v2581 = vsel %vm2580, %v2572, %v2577
        %v2582 = vrsqrt.pop %v2022
        %v2583 = vmul.f32 %v2582, %v2022
        %v2584 = vmul.f32 %v2583, %v2582
        %v2585 = vmul.f32 0.5, %v2584
        %v2586 = vsub.f32 1.5, %v2585
        %v2587 = vmul.f32 %v2582, %v2586
        %vm2588 = vweird.f32 %v2022
        %vm2589 = vweird.f32 %v2582
        %vm2590 = vmor %vm2588, %vm2589
        %v2591 = vsel %vm2590, %v2582, %v2587
        %v2592 = vrsqrt.pop %v2023
        %v2593 = vmul.f32 %v2592, %v2023
        %v2594 = vmul.f32 %v2593, %v2592
        %v2595 = vmul.f32 0.5, %v2594
        %v2596 = vsub.f32 1.5, %v2595
        %v2597 = vmul.f32 %v2592, %v2596
        %vm2598 = vweird.f32 %v2023
        %vm2599 = vweird.f32 %v2592
        %vm2600 = vmor %vm2598, %vm2599
        %v2601 = vsel %vm2600, %v2592, %v2597
        %v2602 = vrsqrt.pop %v2024
        %v2603 = vmul.f32 %v2602, %v2024
        %v2604 = vmul.f32 %v2603, %v2602
        %v2605 = vmul.f32 0.5, %v2604
        %v2606 = vsub.f32 1.5, %v2605
        %v2607 = vmul.f32 %v2602, %v2606
        %vm2608 = vweird.f32 %v2024
        %vm2609 = vweird.f32 %v2602
        %vm2610 = vmor %vm2608, %vm2609
        %v2611 = vsel %vm2610, %v2602, %v2607
        %v2612 = vrsqrt.pop %v2025
        %v2613 = vmul.f32 %v2612, %v2025
        %v2614 = vmul.f32 %v2613, %v2612
        %v2615 = vmul.f32 0.5, %v2614
        %v2616 = vsub.f32 1.5, %v2615
        %v2617 = vmul.f32 %v2612, %v2616
        %vm2618 = vweird.f32 %v2025
        %vm2619 = vweird.f32 %v2612
        %vm2620 = vmor %vm2618, %vm2619
        %v2621 = vsel %vm2620, %v2612, %v2617
        %v2622 = vrsqrt.pop %v2026
        %v2623 = vmul.f32 %v2622, %v2026
        %v2624 = vmul.f32 %v2623, %v2622
        %v2625 = vmul.f32 0.5, %v2624
        %v2626 = vsub.f32 1.5, %v2625
        %v2627 = vmul.f32 %v2622, %v2626
        %vm2628 = vweird.f32 %v2026
        %vm2629 = vweird.f32 %v2622
        %vm2630 = vmor %vm2628, %vm2629
        %v2631 = vsel %vm2630, %v2622, %v2627
        %v2632 = vrsqrt.pop %v2027
        %v2633 = vmul.f32 %v2632, %v2027
        %v2634 = vmul.f32 %v2633, %v2632
        %v2635 = vmul.f32 0.5, %v2634
        %v2636 = vsub.f32 1.5, %v2635
        %v2637 = vmul.f32 %v2632, %v2636
        %vm2638 = vweird.f32 %v2027
        %vm2639 = vweird.f32 %v2632
        %vm2640 = vmor %vm2638, %vm2639
        %v2641 = vsel %vm2640, %v2632, %v2637
        %v2642 = vrsqrt.pop %v2028
        %v2643 = vmul.f32 %v2642, %v2028
        %v2644 = vmul.f32 %v2643, %v2642
        %v2645 = vmul.f32 0.5, %v2644
        %v2646 = vsub.f32 1.5, %v2645
        %v2647 = vmul.f32 %v2642, %v2646
        %vm2648 = vweird.f32 %v2028
        %vm2649 = vweird.f32 %v2642
        %vm2650 = vmor %vm2648, %vm2649
        %v2651 = vsel %vm2650, %v2642, %v2647
        %v2652 = vrsqrt.pop %v2029
        %v2653 = vmul.f32 %v2652, %v2029
        %v2654 = vmul.f32 %v2653, %v2652
        %v2655 = vmul.f32 0.5, %v2654
        %v2656 = vsub.f32 1.5, %v2655
        %v2657 = vmul.f32 %v2652, %v2656
        %vm2658 = vweird.f32 %v2029
        %vm2659 = vweird.f32 %v2652
        %vm2660 = vmor %vm2658, %vm2659
        %v2661 = vsel %vm2660, %v2652, %v2657
        %v2662 = vrsqrt.pop %v2030
        %v2663 = vmul.f32 %v2662, %v2030
        %v2664 = vmul.f32 %v2663, %v2662
        %v2665 = vmul.f32 0.5, %v2664
        %v2666 = vsub.f32 1.5, %v2665
        %v2667 = vmul.f32 %v2662, %v2666
        %vm2668 = vweird.f32 %v2030
        %vm2669 = vweird.f32 %v2662
        %vm2670 = vmor %vm2668, %vm2669
        %v2671 = vsel %vm2670, %v2662, %v2667
        %v2672 = vrsqrt.pop %v2031
        %v2673 = vmul.f32 %v2672, %v2031
        %v2674 = vmul.f32 %v2673, %v2672
        %v2675 = vmul.f32 0.5, %v2674
        %v2676 = vsub.f32 1.5, %v2675
        %v2677 = vmul.f32 %v2672, %v2676
        %vm2678 = vweird.f32 %v2031
        %vm2679 = vweird.f32 %v2672
        %vm2680 = vmor %vm2678, %vm2679
        %v2681 = vsel %vm2680, %v2672, %v2677
        %v2682 = vrsqrt.pop %v2032
        %v2683 = vmul.f32 %v2682, %v2032
        %v2684 = vmul.f32 %v2683, %v2682
        %v2685 = vmul.f32 0.5, %v2684
        %v2686 = vsub.f32 1.5, %v2685
        %v2687 = vmul.f32 %v2682, %v2686
        %vm2688 = vweird.f32 %v2032
        %vm2689 = vweird.f32 %v2682
        %vm2690 = vmor %vm2688, %vm2689
        %v2691 = vsel %vm2690, %v2682, %v2687
        %v2692 = vrsqrt.pop %v2033
        %v2693 = vmul.f32 %v2692, %v2033
        %v2694 = vmul.f32 %v2693, %v2692
        %v2695 = vmul.f32 0.5, %v2694
        %v2696 = vsub.f32 1.5, %v2695
        %v2697 = vmul.f32 %v2692, %v2696
        %vm2698 = vweird.f32 %v2033
        %vm2699 = vweird.f32 %v2692
        %vm2700 = vmor %vm2698, %vm2699
        %v2701 = vsel %vm2700, %v2692, %v2697
        %v2702 = vrsqrt.pop %v2034
        %v2703 = vmul.f32 %v2702, %v2034
        %v2704 = vmul.f32 %v2703, %v2702
        %v2705 = vmul.f32 0.5, %v2704
        %v2706 = vsub.f32 1.5, %v2705
        %v2707 = vmul.f32 %v2702, %v2706
        %vm2708 = vweird.f32 %v2034
        %vm2709 = vweird.f32 %v2702
        %vm2710 = vmor %vm2708, %vm2709
        %v2711 = vsel %vm2710, %v2702, %v2707
        %v2712 = vrsqrt.pop %v2035
        %v2713 = vmul.f32 %v2712, %v2035
        %v2714 = vmul.f32 %v2713, %v2712
        %v2715 = vmul.f32 0.5, %v2714
        %v2716 = vsub.f32 1.5, %v2715
        %v2717 = vmul.f32 %v2712, %v2716
        %vm2718 = vweird.f32 %v2035
        %vm2719 = vweird.f32 %v2712
        %vm2720 = vmor %vm2718, %vm2719
        %v2721 = vsel %vm2720, %v2712, %v2717
        %v2722 = vrsqrt.pop %v2036
        %v2723 = vmul.f32 %v2722, %v2036
        %v2724 = vmul.f32 %v2723, %v2722
        %v2725 = vmul.f32 0.5, %v2724
        %v2726 = vsub.f32 1.5, %v2725
        %v2727 = vmul.f32 %v2722, %v2726
        %vm2728 = vweird.f32 %v2036
        %vm2729 = vweird.f32 %v2722
        %vm2730 = vmor %vm2728, %vm2729
        %v2731 = vsel %vm2730, %v2722, %v2727
        %v2732 = vrsqrt.pop %v2037
        %v2733 = vmul.f32 %v2732, %v2037
        %v2734 = vmul.f32 %v2733, %v2732
        %v2735 = vmul.f32 0.5, %v2734
        %v2736 = vsub.f32 1.5, %v2735
        %v2737 = vmul.f32 %v2732, %v2736
        %vm2738 = vweird.f32 %v2037
        %vm2739 = vweird.f32 %v2732
        %vm2740 = vmor %vm2738, %vm2739
        %v2741 = vsel %vm2740, %v2732, %v2737
        %v2742 = vrsqrt.pop %v2038
        %v2743 = vmul.f32 %v2742, %v2038
        %v2744 = vmul.f32 %v2743, %v2742
        %v2745 = vmul.f32 0.5, %v2744
        %v2746 = vsub.f32 1.5, %v2745
        %v2747 = vmul.f32 %v2742, %v2746
        %vm2748 = vweird.f32 %v2038
        %vm2749 = vweird.f32 %v2742
        %vm2750 = vmor %vm2748, %vm2749
        %v2751 = vsel %vm2750, %v2742, %v2747
        %v2752 = vrsqrt.pop %v2039
        %v2753 = vmul.f32 %v2752, %v2039
        %v2754 = vmul.f32 %v2753, %v2752
        %v2755 = vmul.f32 0.5, %v2754
        %v2756 = vsub.f32 1.5, %v2755
        %v2757 = vmul.f32 %v2752, %v2756
        %vm2758 = vweird.f32 %v2039
        %vm2759 = vweird.f32 %v2752
        %vm2760 = vmor %vm2758, %vm2759
        %v2761 = vsel %vm2760, %v2752, %v2757
        %v2762 = vrsqrt.pop %v2040
        %v2763 = vmul.f32 %v2762, %v2040
        %v2764 = vmul.f32 %v2763, %v2762
        %v2765 = vmul.f32 0.5, %v2764
        %v2766 = vsub.f32 1.5, %v2765
        %v2767 = vmul.f32 %v2762, %v2766
        %vm2768 = vweird.f32 %v2040
        %vm2769 = vweird.f32 %v2762
        %vm2770 = vmor %vm2768, %vm2769
        %v2771 = vsel %vm2770, %v2762, %v2767
        %v2772 = vrsqrt.pop %v2041
        %v2773 = vmul.f32 %v2772, %v2041
        %v2774 = vmul.f32 %v2773, %v2772
        %v2775 = vmul.f32 0.5, %v2774
        %v2776 = vsub.f32 1.5, %v2775
        %v2777 = vmul.f32 %v2772, %v2776
        %vm2778 = vweird.f32 %v2041
        %vm2779 = vweird.f32 %v2772
        %vm2780 = vmor %vm2778, %vm2779
        %v2781 = vsel %vm2780, %v2772, %v2777
        %v2782 = vrsqrt.pop %v2042
        %v2783 = vmul.f32 %v2782, %v2042
        %v2784 = vmul.f32 %v2783, %v2782
        %v2785 = vmul.f32 0.5, %v2784
        %v2786 = vsub.f32 1.5, %v2785
        %v2787 = vmul.f32 %v2782, %v2786
        %vm2788 = vweird.f32 %v2042
        %vm2789 = vweird.f32 %v2782
        %vm2790 = vmor %vm2788, %vm2789
        %v2791 = vsel %vm2790, %v2782, %v2787
        %v2792 = vrsqrt.pop %v2043
        %v2793 = vmul.f32 %v2792, %v2043
        %v2794 = vmul.f32 %v2793, %v2792
        %v2795 = vmul.f32 0.5, %v2794
        %v2796 = vsub.f32 1.5, %v2795
        %v2797 = vmul.f32 %v2792, %v2796
        %vm2798 = vweird.f32 %v2043
        %vm2799 = vweird.f32 %v2792
        %vm2800 = vmor %vm2798, %vm2799
        %v2801 = vsel %vm2800, %v2792, %v2797
        %v2802 = vrsqrt.pop %v2044
        %v2803 = vmul.f32 %v2802, %v2044
        %v2804 = vmul.f32 %v2803, %v2802
        %v2805 = vmul.f32 0.5, %v2804
        %v2806 = vsub.f32 1.5, %v2805
        %v2807 = vmul.f32 %v2802, %v2806
        %vm2808 = vweird.f32 %v2044
        %vm2809 = vweird.f32 %v2802
        %vm2810 = vmor %vm2808, %vm2809
        %v2811 = vsel %vm2810, %v2802, %v2807
        %v2812 = vrsqrt.pop %v2045
        %v2813 = vmul.f32 %v2812, %v2045
        %v2814 = vmul.f32 %v2813, %v2812
        %v2815 = vmul.f32 0.5, %v2814
        %v2816 = vsub.f32 1.5, %v2815
        %v2817 = vmul.f32 %v2812, %v2816
        %vm2818 = vweird.f32 %v2045
        %vm2819 = vweird.f32 %v2812
        %vm2820 = vmor %vm2818, %vm2819
        %v2821 = vsel %vm2820, %v2812, %v2817
        %v2822 = vrsqrt.pop %v2046
        %v2823 = vmul.f32 %v2822, %v2046
        %v2824 = vmul.f32 %v2823, %v2822
        %v2825 = vmul.f32 0.5, %v2824
        %v2826 = vsub.f32 1.5, %v2825
        %v2827 = vmul.f32 %v2822, %v2826
        %vm2828 = vweird.f32 %v2046
        %vm2829 = vweird.f32 %v2822
        %vm2830 = vmor %vm2828, %vm2829
        %v2831 = vsel %vm2830, %v2822, %v2827
        %v2832 = vrsqrt.pop %v2047
        %v2833 = vmul.f32 %v2832, %v2047
        %v2834 = vmul.f32 %v2833, %v2832
        %v2835 = vmul.f32 0.5, %v2834
        %v2836 = vsub.f32 1.5, %v2835
        %v2837 = vmul.f32 %v2832, %v2836
        %vm2838 = vweird.f32 %v2047
        %vm2839 = vweird.f32 %v2832
        %vm2840 = vmor %vm2838, %vm2839
        %v2841 = vsel %vm2840, %v2832, %v2837
        %v2842 = vrsqrt.pop %v2048
        %v2843 = vmul.f32 %v2842, %v2048
        %v2844 = vmul.f32 %v2843, %v2842
        %v2845 = vmul.f32 0.5, %v2844
        %v2846 = vsub.f32 1.5, %v2845
        %v2847 = vmul.f32 %v2842, %v2846
        %vm2848 = vweird.f32 %v2048
        %vm2849 = vweird.f32 %v2842
        %vm2850 = vmor %vm2848, %vm2849
        %v2851 = vsel %vm2850, %v2842, %v2847
        %v2852 = vrsqrt.pop %v2049
        %v2853 = vmul.f32 %v2852, %v2049
        %v2854 = vmul.f32 %v2853, %v2852
        %v2855 = vmul.f32 0.5, %v2854
        %v2856 = vsub.f32 1.5, %v2855
        %v2857 = vmul.f32 %v2852, %v2856
        %vm2858 = vweird.f32 %v2049
        %vm2859 = vweird.f32 %v2852
        %vm2860 = vmor %vm2858, %vm2859
        %v2861 = vsel %vm2860, %v2852, %v2857
        %v2862 = vrsqrt.pop %v2050
        %v2863 = vmul.f32 %v2862, %v2050
        %v2864 = vmul.f32 %v2863, %v2862
        %v2865 = vmul.f32 0.5, %v2864
        %v2866 = vsub.f32 1.5, %v2865
        %v2867 = vmul.f32 %v2862, %v2866
        %vm2868 = vweird.f32 %v2050
        %vm2869 = vweird.f32 %v2862
        %vm2870 = vmor %vm2868, %vm2869
        %v2871 = vsel %vm2870, %v2862, %v2867
        %v2872 = vrsqrt.pop %v2051
        %v2873 = vmul.f32 %v2872, %v2051
        %v2874 = vmul.f32 %v2873, %v2872
        %v2875 = vmul.f32 0.5, %v2874
        %v2876 = vsub.f32 1.5, %v2875
        %v2877 = vmul.f32 %v2872, %v2876
        %vm2878 = vweird.f32 %v2051
        %vm2879 = vweird.f32 %v2872
        %vm2880 = vmor %vm2878, %vm2879
        %v2881 = vsel %vm2880, %v2872, %v2877
        %v2882 = vrsqrt.pop %v2052
        %v2883 = vmul.f32 %v2882, %v2052
        %v2884 = vmul.f32 %v2883, %v2882
        %v2885 = vmul.f32 0.5, %v2884
        %v2886 = vsub.f32 1.5, %v2885
        %v2887 = vmul.f32 %v2882, %v2886
        %vm2888 = vweird.f32 %v2052
        %vm2889 = vweird.f32 %v2882
        %vm2890 = vmor %vm2888, %vm2889
        %v2891 = vsel %vm2890, %v2882, %v2887
        %v2892 = vrsqrt.pop %v2053
        %v2893 = vmul.f32 %v2892, %v2053
        %v2894 = vmul.f32 %v2893, %v2892
        %v2895 = vmul.f32 0.5, %v2894
        %v2896 = vsub.f32 1.5, %v2895
        %v2897 = vmul.f32 %v2892, %v2896
        %vm2898 = vweird.f32 %v2053
        %vm2899 = vweird.f32 %v2892
        %vm2900 = vmor %vm2898, %vm2899
        %v2901 = vsel %vm2900, %v2892, %v2897
        %v2902 = vrsqrt.pop %v2054
        %v2903 = vmul.f32 %v2902, %v2054
        %v2904 = vmul.f32 %v2903, %v2902
        %v2905 = vmul.f32 0.5, %v2904
        %v2906 = vsub.f32 1.5, %v2905
        %v2907 = vmul.f32 %v2902, %v2906
        %vm2908 = vweird.f32 %v2054
        %vm2909 = vweird.f32 %v2902
        %vm2910 = vmor %vm2908, %vm2909
        %v2911 = vsel %vm2910, %v2902, %v2907
        %v2912 = vrsqrt.pop %v2055
        %v2913 = vmul.f32 %v2912, %v2055
        %v2914 = vmul.f32 %v2913, %v2912
        %v2915 = vmul.f32 0.5, %v2914
        %v2916 = vsub.f32 1.5, %v2915
        %v2917 = vmul.f32 %v2912, %v2916
        %vm2918 = vweird.f32 %v2055
        %vm2919 = vweird.f32 %v2912
        %vm2920 = vmor %vm2918, %vm2919
        %v2921 = vsel %vm2920, %v2912, %v2917
        %v2922 = vrsqrt.pop %v2056
        %v2923 = vmul.f32 %v2922, %v2056
        %v2924 = vmul.f32 %v2923, %v2922
        %v2925 = vmul.f32 0.5, %v2924
        %v2926 = vsub.f32 1.5, %v2925
        %v2927 = vmul.f32 %v2922, %v2926
        %vm2928 = vweird.f32 %v2056
        %vm2929 = vweird.f32 %v2922
        %vm2930 = vmor %vm2928, %vm2929
        %v2931 = vsel %vm2930, %v2922, %v2927
        %v2932 = vrsqrt.pop %v2057
        %v2933 = vmul.f32 %v2932, %v2057
        %v2934 = vmul.f32 %v2933, %v2932
        %v2935 = vmul.f32 0.5, %v2934
        %v2936 = vsub.f32 1.5, %v2935
        %v2937 = vmul.f32 %v2932, %v2936
        %vm2938 = vweird.f32 %v2057
        %vm2939 = vweird.f32 %v2932
        %vm2940 = vmor %vm2938, %vm2939
        %v2941 = vsel %vm2940, %v2932, %v2937
        %v2942 = vrsqrt.pop %v2058
        %v2943 = vmul.f32 %v2942, %v2058
        %v2944 = vmul.f32 %v2943, %v2942
        %v2945 = vmul.f32 0.5, %v2944
        %v2946 = vsub.f32 1.5, %v2945
        %v2947 = vmul.f32 %v2942, %v2946
        %vm2948 = vweird.f32 %v2058
        %vm2949 = vweird.f32 %v2942
        %vm2950 = vmor %vm2948, %vm2949
        %v2951 = vsel %vm2950, %v2942, %v2947
        %v2952 = vrsqrt.pop %v2059
        %v2953 = vmul.f32 %v2952, %v2059
        %v2954 = vmul.f32 %v2953, %v2952
        %v2955 = vmul.f32 0.5, %v2954
        %v2956 = vsub.f32 1.5, %v2955
        %v2957 = vmul.f32 %v2952, %v2956
        %vm2958 = vweird.f32 %v2059
        %vm2959 = vweird.f32 %v2952
        %vm2960 = vmor %vm2958, %vm2959
        %v2961 = vsel %vm2960, %v2952, %v2957
        %v2962 = vrsqrt.pop %v2060
        %v2963 = vmul.f32 %v2962, %v2060
        %v2964 = vmul.f32 %v2963, %v2962
        %v2965 = vmul.f32 0.5, %v2964
        %v2966 = vsub.f32 1.5, %v2965
        %v2967 = vmul.f32 %v2962, %v2966
        %vm2968 = vweird.f32 %v2060
        %vm2969 = vweird.f32 %v2962
        %vm2970 = vmor %vm2968, %vm2969
        %v2971 = vsel %vm2970, %v2962, %v2967
        %v2972 = vrsqrt.pop %v2061
        %v2973 = vmul.f32 %v2972, %v2061
        %v2974 = vmul.f32 %v2973, %v2972
        %v2975 = vmul.f32 0.5, %v2974
        %v2976 = vsub.f32 1.5, %v2975
        %v2977 = vmul.f32 %v2972, %v2976
        %vm2978 = vweird.f32 %v2061
        %vm2979 = vweird.f32 %v2972
        %vm2980 = vmor %vm2978, %vm2979
        %v2981 = vsel %vm2980, %v2972, %v2977
        %v2982 = vrsqrt.pop %v2062
        %v2983 = vmul.f32 %v2982, %v2062
        %v2984 = vmul.f32 %v2983, %v2982
        %v2985 = vmul.f32 0.5, %v2984
        %v2986 = vsub.f32 1.5, %v2985
        %v2987 = vmul.f32 %v2982, %v2986
        %vm2988 = vweird.f32 %v2062
        %vm2989 = vweird.f32 %v2982
        %vm2990 = vmor %vm2988, %vm2989
        %v2991 = vsel %vm2990, %v2982, %v2987
        %v2992 = vrsqrt.pop %v2063
        %v2993 = vmul.f32 %v2992, %v2063
        %v2994 = vmul.f32 %v2993, %v2992
        %v2995 = vmul.f32 0.5, %v2994
        %v2996 = vsub.f32 1.5, %v2995
        %v2997 = vmul.f32 %v2992, %v2996
        %vm2998 = vweird.f32 %v2063
        %vm2999 = vweird.f32 %v2992
        %vm3000 = vmor %vm2998, %vm2999
        %v3001 = vsel %vm3000, %v2992, %v2997
        %v3002 = vrsqrt.pop %v2064
        %v3003 = vmul.f32 %v3002, %v2064
        %v3004 = vmul.f32 %v3003, %v3002
        %v3005 = vmul.f32 0.5, %v3004
        %v3006 = vsub.f32 1.5, %v3005
        %v3007 = vmul.f32 %v3002, %v3006
        %vm3008 = vweird.f32 %v2064
        %vm3009 = vweird.f32 %v3002
        %vm3010 = vmor %vm3008, %vm3009
        %v3011 = vsel %vm3010, %v3002, %v3007
        %v3012 = vrsqrt.pop %v2065
        %v3013 = vmul.f32 %v3012, %v2065
        %v3014 = vmul.f32 %v3013, %v3012
        %v3015 = vmul.f32 0.5, %v3014
        %v3016 = vsub.f32 1.5, %v3015
        %v3017 = vmul.f32 %v3012, %v3016
        %vm3018 = vweird.f32 %v2065
        %vm3019 = vweird.f32 %v3012
        %vm3020 = vmor %vm3018, %vm3019
        %v3021 = vsel %vm3020, %v3012, %v3017
        %v3022 = vrsqrt.pop %v2066
        %v3023 = vmul.f32 %v3022, %v2066
        %v3024 = vmul.f32 %v3023, %v3022
        %v3025 = vmul.f32 0.5, %v3024
        %v3026 = vsub.f32 1.5, %v3025
        %v3027 = vmul.f32 %v3022, %v3026
        %vm3028 = vweird.f32 %v2066
        %vm3029 = vweird.f32 %v3022
        %vm3030 = vmor %vm3028, %vm3029
        %v3031 = vsel %vm3030, %v3022, %v3027
        %v3032 = vrsqrt.pop %v2067
        %v3033 = vmul.f32 %v3032, %v2067
        %v3034 = vmul.f32 %v3033, %v3032
        %v3035 = vmul.f32 0.5, %v3034
        %v3036 = vsub.f32 1.5, %v3035
        %v3037 = vmul.f32 %v3032, %v3036
        %vm3038 = vweird.f32 %v2067
        %vm3039 = vweird.f32 %v3032
        %vm3040 = vmor %vm3038, %vm3039
        %v3041 = vsel %vm3040, %v3032, %v3037
        %v3042 = vrsqrt.pop %v2068
        %v3043 = vmul.f32 %v3042, %v2068
        %v3044 = vmul.f32 %v3043, %v3042
        %v3045 = vmul.f32 0.5, %v3044
        %v3046 = vsub.f32 1.5, %v3045
        %v3047 = vmul.f32 %v3042, %v3046
        %vm3048 = vweird.f32 %v2068
        %vm3049 = vweird.f32 %v3042
        %vm3050 = vmor %vm3048, %vm3049
        %v3051 = vsel %vm3050, %v3042, %v3047
        %v3052 = vrsqrt.pop %v2069
        %v3053 = vmul.f32 %v3052, %v2069
        %v3054 = vmul.f32 %v3053, %v3052
        %v3055 = vmul.f32 0.5, %v3054
        %v3056 = vsub.f32 1.5, %v3055
        %v3057 = vmul.f32 %v3052, %v3056
        %vm3058 = vweird.f32 %v2069
        %vm3059 = vweird.f32 %v3052
        %vm3060 = vmor %vm3058, %vm3059
        %v3061 = vsel %vm3060, %v3052, %v3057
        %v3062 = vrsqrt.pop %v2070
        %v3063 = vmul.f32 %v3062, %v2070
        %v3064 = vmul.f32 %v3063, %v3062
        %v3065 = vmul.f32 0.5, %v3064
        %v3066 = vsub.f32 1.5, %v3065
        %v3067 = vmul.f32 %v3062, %v3066
        %vm3068 = vweird.f32 %v2070
        %vm3069 = vweird.f32 %v3062
        %vm3070 = vmor %vm3068, %vm3069
        %v3071 = vsel %vm3070, %v3062, %v3067
        %v3072 = vrsqrt.pop %v2071
        %v3073 = vmul.f32 %v3072, %v2071
        %v3074 = vmul.f32 %v3073, %v3072
        %v3075 = vmul.f32 0.5, %v3074
        %v3076 = vsub.f32 1.5, %v3075
        %v3077 = vmul.f32 %v3072, %v3076
        %vm3078 = vweird.f32 %v2071
        %vm3079 = vweird.f32 %v3072
        %vm3080 = vmor %vm3078, %vm3079
        %v3081 = vsel %vm3080, %v3072, %v3077
        %v3082 = vrsqrt.pop %v2072
        %v3083 = vmul.f32 %v3082, %v2072
        %v3084 = vmul.f32 %v3083, %v3082
        %v3085 = vmul.f32 0.5, %v3084
        %v3086 = vsub.f32 1.5, %v3085
        %v3087 = vmul.f32 %v3082, %v3086
        %vm3088 = vweird.f32 %v2072
        %vm3089 = vweird.f32 %v3082
        %vm3090 = vmor %vm3088, %vm3089
        %v3091 = vsel %vm3090, %v3082, %v3087
        %v3092 = vrsqrt.pop %v2073
        %v3093 = vmul.f32 %v3092, %v2073
        %v3094 = vmul.f32 %v3093, %v3092
        %v3095 = vmul.f32 0.5, %v3094
        %v3096 = vsub.f32 1.5, %v3095
        %v3097 = vmul.f32 %v3092, %v3096
        %vm3098 = vweird.f32 %v2073
        %vm3099 = vweird.f32 %v3092
        %vm3100 = vmor %vm3098, %vm3099
        %v3101 = vsel %vm3100, %v3092, %v3097
        %v3102 = vrsqrt.pop %v2074
        %v3103 = vmul.f32 %v3102, %v2074
        %v3104 = vmul.f32 %v3103, %v3102
        %v3105 = vmul.f32 0.5, %v3104
        %v3106 = vsub.f32 1.5, %v3105
        %v3107 = vmul.f32 %v3102, %v3106
        %vm3108 = vweird.f32 %v2074
        %vm3109 = vweird.f32 %v3102
        %vm3110 = vmor %vm3108, %vm3109
        %v3111 = vsel %vm3110, %v3102, %v3107
        %v3112 = vrsqrt.pop %v2075
        %v3113 = vmul.f32 %v3112, %v2075
        %v3114 = vmul.f32 %v3113, %v3112
        %v3115 = vmul.f32 0.5, %v3114
        %v3116 = vsub.f32 1.5, %v3115
        %v3117 = vmul.f32 %v3112, %v3116
        %vm3118 = vweird.f32 %v2075
        %vm3119 = vweird.f32 %v3112
        %vm3120 = vmor %vm3118, %vm3119
        %v3121 = vsel %vm3120, %v3112, %v3117
        %v3122 = vrsqrt.pop %v2076
        %v3123 = vmul.f32 %v3122, %v2076
        %v3124 = vmul.f32 %v3123, %v3122
        %v3125 = vmul.f32 0.5, %v3124
        %v3126 = vsub.f32 1.5, %v3125
        %v3127 = vmul.f32 %v3122, %v3126
        %vm3128 = vweird.f32 %v2076
        %vm3129 = vweird.f32 %v3122
        %vm3130 = vmor %vm3128, %vm3129
        %v3131 = vsel %vm3130, %v3122, %v3127
        %v3132 = vrsqrt.pop %v2077
        %v3133 = vmul.f32 %v3132, %v2077
        %v3134 = vmul.f32 %v3133, %v3132
        %v3135 = vmul.f32 0.5, %v3134
        %v3136 = vsub.f32 1.5, %v3135
        %v3137 = vmul.f32 %v3132, %v3136
        %vm3138 = vweird.f32 %v2077
        %vm3139 = vweird.f32 %v3132
        %vm3140 = vmor %vm3138, %vm3139
        %v3141 = vsel %vm3140, %v3132, %v3137
        %v3142 = vrsqrt.pop %v2078
        %v3143 = vmul.f32 %v3142, %v2078
        %v3144 = vmul.f32 %v3143, %v3142
        %v3145 = vmul.f32 0.5, %v3144
        %v3146 = vsub.f32 1.5, %v3145
        %v3147 = vmul.f32 %v3142, %v3146
        %vm3148 = vweird.f32 %v2078
        %vm3149 = vweird.f32 %v3142
        %vm3150 = vmor %vm3148, %vm3149
        %v3151 = vsel %vm3150, %v3142, %v3147
        %v3152 = vrsqrt.pop %v2079
        %v3153 = vmul.f32 %v3152, %v2079
        %v3154 = vmul.f32 %v3153, %v3152
        %v3155 = vmul.f32 0.5, %v3154
        %v3156 = vsub.f32 1.5, %v3155
        %v3157 = vmul.f32 %v3152, %v3156
        %vm3158 = vweird.f32 %v2079
        %vm3159 = vweird.f32 %v3152
        %vm3160 = vmor %vm3158, %vm3159
        %v3161 = vsel %vm3160, %v3152, %v3157
        %v3162 = vrsqrt.pop %v2080
        %v3163 = vmul.f32 %v3162, %v2080
        %v3164 = vmul.f32 %v3163, %v3162
        %v3165 = vmul.f32 0.5, %v3164
        %v3166 = vsub.f32 1.5, %v3165
        %v3167 = vmul.f32 %v3162, %v3166
        %vm3168 = vweird.f32 %v2080
        %vm3169 = vweird.f32 %v3162
        %vm3170 = vmor %vm3168, %vm3169
        %v3171 = vsel %vm3170, %v3162, %v3167
        %v3172 = vrsqrt.pop %v2081
        %v3173 = vmul.f32 %v3172, %v2081
        %v3174 = vmul.f32 %v3173, %v3172
        %v3175 = vmul.f32 0.5, %v3174
        %v3176 = vsub.f32 1.5, %v3175
        %v3177 = vmul.f32 %v3172, %v3176
        %vm3178 = vweird.f32 %v2081
        %vm3179 = vweird.f32 %v3172
        %vm3180 = vmor %vm3178, %vm3179
        %v3181 = vsel %vm3180, %v3172, %v3177
        %v3182 = vrsqrt.pop %v2082
        %v3183 = vmul.f32 %v3182, %v2082
        %v3184 = vmul.f32 %v3183, %v3182
        %v3185 = vmul.f32 0.5, %v3184
        %v3186 = vsub.f32 1.5, %v3185
        %v3187 = vmul.f32 %v3182, %v3186
        %vm3188 = vweird.f32 %v2082
        %vm3189 = vweird.f32 %v3182
        %vm3190 = vmor %vm3188, %vm3189
        %v3191 = vsel %vm3190, %v3182, %v3187
        %v3192 = vrsqrt.pop %v2083
        %v3193 = vmul.f32 %v3192, %v2083
        %v3194 = vmul.f32 %v3193, %v3192
        %v3195 = vmul.f32 0.5, %v3194
        %v3196 = vsub.f32 1.5, %v3195
        %v3197 = vmul.f32 %v3192, %v3196
        %vm3198 = vweird.f32 %v2083
        %vm3199 = vweird.f32 %v3192
        %vm3200 = vmor %vm3198, %vm3199
        %v3201 = vsel %vm3200, %v3192, %v3197
        %v3202 = vrsqrt.pop %v2084
        %v3203 = vmul.f32 %v3202, %v2084
        %v3204 = vmul.f32 %v3203, %v3202
        %v3205 = vmul.f32 0.5, %v3204
        %v3206 = vsub.f32 1.5, %v3205
        %v3207 = vmul.f32 %v3202, %v3206
        %vm3208 = vweird.f32 %v2084
        %vm3209 = vweird.f32 %v3202
        %vm3210 = vmor %vm3208, %vm3209
        %v3211 = vsel %vm3210, %v3202, %v3207
        %v3212 = vrsqrt.pop %v2085
        %v3213 = vmul.f32 %v3212, %v2085
        %v3214 = vmul.f32 %v3213, %v3212
        %v3215 = vmul.f32 0.5, %v3214
        %v3216 = vsub.f32 1.5, %v3215
        %v3217 = vmul.f32 %v3212, %v3216
        %vm3218 = vweird.f32 %v2085
        %vm3219 = vweird.f32 %v3212
        %vm3220 = vmor %vm3218, %vm3219
        %v3221 = vsel %vm3220, %v3212, %v3217
        %v3222 = vrsqrt.pop %v2086
        %v3223 = vmul.f32 %v3222, %v2086
        %v3224 = vmul.f32 %v3223, %v3222
        %v3225 = vmul.f32 0.5, %v3224
        %v3226 = vsub.f32 1.5, %v3225
        %v3227 = vmul.f32 %v3222, %v3226
        %vm3228 = vweird.f32 %v2086
        %vm3229 = vweird.f32 %v3222
        %vm3230 = vmor %vm3228, %vm3229
        %v3231 = vsel %vm3230, %v3222, %v3227
        %v3232 = vrsqrt.pop %v2087
        %v3233 = vmul.f32 %v3232, %v2087
        %v3234 = vmul.f32 %v3233, %v3232
        %v3235 = vmul.f32 0.5, %v3234
        %v3236 = vsub.f32 1.5, %v3235
        %v3237 = vmul.f32 %v3232, %v3236
        %vm3238 = vweird.f32 %v2087
        %vm3239 = vweird.f32 %v3232
        %vm3240 = vmor %vm3238, %vm3239
        %v3241 = vsel %vm3240, %v3232, %v3237
        %v3242 = vrsqrt.pop %v2088
        %v3243 = vmul.f32 %v3242, %v2088
        %v3244 = vmul.f32 %v3243, %v3242
        %v3245 = vmul.f32 0.5, %v3244
        %v3246 = vsub.f32 1.5, %v3245
        %v3247 = vmul.f32 %v3242, %v3246
        %vm3248 = vweird.f32 %v2088
        %vm3249 = vweird.f32 %v3242
        %vm3250 = vmor %vm3248, %vm3249
        %v3251 = vsel %vm3250, %v3242, %v3247
        %v3252 = vrsqrt.pop %v2089
        %v3253 = vmul.f32 %v3252, %v2089
        %v3254 = vmul.f32 %v3253, %v3252
        %v3255 = vmul.f32 0.5, %v3254
        %v3256 = vsub.f32 1.5, %v3255
        %v3257 = vmul.f32 %v3252, %v3256
        %vm3258 = vweird.f32 %v2089
        %vm3259 = vweird.f32 %v3252
        %vm3260 = vmor %vm3258, %vm3259
        %v3261 = vsel %vm3260, %v3252, %v3257
        %v3262 = vrsqrt.pop %v2090
        %v3263 = vmul.f32 %v3262, %v2090
        %v3264 = vmul.f32 %v3263, %v3262
        %v3265 = vmul.f32 0.5, %v3264
        %v3266 = vsub.f32 1.5, %v3265
        %v3267 = vmul.f32 %v3262, %v3266
        %vm3268 = vweird.f32 %v2090
        %vm3269 = vweird.f32 %v3262
        %vm3270 = vmor %vm3268, %vm3269
        %v3271 = vsel %vm3270, %v3262, %v3267
        %v3272 = vrsqrt.pop %v2091
        %v3273 = vmul.f32 %v3272, %v2091
        %v3274 = vmul.f32 %v3273, %v3272
        %v3275 = vmul.f32 0.5, %v3274
        %v3276 = vsub.f32 1.5, %v3275
        %v3277 = vmul.f32 %v3272, %v3276
        %vm3278 = vweird.f32 %v2091
        %vm3279 = vweird.f32 %v3272
        %vm3280 = vmor %vm3278, %vm3279
        %v3281 = vsel %vm3280, %v3272, %v3277
        %v3282 = vrsqrt.pop %v2092
        %v3283 = vmul.f32 %v3282, %v2092
        %v3284 = vmul.f32 %v3283, %v3282
        %v3285 = vmul.f32 0.5, %v3284
        %v3286 = vsub.f32 1.5, %v3285
        %v3287 = vmul.f32 %v3282, %v3286
        %vm3288 = vweird.f32 %v2092
        %vm3289 = vweird.f32 %v3282
        %vm3290 = vmor %vm3288, %vm3289
        %v3291 = vsel %vm3290, %v3282, %v3287
        %v3292 = vrsqrt.pop %v2093
        %v3293 = vmul.f32 %v3292, %v2093
        %v3294 = vmul.f32 %v3293, %v3292
        %v3295 = vmul.f32 0.5, %v3294
        %v3296 = vsub.f32 1.5, %v3295
        %v3297 = vmul.f32 %v3292, %v3296
        %vm3298 = vweird.f32 %v2093
        %vm3299 = vweird.f32 %v3292
        %vm3300 = vmor %vm3298, %vm3299
        %v3301 = vsel %vm3300, %v3292, %v3297
        %v3302 = vrsqrt.pop %v2094
        %v3303 = vmul.f32 %v3302, %v2094
        %v3304 = vmul.f32 %v3303, %v3302
        %v3305 = vmul.f32 0.5, %v3304
        %v3306 = vsub.f32 1.5, %v3305
        %v3307 = vmul.f32 %v3302, %v3306
        %vm3308 = vweird.f32 %v2094
        %vm3309 = vweird.f32 %v3302
        %vm3310 = vmor %vm3308, %vm3309
        %v3311 = vsel %vm3310, %v3302, %v3307
        %v3312 = vrsqrt.pop %v2095
        %v3313 = vmul.f32 %v3312, %v2095
        %v3314 = vmul.f32 %v3313, %v3312
        %v3315 = vmul.f32 0.5, %v3314
        %v3316 = vsub.f32 1.5, %v3315
        %v3317 = vmul.f32 %v3312, %v3316
        %vm3318 = vweird.f32 %v2095
        %vm3319 = vweird.f32 %v3312
        %vm3320 = vmor %vm3318, %vm3319
        %v3321 = vsel %vm3320, %v3312, %v3317
        %v3322 = vrsqrt.pop %v2096
        %v3323 = vmul.f32 %v3322, %v2096
        %v3324 = vmul.f32 %v3323, %v3322
        %v3325 = vmul.f32 0.5, %v3324
        %v3326 = vsub.f32 1.5, %v3325
        %v3327 = vmul.f32 %v3322, %v3326
        %vm3328 = vweird.f32 %v2096
        %vm3329 = vweird.f32 %v3322
        %vm3330 = vmor %vm3328, %vm3329
        %v3331 = vsel %vm3330, %v3322, %v3327
        %v3332 = vrsqrt.pop %v2097
        %v3333 = vmul.f32 %v3332, %v2097
        %v3334 = vmul.f32 %v3333, %v3332
        %v3335 = vmul.f32 0.5, %v3334
        %v3336 = vsub.f32 1.5, %v3335
        %v3337 = vmul.f32 %v3332, %v3336
        %vm3338 = vweird.f32 %v2097
        %vm3339 = vweird.f32 %v3332
        %vm3340 = vmor %vm3338, %vm3339
        %v3341 = vsel %vm3340, %v3332, %v3337
        %v3342 = vrsqrt.pop %v2098
        %v3343 = vmul.f32 %v3342, %v2098
        %v3344 = vmul.f32 %v3343, %v3342
        %v3345 = vmul.f32 0.5, %v3344
        %v3346 = vsub.f32 1.5, %v3345
        %v3347 = vmul.f32 %v3342, %v3346
        %vm3348 = vweird.f32 %v2098
        %vm3349 = vweird.f32 %v3342
        %vm3350 = vmor %vm3348, %vm3349
        %v3351 = vsel %vm3350, %v3342, %v3347
        %v3352 = vrsqrt.pop %v2099
        %v3353 = vmul.f32 %v3352, %v2099
        %v3354 = vmul.f32 %v3353, %v3352
        %v3355 = vmul.f32 0.5, %v3354
        %v3356 = vsub.f32 1.5, %v3355
        %v3357 = vmul.f32 %v3352, %v3356
        %vm3358 = vweird.f32 %v2099
        %vm3359 = vweird.f32 %v3352
        %vm3360 = vmor %vm3358, %vm3359
        %v3361 = vsel %vm3360, %v3352, %v3357
        %v3362 = vrsqrt.pop %v2100
        %v3363 = vmul.f32 %v3362, %v2100
        %v3364 = vmul.f32 %v3363, %v3362
        %v3365 = vmul.f32 0.5, %v3364
        %v3366 = vsub.f32 1.5, %v3365
        %v3367 = vmul.f32 %v3362, %v3366
        %vm3368 = vweird.f32 %v2100
        %vm3369 = vweird.f32 %v3362
        %vm3370 = vmor %vm3368, %vm3369
        %v3371 = vsel %vm3370, %v3362, %v3367
        %v3372 = vrsqrt.pop %v2101
        %v3373 = vmul.f32 %v3372, %v2101
        %v3374 = vmul.f32 %v3373, %v3372
        %v3375 = vmul.f32 0.5, %v3374
        %v3376 = vsub.f32 1.5, %v3375
        %v3377 = vmul.f32 %v3372, %v3376
        %vm3378 = vweird.f32 %v2101
        %vm3379 = vweird.f32 %v3372
        %vm3380 = vmor %vm3378, %vm3379
        %v3381 = vsel %vm3380, %v3372, %v3377
        %v3382 = vmul.f32 %v182, %v2111
        %v3383 = vmul.f32 %v183, %v2111
        %v3384 = vmul.f32 %v184, %v2111
        %v3385 = vmul.f32 %v185, %v2111
        %v3386 = vmul.f32 %v186, %v2121
        %v3387 = vmul.f32 %v187, %v2121
        %v3388 = vmul.f32 %v188, %v2121
        %v3389 = vmul.f32 %v189, %v2121
        %v3390 = vmul.f32 %v190, %v2131
        %v3391 = vmul.f32 %v191, %v2131
        %v3392 = vmul.f32 %v192, %v2131
        %v3393 = vmul.f32 %v193, %v2131
        %v3394 = vmul.f32 %v194, %v2141
        %v3395 = vmul.f32 %v195, %v2141
        %v3396 = vmul.f32 %v196, %v2141
        %v3397 = vmul.f32 %v197, %v2141
        %v3398 = vmul.f32 %v198, %v2151
        %v3399 = vmul.f32 %v199, %v2151
        %v3400 = vmul.f32 %v200, %v2151
        %v3401 = vmul.f32 %v201, %v2151
        %v3402 = vmul.f32 %v202, %v2161
        %v3403 = vmul.f32 %v203, %v2161
        %v3404 = vmul.f32 %v204, %v2161
        %v3405 = vmul.f32 %v205, %v2161
        %v3406 = vmul.f32 %v206, %v2171
        %v3407 = vmul.f32 %v207, %v2171
        %v3408 = vmul.f32 %v208, %v2171
        %v3409 = vmul.f32 %v209, %v2171
        %v3410 = vmul.f32 %v210, %v2181
        %v3411 = vmul.f32 %v211, %v2181
        %v3412 = vmul.f32 %v212, %v2181
        %v3413 = vmul.f32 %v213, %v2181
        %v3414 = vmul.f32 %v214, %v2191
        %v3415 = vmul.f32 %v215, %v2191
        %v3416 = vmul.f32 %v216, %v2191
        %v3417 = vmul.f32 %v217, %v2191
        %v3418 = vmul.f32 %v218, %v2201
        %v3419 = vmul.f32 %v219, %v2201
        %v3420 = vmul.f32 %v220, %v2201
        %v3421 = vmul.f32 %v221, %v2201
        %v3422 = vmul.f32 %v222, %v2211
        %v3423 = vmul.f32 %v223, %v2211
        %v3424 = vmul.f32 %v224, %v2211
        %v3425 = vmul.f32 %v225, %v2211
        %v3426 = vmul.f32 %v226, %v2221
        %v3427 = vmul.f32 %v227, %v2221
        %v3428 = vmul.f32 %v228, %v2221
        %v3429 = vmul.f32 %v229, %v2221
        %v3430 = vmul.f32 %v230, %v2231
        %v3431 = vmul.f32 %v231, %v2231
        %v3432 = vmul.f32 %v232, %v2231
        %v3433 = vmul.f32 %v233, %v2231
        %v3434 = vmul.f32 %v234, %v2241
        %v3435 = vmul.f32 %v235, %v2241
        %v3436 = vmul.f32 %v236, %v2241
        %v3437 = vmul.f32 %v237, %v2241
        %v3438 = vmul.f32 %v238, %v2251
        %v3439 = vmul.f32 %v239, %v2251
        %v3440 = vmul.f32 %v240, %v2251
        %v3441 = vmul.f32 %v241, %v2251
        %v3442 = vmul.f32 %v242, %v2261
        %v3443 = vmul.f32 %v243, %v2261
        %v3444 = vmul.f32 %v244, %v2261
        %v3445 = vmul.f32 %v245, %v2261
        %v3446 = vmul.f32 %v246, %v2271
        %v3447 = vmul.f32 %v247, %v2271
        %v3448 = vmul.f32 %v248, %v2271
        %v3449 = vmul.f32 %v249, %v2271
        %v3450 = vmul.f32 %v250, %v2281
        %v3451 = vmul.f32 %v251, %v2281
        %v3452 = vmul.f32 %v252, %v2281
        %v3453 = vmul.f32 %v253, %v2281
        %v3454 = vmul.f32 %v254, %v2291
        %v3455 = vmul.f32 %v255, %v2291
        %v3456 = vmul.f32 %v256, %v2291
        %v3457 = vmul.f32 %v257, %v2291
        %v3458 = vmul.f32 %v258, %v2301
        %v3459 = vmul.f32 %v259, %v2301
        %v3460 = vmul.f32 %v260, %v2301
        %v3461 = vmul.f32 %v261, %v2301
        %v3462 = vmul.f32 %v262, %v2311
        %v3463 = vmul.f32 %v263, %v2311
        %v3464 = vmul.f32 %v264, %v2311
        %v3465 = vmul.f32 %v265, %v2311
        %v3466 = vmul.f32 %v266, %v2321
        %v3467 = vmul.f32 %v267, %v2321
        %v3468 = vmul.f32 %v268, %v2321
        %v3469 = vmul.f32 %v269, %v2321
        %v3470 = vmul.f32 %v270, %v2331
        %v3471 = vmul.f32 %v271, %v2331
        %v3472 = vmul.f32 %v272, %v2331
        %v3473 = vmul.f32 %v273, %v2331
        %v3474 = vmul.f32 %v274, %v2341
        %v3475 = vmul.f32 %v275, %v2341
        %v3476 = vmul.f32 %v276, %v2341
        %v3477 = vmul.f32 %v277, %v2341
        %v3478 = vmul.f32 %v278, %v2351
        %v3479 = vmul.f32 %v279, %v2351
        %v3480 = vmul.f32 %v280, %v2351
        %v3481 = vmul.f32 %v281, %v2351
        %v3482 = vmul.f32 %v282, %v2361
        %v3483 = vmul.f32 %v283, %v2361
        %v3484 = vmul.f32 %v284, %v2361
        %v3485 = vmul.f32 %v285, %v2361
        %v3486 = vmul.f32 %v286, %v2371
        %v3487 = vmul.f32 %v287, %v2371
        %v3488 = vmul.f32 %v288, %v2371
        %v3489 = vmul.f32 %v289, %v2371
        %v3490 = vmul.f32 %v290, %v2381
        %v3491 = vmul.f32 %v291, %v2381
        %v3492 = vmul.f32 %v292, %v2381
        %v3493 = vmul.f32 %v293, %v2381
        %v3494 = vmul.f32 %v294, %v2391
        %v3495 = vmul.f32 %v295, %v2391
        %v3496 = vmul.f32 %v296, %v2391
        %v3497 = vmul.f32 %v297, %v2391
        %v3498 = vmul.f32 %v298, %v2401
        %v3499 = vmul.f32 %v299, %v2401
        %v3500 = vmul.f32 %v300, %v2401
        %v3501 = vmul.f32 %v301, %v2401
        %v3502 = vmul.f32 %v302, %v2411
        %v3503 = vmul.f32 %v303, %v2411
        %v3504 = vmul.f32 %v304, %v2411
        %v3505 = vmul.f32 %v305, %v2411
        %v3506 = vmul.f32 %v306, %v2421
        %v3507 = vmul.f32 %v307, %v2421
        %v3508 = vmul.f32 %v308, %v2421
        %v3509 = vmul.f32 %v309, %v2421
        %v3510 = vmul.f32 %v310, %v2431
        %v3511 = vmul.f32 %v311, %v2431
        %v3512 = vmul.f32 %v312, %v2431
        %v3513 = vmul.f32 %v313, %v2431
        %v3514 = vmul.f32 %v314, %v2441
        %v3515 = vmul.f32 %v315, %v2441
        %v3516 = vmul.f32 %v316, %v2441
        %v3517 = vmul.f32 %v317, %v2441
        %v3518 = vmul.f32 %v318, %v2451
        %v3519 = vmul.f32 %v319, %v2451
        %v3520 = vmul.f32 %v320, %v2451
        %v3521 = vmul.f32 %v321, %v2451
        %v3522 = vmul.f32 %v322, %v2461
        %v3523 = vmul.f32 %v323, %v2461
        %v3524 = vmul.f32 %v324, %v2461
        %v3525 = vmul.f32 %v325, %v2461
        %v3526 = vmul.f32 %v326, %v2471
        %v3527 = vmul.f32 %v327, %v2471
        %v3528 = vmul.f32 %v328, %v2471
        %v3529 = vmul.f32 %v329, %v2471
        %v3530 = vmul.f32 %v330, %v2481
        %v3531 = vmul.f32 %v331, %v2481
        %v3532 = vmul.f32 %v332, %v2481
        %v3533 = vmul.f32 %v333, %v2481
        %v3534 = vmul.f32 %v334, %v2491
        %v3535 = vmul.f32 %v335, %v2491
        %v3536 = vmul.f32 %v336, %v2491
        %v3537 = vmul.f32 %v337, %v2491
        %v3538 = vmul.f32 %v338, %v2501
        %v3539 = vmul.f32 %v339, %v2501
        %v3540 = vmul.f32 %v340, %v2501
        %v3541 = vmul.f32 %v341, %v2501
        %v3542 = vmul.f32 %v342, %v2511
        %v3543 = vmul.f32 %v343, %v2511
        %v3544 = vmul.f32 %v344, %v2511
        %v3545 = vmul.f32 %v345, %v2511
        %v3546 = vmul.f32 %v346, %v2521
        %v3547 = vmul.f32 %v347, %v2521
        %v3548 = vmul.f32 %v348, %v2521
        %v3549 = vmul.f32 %v349, %v2521
        %v3550 = vmul.f32 %v350, %v2531
        %v3551 = vmul.f32 %v351, %v2531
        %v3552 = vmul.f32 %v352, %v2531
        %v3553 = vmul.f32 %v353, %v2531
        %v3554 = vmul.f32 %v354, %v2541
        %v3555 = vmul.f32 %v355, %v2541
        %v3556 = vmul.f32 %v356, %v2541
        %v3557 = vmul.f32 %v357, %v2541
        %v3558 = vmul.f32 %v358, %v2551
        %v3559 = vmul.f32 %v359, %v2551
        %v3560 = vmul.f32 %v360, %v2551
        %v3561 = vmul.f32 %v361, %v2551
        %v3562 = vmul.f32 %v362, %v2561
        %v3563 = vmul.f32 %v363, %v2561
        %v3564 = vmul.f32 %v364, %v2561
        %v3565 = vmul.f32 %v365, %v2561
        %v3566 = vmul.f32 %v366, %v2571
        %v3567 = vmul.f32 %v367, %v2571
        %v3568 = vmul.f32 %v368, %v2571
        %v3569 = vmul.f32 %v369, %v2571
        %v3570 = vmul.f32 %v370, %v2581
        %v3571 = vmul.f32 %v371, %v2581
        %v3572 = vmul.f32 %v372, %v2581
        %v3573 = vmul.f32 %v373, %v2581
        %v3574 = vmul.f32 %v374, %v2591
        %v3575 = vmul.f32 %v375, %v2591
        %v3576 = vmul.f32 %v376, %v2591
        %v3577 = vmul.f32 %v377, %v2591
        %v3578 = vmul.f32 %v378, %v2601
        %v3579 = vmul.f32 %v379, %v2601
        %v3580 = vmul.f32 %v380, %v2601
        %v3581 = vmul.f32 %v381, %v2601
        %v3582 = vmul.f32 %v382, %v2611
        %v3583 = vmul.f32 %v383, %v2611
        %v3584 = vmul.f32 %v384, %v2611
        %v3585 = vmul.f32 %v385, %v2611
        %v3586 = vmul.f32 %v386, %v2621
        %v3587 = vmul.f32 %v387, %v2621
        %v3588 = vmul.f32 %v388, %v2621
        %v3589 = vmul.f32 %v389, %v2621
        %v3590 = vmul.f32 %v390, %v2631
        %v3591 = vmul.f32 %v391, %v2631
        %v3592 = vmul.f32 %v392, %v2631
        %v3593 = vmul.f32 %v393, %v2631
        %v3594 = vmul.f32 %v394, %v2641
        %v3595 = vmul.f32 %v395, %v2641
        %v3596 = vmul.f32 %v396, %v2641
        %v3597 = vmul.f32 %v397, %v2641
        %v3598 = vmul.f32 %v398, %v2651
        %v3599 = vmul.f32 %v399, %v2651
        %v3600 = vmul.f32 %v400, %v2651
        %v3601 = vmul.f32 %v401, %v2651
        %v3602 = vmul.f32 %v402, %v2661
        %v3603 = vmul.f32 %v403, %v2661
        %v3604 = vmul.f32 %v404, %v2661
        %v3605 = vmul.f32 %v405, %v2661
        %v3606 = vmul.f32 %v406, %v2671
        %v3607 = vmul.f32 %v407, %v2671
        %v3608 = vmul.f32 %v408, %v2671
        %v3609 = vmul.f32 %v409, %v2671
        %v3610 = vmul.f32 %v410, %v2681
        %v3611 = vmul.f32 %v411, %v2681
        %v3612 = vmul.f32 %v412, %v2681
        %v3613 = vmul.f32 %v413, %v2681
        %v3614 = vmul.f32 %v414, %v2691
        %v3615 = vmul.f32 %v415, %v2691
        %v3616 = vmul.f32 %v416, %v2691
        %v3617 = vmul.f32 %v417, %v2691
        %v3618 = vmul.f32 %v418, %v2701
        %v3619 = vmul.f32 %v419, %v2701
        %v3620 = vmul.f32 %v420, %v2701
        %v3621 = vmul.f32 %v421, %v2701
        %v3622 = vmul.f32 %v422, %v2711
        %v3623 = vmul.f32 %v423, %v2711
        %v3624 = vmul.f32 %v424, %v2711
        %v3625 = vmul.f32 %v425, %v2711
        %v3626 = vmul.f32 %v426, %v2721
        %v3627 = vmul.f32 %v427, %v2721
        %v3628 = vmul.f32 %v428, %v2721
        %v3629 = vmul.f32 %v429, %v2721
        %v3630 = vmul.f32 %v430, %v2731
        %v3631 = vmul.f32 %v431, %v2731
        %v3632 = vmul.f32 %v432, %v2731
        %v3633 = vmul.f32 %v433, %v2731
        %v3634 = vmul.f32 %v434, %v2741
        %v3635 = vmul.f32 %v435, %v2741
        %v3636 = vmul.f32 %v436, %v2741
        %v3637 = vmul.f32 %v437, %v2741
        %v3638 = vmul.f32 %v438, %v2751
        %v3639 = vmul.f32 %v439, %v2751
        %v3640 = vmul.f32 %v440, %v2751
        %v3641 = vmul.f32 %v441, %v2751
        %v3642 = vmul.f32 %v442, %v2761
        %v3643 = vmul.f32 %v443, %v2761
        %v3644 = vmul.f32 %v444, %v2761
        %v3645 = vmul.f32 %v445, %v2761
        %v3646 = vmul.f32 %v446, %v2771
        %v3647 = vmul.f32 %v447, %v2771
        %v3648 = vmul.f32 %v448, %v2771
        %v3649 = vmul.f32 %v449, %v2771
        %v3650 = vmul.f32 %v450, %v2781
        %v3651 = vmul.f32 %v451, %v2781
        %v3652 = vmul.f32 %v452, %v2781
        %v3653 = vmul.f32 %v453, %v2781
        %v3654 = vmul.f32 %v454, %v2791
        %v3655 = vmul.f32 %v455, %v2791
        %v3656 = vmul.f32 %v456, %v2791
        %v3657 = vmul.f32 %v457, %v2791
        %v3658 = vmul.f32 %v458, %v2801
        %v3659 = vmul.f32 %v459, %v2801
        %v3660 = vmul.f32 %v460, %v2801
        %v3661 = vmul.f32 %v461, %v2801
        %v3662 = vmul.f32 %v462, %v2811
        %v3663 = vmul.f32 %v463, %v2811
        %v3664 = vmul.f32 %v464, %v2811
        %v3665 = vmul.f32 %v465, %v2811
        %v3666 = vmul.f32 %v466, %v2821
        %v3667 = vmul.f32 %v467, %v2821
        %v3668 = vmul.f32 %v468, %v2821
        %v3669 = vmul.f32 %v469, %v2821
        %v3670 = vmul.f32 %v470, %v2831
        %v3671 = vmul.f32 %v471, %v2831
        %v3672 = vmul.f32 %v472, %v2831
        %v3673 = vmul.f32 %v473, %v2831
        %v3674 = vmul.f32 %v474, %v2841
        %v3675 = vmul.f32 %v475, %v2841
        %v3676 = vmul.f32 %v476, %v2841
        %v3677 = vmul.f32 %v477, %v2841
        %v3678 = vmul.f32 %v478, %v2851
        %v3679 = vmul.f32 %v479, %v2851
        %v3680 = vmul.f32 %v480, %v2851
        %v3681 = vmul.f32 %v481, %v2851
        %v3682 = vmul.f32 %v482, %v2861
        %v3683 = vmul.f32 %v483, %v2861
        %v3684 = vmul.f32 %v484, %v2861
        %v3685 = vmul.f32 %v485, %v2861
        %v3686 = vmul.f32 %v486, %v2871
        %v3687 = vmul.f32 %v487, %v2871
        %v3688 = vmul.f32 %v488, %v2871
        %v3689 = vmul.f32 %v489, %v2871
        %v3690 = vmul.f32 %v490, %v2881
        %v3691 = vmul.f32 %v491, %v2881
        %v3692 = vmul.f32 %v492, %v2881
        %v3693 = vmul.f32 %v493, %v2881
        %v3694 = vmul.f32 %v494, %v2891
        %v3695 = vmul.f32 %v495, %v2891
        %v3696 = vmul.f32 %v496, %v2891
        %v3697 = vmul.f32 %v497, %v2891
        %v3698 = vmul.f32 %v498, %v2901
        %v3699 = vmul.f32 %v499, %v2901
        %v3700 = vmul.f32 %v500, %v2901
        %v3701 = vmul.f32 %v501, %v2901
        %v3702 = vmul.f32 %v502, %v2911
        %v3703 = vmul.f32 %v503, %v2911
        %v3704 = vmul.f32 %v504, %v2911
        %v3705 = vmul.f32 %v505, %v2911
        %v3706 = vmul.f32 %v506, %v2921
        %v3707 = vmul.f32 %v507, %v2921
        %v3708 = vmul.f32 %v508, %v2921
        %v3709 = vmul.f32 %v509, %v2921
        %v3710 = vmul.f32 %v510, %v2931
        %v3711 = vmul.f32 %v511, %v2931
        %v3712 = vmul.f32 %v512, %v2931
        %v3713 = vmul.f32 %v513, %v2931
        %v3714 = vmul.f32 %v514, %v2941
        %v3715 = vmul.f32 %v515, %v2941
        %v3716 = vmul.f32 %v516, %v2941
        %v3717 = vmul.f32 %v517, %v2941
        %v3718 = vmul.f32 %v518, %v2951
        %v3719 = vmul.f32 %v519, %v2951
        %v3720 = vmul.f32 %v520, %v2951
        %v3721 = vmul.f32 %v521, %v2951
        %v3722 = vmul.f32 %v522, %v2961
        %v3723 = vmul.f32 %v523, %v2961
        %v3724 = vmul.f32 %v524, %v2961
        %v3725 = vmul.f32 %v525, %v2961
        %v3726 = vmul.f32 %v526, %v2971
        %v3727 = vmul.f32 %v527, %v2971
        %v3728 = vmul.f32 %v528, %v2971
        %v3729 = vmul.f32 %v529, %v2971
        %v3730 = vmul.f32 %v530, %v2981
        %v3731 = vmul.f32 %v531, %v2981
        %v3732 = vmul.f32 %v532, %v2981
        %v3733 = vmul.f32 %v533, %v2981
        %v3734 = vmul.f32 %v534, %v2991
        %v3735 = vmul.f32 %v535, %v2991
        %v3736 = vmul.f32 %v536, %v2991
        %v3737 = vmul.f32 %v537, %v2991
        %v3738 = vmul.f32 %v538, %v3001
        %v3739 = vmul.f32 %v539, %v3001
        %v3740 = vmul.f32 %v540, %v3001
        %v3741 = vmul.f32 %v541, %v3001
        %v3742 = vmul.f32 %v542, %v3011
        %v3743 = vmul.f32 %v543, %v3011
        %v3744 = vmul.f32 %v544, %v3011
        %v3745 = vmul.f32 %v545, %v3011
        %v3746 = vmul.f32 %v546, %v3021
        %v3747 = vmul.f32 %v547, %v3021
        %v3748 = vmul.f32 %v548, %v3021
        %v3749 = vmul.f32 %v549, %v3021
        %v3750 = vmul.f32 %v550, %v3031
        %v3751 = vmul.f32 %v551, %v3031
        %v3752 = vmul.f32 %v552, %v3031
        %v3753 = vmul.f32 %v553, %v3031
        %v3754 = vmul.f32 %v554, %v3041
        %v3755 = vmul.f32 %v555, %v3041
        %v3756 = vmul.f32 %v556, %v3041
        %v3757 = vmul.f32 %v557, %v3041
        %v3758 = vmul.f32 %v558, %v3051
        %v3759 = vmul.f32 %v559, %v3051
        %v3760 = vmul.f32 %v560, %v3051
        %v3761 = vmul.f32 %v561, %v3051
        %v3762 = vmul.f32 %v562, %v3061
        %v3763 = vmul.f32 %v563, %v3061
        %v3764 = vmul.f32 %v564, %v3061
        %v3765 = vmul.f32 %v565, %v3061
        %v3766 = vmul.f32 %v566, %v3071
        %v3767 = vmul.f32 %v567, %v3071
        %v3768 = vmul.f32 %v568, %v3071
        %v3769 = vmul.f32 %v569, %v3071
        %v3770 = vmul.f32 %v570, %v3081
        %v3771 = vmul.f32 %v571, %v3081
        %v3772 = vmul.f32 %v572, %v3081
        %v3773 = vmul.f32 %v573, %v3081
        %v3774 = vmul.f32 %v574, %v3091
        %v3775 = vmul.f32 %v575, %v3091
        %v3776 = vmul.f32 %v576, %v3091
        %v3777 = vmul.f32 %v577, %v3091
        %v3778 = vmul.f32 %v578, %v3101
        %v3779 = vmul.f32 %v579, %v3101
        %v3780 = vmul.f32 %v580, %v3101
        %v3781 = vmul.f32 %v581, %v3101
        %v3782 = vmul.f32 %v582, %v3111
        %v3783 = vmul.f32 %v583, %v3111
        %v3784 = vmul.f32 %v584, %v3111
        %v3785 = vmul.f32 %v585, %v3111
        %v3786 = vmul.f32 %v586, %v3121
        %v3787 = vmul.f32 %v587, %v3121
        %v3788 = vmul.f32 %v588, %v3121
        %v3789 = vmul.f32 %v589, %v3121
        %v3790 = vmul.f32 %v590, %v3131
        %v3791 = vmul.f32 %v591, %v3131
        %v3792 = vmul.f32 %v592, %v3131
        %v3793 = vmul.f32 %v593, %v3131
        %v3794 = vmul.f32 %v594, %v3141
        %v3795 = vmul.f32 %v595, %v3141
        %v3796 = vmul.f32 %v596, %v3141
        %v3797 = vmul.f32 %v597, %v3141
        %v3798 = vmul.f32 %v598, %v3151
        %v3799 = vmul.f32 %v599, %v3151
        %v3800 = vmul.f32 %v600, %v3151
        %v3801 = vmul.f32 %v601, %v3151
        %v3802 = vmul.f32 %v602, %v3161
        %v3803 = vmul.f32 %v603, %v3161
        %v3804 = vmul.f32 %v604, %v3161
        %v3805 = vmul.f32 %v605, %v3161
        %v3806 = vmul.f32 %v606, %v3171
        %v3807 = vmul.f32 %v607, %v3171
        %v3808 = vmul.f32 %v608, %v3171
        %v3809 = vmul.f32 %v609, %v3171
        %v3810 = vmul.f32 %v610, %v3181
        %v3811 = vmul.f32 %v611, %v3181
        %v3812 = vmul.f32 %v612, %v3181
        %v3813 = vmul.f32 %v613, %v3181
        %v3814 = vmul.f32 %v614, %v3191
        %v3815 = vmul.f32 %v615, %v3191
        %v3816 = vmul.f32 %v616, %v3191
        %v3817 = vmul.f32 %v617, %v3191
        %v3818 = vmul.f32 %v618, %v3201
        %v3819 = vmul.f32 %v619, %v3201
        %v3820 = vmul.f32 %v620, %v3201
        %v3821 = vmul.f32 %v621, %v3201
        %v3822 = vmul.f32 %v622, %v3211
        %v3823 = vmul.f32 %v623, %v3211
        %v3824 = vmul.f32 %v624, %v3211
        %v3825 = vmul.f32 %v625, %v3211
        %v3826 = vmul.f32 %v626, %v3221
        %v3827 = vmul.f32 %v627, %v3221
        %v3828 = vmul.f32 %v628, %v3221
        %v3829 = vmul.f32 %v629, %v3221
        %v3830 = vmul.f32 %v630, %v3231
        %v3831 = vmul.f32 %v631, %v3231
        %v3832 = vmul.f32 %v632, %v3231
        %v3833 = vmul.f32 %v633, %v3231
        %v3834 = vmul.f32 %v634, %v3241
        %v3835 = vmul.f32 %v635, %v3241
        %v3836 = vmul.f32 %v636, %v3241
        %v3837 = vmul.f32 %v637, %v3241
        %v3838 = vmul.f32 %v638, %v3251
        %v3839 = vmul.f32 %v639, %v3251
        %v3840 = vmul.f32 %v640, %v3251
        %v3841 = vmul.f32 %v641, %v3251
        %v3842 = vmul.f32 %v642, %v3261
        %v3843 = vmul.f32 %v643, %v3261
        %v3844 = vmul.f32 %v644, %v3261
        %v3845 = vmul.f32 %v645, %v3261
        %v3846 = vmul.f32 %v646, %v3271
        %v3847 = vmul.f32 %v647, %v3271
        %v3848 = vmul.f32 %v648, %v3271
        %v3849 = vmul.f32 %v649, %v3271
        %v3850 = vmul.f32 %v650, %v3281
        %v3851 = vmul.f32 %v651, %v3281
        %v3852 = vmul.f32 %v652, %v3281
        %v3853 = vmul.f32 %v653, %v3281
        %v3854 = vmul.f32 %v654, %v3291
        %v3855 = vmul.f32 %v655, %v3291
        %v3856 = vmul.f32 %v656, %v3291
        %v3857 = vmul.f32 %v657, %v3291
        %v3858 = vmul.f32 %v658, %v3301
        %v3859 = vmul.f32 %v659, %v3301
        %v3860 = vmul.f32 %v660, %v3301
        %v3861 = vmul.f32 %v661, %v3301
        %v3862 = vmul.f32 %v662, %v3311
        %v3863 = vmul.f32 %v663, %v3311
        %v3864 = vmul.f32 %v664, %v3311
        %v3865 = vmul.f32 %v665, %v3311
        %v3866 = vmul.f32 %v666, %v3321
        %v3867 = vmul.f32 %v667, %v3321
        %v3868 = vmul.f32 %v668, %v3321
        %v3869 = vmul.f32 %v669, %v3321
        %v3870 = vmul.f32 %v670, %v3331
        %v3871 = vmul.f32 %v671, %v3331
        %v3872 = vmul.f32 %v672, %v3331
        %v3873 = vmul.f32 %v673, %v3331
        %v3874 = vmul.f32 %v674, %v3341
        %v3875 = vmul.f32 %v675, %v3341
        %v3876 = vmul.f32 %v676, %v3341
        %v3877 = vmul.f32 %v677, %v3341
        %v3878 = vmul.f32 %v678, %v3351
        %v3879 = vmul.f32 %v679, %v3351
        %v3880 = vmul.f32 %v680, %v3351
        %v3881 = vmul.f32 %v681, %v3351
        %v3882 = vmul.f32 %v682, %v3361
        %v3883 = vmul.f32 %v683, %v3361
        %v3884 = vmul.f32 %v684, %v3361
        %v3885 = vmul.f32 %v685, %v3361
        %v3886 = vmul.f32 %v686, %v3371
        %v3887 = vmul.f32 %v687, %v3371
        %v3888 = vmul.f32 %v688, %v3371
        %v3889 = vmul.f32 %v689, %v3371
        %v3890 = vmul.f32 %v690, %v3381
        %v3891 = vmul.f32 %v691, %v3381
        %v3892 = vmul.f32 %v692, %v3381
        %v3893 = vmul.f32 %v693, %v3381
        %v3894 = vld [vmem:[#allocation5] sm:$0xf]
        %v3896 = vperm.slane %v3894, 0
        %v3897 = vperm.slane %v3894, 1
        %v3898 = vperm.slane %v3894, 2
        %v3899 = vperm.slane %v3894, 3
        %v3904 = vmul.f32 %v3382, %v3896
        %v3905 = vmul.f32 %v3383, %v3897
        %v3906 = vmul.f32 %v3384, %v3898
        %v3907 = vmul.f32 %v3385, %v3899
        %v3908 = vmul.f32 %v3386, %v3896
        %v3909 = vmul.f32 %v3387, %v3897
        %v3910 = vmul.f32 %v3388, %v3898
        %v3911 = vmul.f32 %v3389, %v3899
        %v3912 = vmul.f32 %v3390, %v3896
        %v3913 = vmul.f32 %v3391, %v3897
        %v3914 = vmul.f32 %v3392, %v3898
        %v3915 = vmul.f32 %v3393, %v3899
        %v3916 = vmul.f32 %v3394, %v3896
        %v3917 = vmul.f32 %v3395, %v3897
        %v3918 = vmul.f32 %v3396, %v3898
        %v3919 = vmul.f32 %v3397, %v3899
        %v3920 = vmul.f32 %v3398, %v3896
        %v3921 = vmul.f32 %v3399, %v3897
        %v3922 = vmul.f32 %v3400, %v3898
        %v3923 = vmul.f32 %v3401, %v3899
        %v3924 = vmul.f32 %v3402, %v3896
        %v3925 = vmul.f32 %v3403, %v3897
        %v3926 = vmul.f32 %v3404, %v3898
        %v3927 = vmul.f32 %v3405, %v3899
        %v3928 = vmul.f32 %v3406, %v3896
        %v3929 = vmul.f32 %v3407, %v3897
        %v3930 = vmul.f32 %v3408, %v3898
        %v3931 = vmul.f32 %v3409, %v3899
        %v3932 = vmul.f32 %v3410, %v3896
        %v3933 = vmul.f32 %v3411, %v3897
        %v3934 = vmul.f32 %v3412, %v3898
        %v3935 = vmul.f32 %v3413, %v3899
        %v3936 = vmul.f32 %v3414, %v3896
        %v3937 = vmul.f32 %v3415, %v3897
        %v3938 = vmul.f32 %v3416, %v3898
        %v3939 = vmul.f32 %v3417, %v3899
        %v3940 = vmul.f32 %v3418, %v3896
        %v3941 = vmul.f32 %v3419, %v3897
        %v3942 = vmul.f32 %v3420, %v3898
        %v3943 = vmul.f32 %v3421, %v3899
        %v3944 = vmul.f32 %v3422, %v3896
        %v3945 = vmul.f32 %v3423, %v3897
        %v3946 = vmul.f32 %v3424, %v3898
        %v3947 = vmul.f32 %v3425, %v3899
        %v3948 = vmul.f32 %v3426, %v3896
        %v3949 = vmul.f32 %v3427, %v3897
        %v3950 = vmul.f32 %v3428, %v3898
        %v3951 = vmul.f32 %v3429, %v3899
        %v3952 = vmul.f32 %v3430, %v3896
        %v3953 = vmul.f32 %v3431, %v3897
        %v3954 = vmul.f32 %v3432, %v3898
        %v3955 = vmul.f32 %v3433, %v3899
        %v3956 = vmul.f32 %v3434, %v3896
        %v3957 = vmul.f32 %v3435, %v3897
        %v3958 = vmul.f32 %v3436, %v3898
        %v3959 = vmul.f32 %v3437, %v3899
        %v3960 = vmul.f32 %v3438, %v3896
        %v3961 = vmul.f32 %v3439, %v3897
        %v3962 = vmul.f32 %v3440, %v3898
        %v3963 = vmul.f32 %v3441, %v3899
        %v3964 = vmul.f32 %v3442, %v3896
        %v3965 = vmul.f32 %v3443, %v3897
        %v3966 = vmul.f32 %v3444, %v3898
        %v3967 = vmul.f32 %v3445, %v3899
        %v3968 = vmul.f32 %v3446, %v3896
        %v3969 = vmul.f32 %v3447, %v3897
        %v3970 = vmul.f32 %v3448, %v3898
        %v3971 = vmul.f32 %v3449, %v3899
        %v3972 = vmul.f32 %v3450, %v3896
        %v3973 = vmul.f32 %v3451, %v3897
        %v3974 = vmul.f32 %v3452, %v3898
        %v3975 = vmul.f32 %v3453, %v3899
        %v3976 = vmul.f32 %v3454, %v3896
        %v3977 = vmul.f32 %v3455, %v3897
        %v3978 = vmul.f32 %v3456, %v3898
        %v3979 = vmul.f32 %v3457, %v3899
        %v3980 = vmul.f32 %v3458, %v3896
        %v3981 = vmul.f32 %v3459, %v3897
        %v3982 = vmul.f32 %v3460, %v3898
        %v3983 = vmul.f32 %v3461, %v3899
        %v3984 = vmul.f32 %v3462, %v3896
        %v3985 = vmul.f32 %v3463, %v3897
        %v3986 = vmul.f32 %v3464, %v3898
        %v3987 = vmul.f32 %v3465, %v3899
        %v3988 = vmul.f32 %v3466, %v3896
        %v3989 = vmul.f32 %v3467, %v3897
        %v3990 = vmul.f32 %v3468, %v3898
        %v3991 = vmul.f32 %v3469, %v3899
        %v3992 = vmul.f32 %v3470, %v3896
        %v3993 = vmul.f32 %v3471, %v3897
        %v3994 = vmul.f32 %v3472, %v3898
        %v3995 = vmul.f32 %v3473, %v3899
        %v3996 = vmul.f32 %v3474, %v3896
        %v3997 = vmul.f32 %v3475, %v3897
        %v3998 = vmul.f32 %v3476, %v3898
        %v3999 = vmul.f32 %v3477, %v3899
        %v4000 = vmul.f32 %v3478, %v3896
        %v4001 = vmul.f32 %v3479, %v3897
        %v4002 = vmul.f32 %v3480, %v3898
        %v4003 = vmul.f32 %v3481, %v3899
        %v4004 = vmul.f32 %v3482, %v3896
        %v4005 = vmul.f32 %v3483, %v3897
        %v4006 = vmul.f32 %v3484, %v3898
        %v4007 = vmul.f32 %v3485, %v3899
        %v4008 = vmul.f32 %v3486, %v3896
        %v4009 = vmul.f32 %v3487, %v3897
        %v4010 = vmul.f32 %v3488, %v3898
        %v4011 = vmul.f32 %v3489, %v3899
        %v4012 = vmul.f32 %v3490, %v3896
        %v4013 = vmul.f32 %v3491, %v3897
        %v4014 = vmul.f32 %v3492, %v3898
        %v4015 = vmul.f32 %v3493, %v3899
        %v4016 = vmul.f32 %v3494, %v3896
        %v4017 = vmul.f32 %v3495, %v3897
        %v4018 = vmul.f32 %v3496, %v3898
        %v4019 = vmul.f32 %v3497, %v3899
        %v4020 = vmul.f32 %v3498, %v3896
        %v4021 = vmul.f32 %v3499, %v3897
        %v4022 = vmul.f32 %v3500, %v3898
        %v4023 = vmul.f32 %v3501, %v3899
        %v4024 = vmul.f32 %v3502, %v3896
        %v4025 = vmul.f32 %v3503, %v3897
        %v4026 = vmul.f32 %v3504, %v3898
        %v4027 = vmul.f32 %v3505, %v3899
        %v4028 = vmul.f32 %v3506, %v3896
        %v4029 = vmul.f32 %v3507, %v3897
        %v4030 = vmul.f32 %v3508, %v3898
        %v4031 = vmul.f32 %v3509, %v3899
        %v4032 = vmul.f32 %v3510, %v3896
        %v4033 = vmul.f32 %v3511, %v3897
        %v4034 = vmul.f32 %v3512, %v3898
        %v4035 = vmul.f32 %v3513, %v3899
        %v4036 = vmul.f32 %v3514, %v3896
        %v4037 = vmul.f32 %v3515, %v3897
        %v4038 = vmul.f32 %v3516, %v3898
        %v4039 = vmul.f32 %v3517, %v3899
        %v4040 = vmul.f32 %v3518, %v3896
        %v4041 = vmul.f32 %v3519, %v3897
        %v4042 = vmul.f32 %v3520, %v3898
        %v4043 = vmul.f32 %v3521, %v3899
        %v4044 = vmul.f32 %v3522, %v3896
        %v4045 = vmul.f32 %v3523, %v3897
        %v4046 = vmul.f32 %v3524, %v3898
        %v4047 = vmul.f32 %v3525, %v3899
        %v4048 = vmul.f32 %v3526, %v3896
        %v4049 = vmul.f32 %v3527, %v3897
        %v4050 = vmul.f32 %v3528, %v3898
        %v4051 = vmul.f32 %v3529, %v3899
        %v4052 = vmul.f32 %v3530, %v3896
        %v4053 = vmul.f32 %v3531, %v3897
        %v4054 = vmul.f32 %v3532, %v3898
        %v4055 = vmul.f32 %v3533, %v3899
        %v4056 = vmul.f32 %v3534, %v3896
        %v4057 = vmul.f32 %v3535, %v3897
        %v4058 = vmul.f32 %v3536, %v3898
        %v4059 = vmul.f32 %v3537, %v3899
        %v4060 = vmul.f32 %v3538, %v3896
        %v4061 = vmul.f32 %v3539, %v3897
        %v4062 = vmul.f32 %v3540, %v3898
        %v4063 = vmul.f32 %v3541, %v3899
        %v4064 = vmul.f32 %v3542, %v3896
        %v4065 = vmul.f32 %v3543, %v3897
        %v4066 = vmul.f32 %v3544, %v3898
        %v4067 = vmul.f32 %v3545, %v3899
        %v4068 = vmul.f32 %v3546, %v3896
        %v4069 = vmul.f32 %v3547, %v3897
        %v4070 = vmul.f32 %v3548, %v3898
        %v4071 = vmul.f32 %v3549, %v3899
        %v4072 = vmul.f32 %v3550, %v3896
        %v4073 = vmul.f32 %v3551, %v3897
        %v4074 = vmul.f32 %v3552, %v3898
        %v4075 = vmul.f32 %v3553, %v3899
        %v4076 = vmul.f32 %v3554, %v3896
        %v4077 = vmul.f32 %v3555, %v3897
        %v4078 = vmul.f32 %v3556, %v3898
        %v4079 = vmul.f32 %v3557, %v3899
        %v4080 = vmul.f32 %v3558, %v3896
        %v4081 = vmul.f32 %v3559, %v3897
        %v4082 = vmul.f32 %v3560, %v3898
        %v4083 = vmul.f32 %v3561, %v3899
        %v4084 = vmul.f32 %v3562, %v3896
        %v4085 = vmul.f32 %v3563, %v3897
        %v4086 = vmul.f32 %v3564, %v3898
        %v4087 = vmul.f32 %v3565, %v3899
        %v4088 = vmul.f32 %v3566, %v3896
        %v4089 = vmul.f32 %v3567, %v3897
        %v4090 = vmul.f32 %v3568, %v3898
        %v4091 = vmul.f32 %v3569, %v3899
        %v4092 = vmul.f32 %v3570, %v3896
        %v4093 = vmul.f32 %v3571, %v3897
        %v4094 = vmul.f32 %v3572, %v3898
        %v4095 = vmul.f32 %v3573, %v3899
        %v4096 = vmul.f32 %v3574, %v3896
        %v4097 = vmul.f32 %v3575, %v3897
        %v4098 = vmul.f32 %v3576, %v3898
        %v4099 = vmul.f32 %v3577, %v3899
        %v4100 = vmul.f32 %v3578, %v3896
        %v4101 = vmul.f32 %v3579, %v3897
        %v4102 = vmul.f32 %v3580, %v3898
        %v4103 = vmul.f32 %v3581, %v3899
        %v4104 = vmul.f32 %v3582, %v3896
        %v4105 = vmul.f32 %v3583, %v3897
        %v4106 = vmul.f32 %v3584, %v3898
        %v4107 = vmul.f32 %v3585, %v3899
        %v4108 = vmul.f32 %v3586, %v3896
        %v4109 = vmul.f32 %v3587, %v3897
        %v4110 = vmul.f32 %v3588, %v3898
        %v4111 = vmul.f32 %v3589, %v3899
        %v4112 = vmul.f32 %v3590, %v3896
        %v4113 = vmul.f32 %v3591, %v3897
        %v4114 = vmul.f32 %v3592, %v3898
        %v4115 = vmul.f32 %v3593, %v3899
        %v4116 = vmul.f32 %v3594, %v3896
        %v4117 = vmul.f32 %v3595, %v3897
        %v4118 = vmul.f32 %v3596, %v3898
        %v4119 = vmul.f32 %v3597, %v3899
        %v4120 = vmul.f32 %v3598, %v3896
        %v4121 = vmul.f32 %v3599, %v3897
        %v4122 = vmul.f32 %v3600, %v3898
        %v4123 = vmul.f32 %v3601, %v3899
        %v4124 = vmul.f32 %v3602, %v3896
        %v4125 = vmul.f32 %v3603, %v3897
        %v4126 = vmul.f32 %v3604, %v3898
        %v4127 = vmul.f32 %v3605, %v3899
        %v4128 = vmul.f32 %v3606, %v3896
        %v4129 = vmul.f32 %v3607, %v3897
        %v4130 = vmul.f32 %v3608, %v3898
        %v4131 = vmul.f32 %v3609, %v3899
        %v4132 = vmul.f32 %v3610, %v3896
        %v4133 = vmul.f32 %v3611, %v3897
        %v4134 = vmul.f32 %v3612, %v3898
        %v4135 = vmul.f32 %v3613, %v3899
        %v4136 = vmul.f32 %v3614, %v3896
        %v4137 = vmul.f32 %v3615, %v3897
        %v4138 = vmul.f32 %v3616, %v3898
        %v4139 = vmul.f32 %v3617, %v3899
        %v4140 = vmul.f32 %v3618, %v3896
        %v4141 = vmul.f32 %v3619, %v3897
        %v4142 = vmul.f32 %v3620, %v3898
        %v4143 = vmul.f32 %v3621, %v3899
        %v4144 = vmul.f32 %v3622, %v3896
        %v4145 = vmul.f32 %v3623, %v3897
        %v4146 = vmul.f32 %v3624, %v3898
        %v4147 = vmul.f32 %v3625, %v3899
        %v4148 = vmul.f32 %v3626, %v3896
        %v4149 = vmul.f32 %v3627, %v3897
        %v4150 = vmul.f32 %v3628, %v3898
        %v4151 = vmul.f32 %v3629, %v3899
        %v4152 = vmul.f32 %v3630, %v3896
        %v4153 = vmul.f32 %v3631, %v3897
        %v4154 = vmul.f32 %v3632, %v3898
        %v4155 = vmul.f32 %v3633, %v3899
        %v4156 = vmul.f32 %v3634, %v3896
        %v4157 = vmul.f32 %v3635, %v3897
        %v4158 = vmul.f32 %v3636, %v3898
        %v4159 = vmul.f32 %v3637, %v3899
        %v4160 = vmul.f32 %v3638, %v3896
        %v4161 = vmul.f32 %v3639, %v3897
        %v4162 = vmul.f32 %v3640, %v3898
        %v4163 = vmul.f32 %v3641, %v3899
        %v4164 = vmul.f32 %v3642, %v3896
        %v4165 = vmul.f32 %v3643, %v3897
        %v4166 = vmul.f32 %v3644, %v3898
        %v4167 = vmul.f32 %v3645, %v3899
        %v4168 = vmul.f32 %v3646, %v3896
        %v4169 = vmul.f32 %v3647, %v3897
        %v4170 = vmul.f32 %v3648, %v3898
        %v4171 = vmul.f32 %v3649, %v3899
        %v4172 = vmul.f32 %v3650, %v3896
        %v4173 = vmul.f32 %v3651, %v3897
        %v4174 = vmul.f32 %v3652, %v3898
        %v4175 = vmul.f32 %v3653, %v3899
        %v4176 = vmul.f32 %v3654, %v3896
        %v4177 = vmul.f32 %v3655, %v3897
        %v4178 = vmul.f32 %v3656, %v3898
        %v4179 = vmul.f32 %v3657, %v3899
        %v4180 = vmul.f32 %v3658, %v3896
        %v4181 = vmul.f32 %v3659, %v3897
        %v4182 = vmul.f32 %v3660, %v3898
        %v4183 = vmul.f32 %v3661, %v3899
        %v4184 = vmul.f32 %v3662, %v3896
        %v4185 = vmul.f32 %v3663, %v3897
        %v4186 = vmul.f32 %v3664, %v3898
        %v4187 = vmul.f32 %v3665, %v3899
        %v4188 = vmul.f32 %v3666, %v3896
        %v4189 = vmul.f32 %v3667, %v3897
        %v4190 = vmul.f32 %v3668, %v3898
        %v4191 = vmul.f32 %v3669, %v3899
        %v4192 = vmul.f32 %v3670, %v3896
        %v4193 = vmul.f32 %v3671, %v3897
        %v4194 = vmul.f32 %v3672, %v3898
        %v4195 = vmul.f32 %v3673, %v3899
        %v4196 = vmul.f32 %v3674, %v3896
        %v4197 = vmul.f32 %v3675, %v3897
        %v4198 = vmul.f32 %v3676, %v3898
        %v4199 = vmul.f32 %v3677, %v3899
        %v4200 = vmul.f32 %v3678, %v3896
        %v4201 = vmul.f32 %v3679, %v3897
        %v4202 = vmul.f32 %v3680, %v3898
        %v4203 = vmul.f32 %v3681, %v3899
        %v4204 = vmul.f32 %v3682, %v3896
        %v4205 = vmul.f32 %v3683, %v3897
        %v4206 = vmul.f32 %v3684, %v3898
        %v4207 = vmul.f32 %v3685, %v3899
        %v4208 = vmul.f32 %v3686, %v3896
        %v4209 = vmul.f32 %v3687, %v3897
        %v4210 = vmul.f32 %v3688, %v3898
        %v4211 = vmul.f32 %v3689, %v3899
        %v4212 = vmul.f32 %v3690, %v3896
        %v4213 = vmul.f32 %v3691, %v3897
        %v4214 = vmul.f32 %v3692, %v3898
        %v4215 = vmul.f32 %v3693, %v3899
        %v4216 = vmul.f32 %v3694, %v3896
        %v4217 = vmul.f32 %v3695, %v3897
        %v4218 = vmul.f32 %v3696, %v3898
        %v4219 = vmul.f32 %v3697, %v3899
        %v4220 = vmul.f32 %v3698, %v3896
        %v4221 = vmul.f32 %v3699, %v3897
        %v4222 = vmul.f32 %v3700, %v3898
        %v4223 = vmul.f32 %v3701, %v3899
        %v4224 = vmul.f32 %v3702, %v3896
        %v4225 = vmul.f32 %v3703, %v3897
        %v4226 = vmul.f32 %v3704, %v3898
        %v4227 = vmul.f32 %v3705, %v3899
        %v4228 = vmul.f32 %v3706, %v3896
        %v4229 = vmul.f32 %v3707, %v3897
        %v4230 = vmul.f32 %v3708, %v3898
        %v4231 = vmul.f32 %v3709, %v3899
        %v4232 = vmul.f32 %v3710, %v3896
        %v4233 = vmul.f32 %v3711, %v3897
        %v4234 = vmul.f32 %v3712, %v3898
        %v4235 = vmul.f32 %v3713, %v3899
        %v4236 = vmul.f32 %v3714, %v3896
        %v4237 = vmul.f32 %v3715, %v3897
        %v4238 = vmul.f32 %v3716, %v3898
        %v4239 = vmul.f32 %v3717, %v3899
        %v4240 = vmul.f32 %v3718, %v3896
        %v4241 = vmul.f32 %v3719, %v3897
        %v4242 = vmul.f32 %v3720, %v3898
        %v4243 = vmul.f32 %v3721, %v3899
        %v4244 = vmul.f32 %v3722, %v3896
        %v4245 = vmul.f32 %v3723, %v3897
        %v4246 = vmul.f32 %v3724, %v3898
        %v4247 = vmul.f32 %v3725, %v3899
        %v4248 = vmul.f32 %v3726, %v3896
        %v4249 = vmul.f32 %v3727, %v3897
        %v4250 = vmul.f32 %v3728, %v3898
        %v4251 = vmul.f32 %v3729, %v3899
        %v4252 = vmul.f32 %v3730, %v3896
        %v4253 = vmul.f32 %v3731, %v3897
        %v4254 = vmul.f32 %v3732, %v3898
        %v4255 = vmul.f32 %v3733, %v3899
        %v4256 = vmul.f32 %v3734, %v3896
        %v4257 = vmul.f32 %v3735, %v3897
        %v4258 = vmul.f32 %v3736, %v3898
        %v4259 = vmul.f32 %v3737, %v3899
        %v4260 = vmul.f32 %v3738, %v3896
        %v4261 = vmul.f32 %v3739, %v3897
        %v4262 = vmul.f32 %v3740, %v3898
        %v4263 = vmul.f32 %v3741, %v3899
        %v4264 = vmul.f32 %v3742, %v3896
        %v4265 = vmul.f32 %v3743, %v3897
        %v4266 = vmul.f32 %v3744, %v3898
        %v4267 = vmul.f32 %v3745, %v3899
        %v4268 = vmul.f32 %v3746, %v3896
        %v4269 = vmul.f32 %v3747, %v3897
        %v4270 = vmul.f32 %v3748, %v3898
        %v4271 = vmul.f32 %v3749, %v3899
        %v4272 = vmul.f32 %v3750, %v3896
        %v4273 = vmul.f32 %v3751, %v3897
        %v4274 = vmul.f32 %v3752, %v3898
        %v4275 = vmul.f32 %v3753, %v3899
        %v4276 = vmul.f32 %v3754, %v3896
        %v4277 = vmul.f32 %v3755, %v3897
        %v4278 = vmul.f32 %v3756, %v3898
        %v4279 = vmul.f32 %v3757, %v3899
        %v4280 = vmul.f32 %v3758, %v3896
        %v4281 = vmul.f32 %v3759, %v3897
        %v4282 = vmul.f32 %v3760, %v3898
        %v4283 = vmul.f32 %v3761, %v3899
        %v4284 = vmul.f32 %v3762, %v3896
        %v4285 = vmul.f32 %v3763, %v3897
        %v4286 = vmul.f32 %v3764, %v3898
        %v4287 = vmul.f32 %v3765, %v3899
        %v4288 = vmul.f32 %v3766, %v3896
        %v4289 = vmul.f32 %v3767, %v3897
        %v4290 = vmul.f32 %v3768, %v3898
        %v4291 = vmul.f32 %v3769, %v3899
        %v4292 = vmul.f32 %v3770, %v3896
        %v4293 = vmul.f32 %v3771, %v3897
        %v4294 = vmul.f32 %v3772, %v3898
        %v4295 = vmul.f32 %v3773, %v3899
        %v4296 = vmul.f32 %v3774, %v3896
        %v4297 = vmul.f32 %v3775, %v3897
        %v4298 = vmul.f32 %v3776, %v3898
        %v4299 = vmul.f32 %v3777, %v3899
        %v4300 = vmul.f32 %v3778, %v3896
        %v4301 = vmul.f32 %v3779, %v3897
        %v4302 = vmul.f32 %v3780, %v3898
        %v4303 = vmul.f32 %v3781, %v3899
        %v4304 = vmul.f32 %v3782, %v3896
        %v4305 = vmul.f32 %v3783, %v3897
        %v4306 = vmul.f32 %v3784, %v3898
        %v4307 = vmul.f32 %v3785, %v3899
        %v4308 = vmul.f32 %v3786, %v3896
        %v4309 = vmul.f32 %v3787, %v3897
        %v4310 = vmul.f32 %v3788, %v3898
        %v4311 = vmul.f32 %v3789, %v3899
        %v4312 = vmul.f32 %v3790, %v3896
        %v4313 = vmul.f32 %v3791, %v3897
        %v4314 = vmul.f32 %v3792, %v3898
        %v4315 = vmul.f32 %v3793, %v3899
        %v4316 = vmul.f32 %v3794, %v3896
        %v4317 = vmul.f32 %v3795, %v3897
        %v4318 = vmul.f32 %v3796, %v3898
        %v4319 = vmul.f32 %v3797, %v3899
        %v4320 = vmul.f32 %v3798, %v3896
        %v4321 = vmul.f32 %v3799, %v3897
        %v4322 = vmul.f32 %v3800, %v3898
        %v4323 = vmul.f32 %v3801, %v3899
        %v4324 = vmul.f32 %v3802, %v3896
        %v4325 = vmul.f32 %v3803, %v3897
        %v4326 = vmul.f32 %v3804, %v3898
        %v4327 = vmul.f32 %v3805, %v3899
        %v4328 = vmul.f32 %v3806, %v3896
        %v4329 = vmul.f32 %v3807, %v3897
        %v4330 = vmul.f32 %v3808, %v3898
        %v4331 = vmul.f32 %v3809, %v3899
        %v4332 = vmul.f32 %v3810, %v3896
        %v4333 = vmul.f32 %v3811, %v3897
        %v4334 = vmul.f32 %v3812, %v3898
        %v4335 = vmul.f32 %v3813, %v3899
        %v4336 = vmul.f32 %v3814, %v3896
        %v4337 = vmul.f32 %v3815, %v3897
        %v4338 = vmul.f32 %v3816, %v3898
        %v4339 = vmul.f32 %v3817, %v3899
        %v4340 = vmul.f32 %v3818, %v3896
        %v4341 = vmul.f32 %v3819, %v3897
        %v4342 = vmul.f32 %v3820, %v3898
        %v4343 = vmul.f32 %v3821, %v3899
        %v4344 = vmul.f32 %v3822, %v3896
        %v4345 = vmul.f32 %v3823, %v3897
        %v4346 = vmul.f32 %v3824, %v3898
        %v4347 = vmul.f32 %v3825, %v3899
        %v4348 = vmul.f32 %v3826, %v3896
        %v4349 = vmul.f32 %v3827, %v3897
        %v4350 = vmul.f32 %v3828, %v3898
        %v4351 = vmul.f32 %v3829, %v3899
        %v4352 = vmul.f32 %v3830, %v3896
        %v4353 = vmul.f32 %v3831, %v3897
        %v4354 = vmul.f32 %v3832, %v3898
        %v4355 = vmul.f32 %v3833, %v3899
        %v4356 = vmul.f32 %v3834, %v3896
        %v4357 = vmul.f32 %v3835, %v3897
        %v4358 = vmul.f32 %v3836, %v3898
        %v4359 = vmul.f32 %v3837, %v3899
        %v4360 = vmul.f32 %v3838, %v3896
        %v4361 = vmul.f32 %v3839, %v3897
        %v4362 = vmul.f32 %v3840, %v3898
        %v4363 = vmul.f32 %v3841, %v3899
        %v4364 = vmul.f32 %v3842, %v3896
        %v4365 = vmul.f32 %v3843, %v3897
        %v4366 = vmul.f32 %v3844, %v3898
        %v4367 = vmul.f32 %v3845, %v3899
        %v4368 = vmul.f32 %v3846, %v3896
        %v4369 = vmul.f32 %v3847, %v3897
        %v4370 = vmul.f32 %v3848, %v3898
        %v4371 = vmul.f32 %v3849, %v3899
        %v4372 = vmul.f32 %v3850, %v3896
        %v4373 = vmul.f32 %v3851, %v3897
        %v4374 = vmul.f32 %v3852, %v3898
        %v4375 = vmul.f32 %v3853, %v3899
        %v4376 = vmul.f32 %v3854, %v3896
        %v4377 = vmul.f32 %v3855, %v3897
        %v4378 = vmul.f32 %v3856, %v3898
        %v4379 = vmul.f32 %v3857, %v3899
        %v4380 = vmul.f32 %v3858, %v3896
        %v4381 = vmul.f32 %v3859, %v3897
        %v4382 = vmul.f32 %v3860, %v3898
        %v4383 = vmul.f32 %v3861, %v3899
        %v4384 = vmul.f32 %v3862, %v3896
        %v4385 = vmul.f32 %v3863, %v3897
        %v4386 = vmul.f32 %v3864, %v3898
        %v4387 = vmul.f32 %v3865, %v3899
        %v4388 = vmul.f32 %v3866, %v3896
        %v4389 = vmul.f32 %v3867, %v3897
        %v4390 = vmul.f32 %v3868, %v3898
        %v4391 = vmul.f32 %v3869, %v3899
        %v4392 = vmul.f32 %v3870, %v3896
        %v4393 = vmul.f32 %v3871, %v3897
        %v4394 = vmul.f32 %v3872, %v3898
        %v4395 = vmul.f32 %v3873, %v3899
        %v4396 = vmul.f32 %v3874, %v3896
        %v4397 = vmul.f32 %v3875, %v3897
        %v4398 = vmul.f32 %v3876, %v3898
        %v4399 = vmul.f32 %v3877, %v3899
        %v4400 = vmul.f32 %v3878, %v3896
        %v4401 = vmul.f32 %v3879, %v3897
        %v4402 = vmul.f32 %v3880, %v3898
        %v4403 = vmul.f32 %v3881, %v3899
        %v4404 = vmul.f32 %v3882, %v3896
        %v4405 = vmul.f32 %v3883, %v3897
        %v4406 = vmul.f32 %v3884, %v3898
        %v4407 = vmul.f32 %v3885, %v3899
        %v4408 = vmul.f32 %v3886, %v3896
        %v4409 = vmul.f32 %v3887, %v3897
        %v4410 = vmul.f32 %v3888, %v3898
        %v4411 = vmul.f32 %v3889, %v3899
        %v4412 = vmul.f32 %v3890, %v3896
        %v4413 = vmul.f32 %v3891, %v3897
        %v4414 = vmul.f32 %v3892, %v3898
        %v4415 = vmul.f32 %v3893, %v3899
        %4416 = vst [vmem:[%s179] sm:$0xff] %v3904
        %4417 = vst [vmem:[%s179 + $0x8] sm:$0xff] %v3905
        %4418 = vst [vmem:[%s179 + $0x10] sm:$0xff] %v3906
        %4419 = vst [vmem:[%s179 + $0x18] sm:$0xff] %v3907
        %4420 = vst [vmem:[%s179 + $0x20] sm:$0xff] %v3908
        %4421 = vst [vmem:[%s179 + $0x28] sm:$0xff] %v3909
        %4422 = vst [vmem:[%s179 + $0x30] sm:$0xff] %v3910
        %4423 = vst [vmem:[%s179 + $0x38] sm:$0xff] %v3911
        %4424 = vst [vmem:[%s179 + $0x40] sm:$0xff] %v3912
        %4425 = vst [vmem:[%s179 + $0x48] sm:$0xff] %v3913
        %4426 = vst [vmem:[%s179 + $0x50] sm:$0xff] %v3914
        %4427 = vst [vmem:[%s179 + $0x58] sm:$0xff] %v3915
        %4428 = vst [vmem:[%s179 + $0x60] sm:$0xff] %v3916
        %4429 = vst [vmem:[%s179 + $0x68] sm:$0xff] %v3917
        %4430 = vst [vmem:[%s179 + $0x70] sm:$0xff] %v3918
        %4431 = vst [vmem:[%s179 + $0x78] sm:$0xff] %v3919
        %4432 = vst [vmem:[%s179 + $0x80] sm:$0xff] %v3920
        %4433 = vst [vmem:[%s179 + $0x88] sm:$0xff] %v3921
        %4434 = vst [vmem:[%s179 + $0x90] sm:$0xff] %v3922
        %4435 = vst [vmem:[%s179 + $0x98] sm:$0xff] %v3923
        %4436 = vst [vmem:[%s179 + $0xa0] sm:$0xff] %v3924
        %4437 = vst [vmem:[%s179 + $0xa8] sm:$0xff] %v3925
        %4438 = vst [vmem:[%s179 + $0xb0] sm:$0xff] %v3926
        %4439 = vst [vmem:[%s179 + $0xb8] sm:$0xff] %v3927
        %4440 = vst [vmem:[%s179 + $0xc0] sm:$0xff] %v3928
        %4441 = vst [vmem:[%s179 + $0xc8] sm:$0xff] %v3929
        %4442 = vst [vmem:[%s179 + $0xd0] sm:$0xff] %v3930
        %4443 = vst [vmem:[%s179 + $0xd8] sm:$0xff] %v3931
        %4444 = vst [vmem:[%s179 + $0xe0] sm:$0xff] %v3932
        %4445 = vst [vmem:[%s179 + $0xe8] sm:$0xff] %v3933
        %4446 = vst [vmem:[%s179 + $0xf0] sm:$0xff] %v3934
        %4447 = vst [vmem:[%s179 + $0xf8] sm:$0xff] %v3935
        %4448 = vst [vmem:[%s179 + $0x100] sm:$0xff] %v3936
        %4449 = vst [vmem:[%s179 + $0x108] sm:$0xff] %v3937
        %4450 = vst [vmem:[%s179 + $0x110] sm:$0xff] %v3938
        %4451 = vst [vmem:[%s179 + $0x118] sm:$0xff] %v3939
        %4452 = vst [vmem:[%s179 + $0x120] sm:$0xff] %v3940
        %4453 = vst [vmem:[%s179 + $0x128] sm:$0xff] %v3941
        %4454 = vst [vmem:[%s179 + $0x130] sm:$0xff] %v3942
        %4455 = vst [vmem:[%s179 + $0x138] sm:$0xff] %v3943
        %4456 = vst [vmem:[%s179 + $0x140] sm:$0xff] %v3944
        %4457 = vst [vmem:[%s179 + $0x148] sm:$0xff] %v3945
        %4458 = vst [vmem:[%s179 + $0x150] sm:$0xff] %v3946
        %4459 = vst [vmem:[%s179 + $0x158] sm:$0xff] %v3947
        %4460 = vst [vmem:[%s179 + $0x160] sm:$0xff] %v3948
        %4461 = vst [vmem:[%s179 + $0x168] sm:$0xff] %v3949
        %4462 = vst [vmem:[%s179 + $0x170] sm:$0xff] %v3950
        %4463 = vst [vmem:[%s179 + $0x178] sm:$0xff] %v3951
        %4464 = vst [vmem:[%s179 + $0x180] sm:$0xff] %v3952
        %4465 = vst [vmem:[%s179 + $0x188] sm:$0xff] %v3953
        %4466 = vst [vmem:[%s179 + $0x190] sm:$0xff] %v3954
        %4467 = vst [vmem:[%s179 + $0x198] sm:$0xff] %v3955
        %4468 = vst [vmem:[%s179 + $0x1a0] sm:$0xff] %v3956
        %4469 = vst [vmem:[%s179 + $0x1a8] sm:$0xff] %v3957
        %4470 = vst [vmem:[%s179 + $0x1b0] sm:$0xff] %v3958
        %4471 = vst [vmem:[%s179 + $0x1b8] sm:$0xff] %v3959
        %4472 = vst [vmem:[%s179 + $0x1c0] sm:$0xff] %v3960
        %4473 = vst [vmem:[%s179 + $0x1c8] sm:$0xff] %v3961
        %4474 = vst [vmem:[%s179 + $0x1d0] sm:$0xff] %v3962
        %4475 = vst [vmem:[%s179 + $0x1d8] sm:$0xff] %v3963
        %4476 = vst [vmem:[%s179 + $0x1e0] sm:$0xff] %v3964
        %4477 = vst [vmem:[%s179 + $0x1e8] sm:$0xff] %v3965
        %4478 = vst [vmem:[%s179 + $0x1f0] sm:$0xff] %v3966
        %4479 = vst [vmem:[%s179 + $0x1f8] sm:$0xff] %v3967
        %4480 = vst [vmem:[%s179 + $0x200] sm:$0xff] %v3968
        %4481 = vst [vmem:[%s179 + $0x208] sm:$0xff] %v3969
        %4482 = vst [vmem:[%s179 + $0x210] sm:$0xff] %v3970
        %4483 = vst [vmem:[%s179 + $0x218] sm:$0xff] %v3971
        %4484 = vst [vmem:[%s179 + $0x220] sm:$0xff] %v3972
        %4485 = vst [vmem:[%s179 + $0x228] sm:$0xff] %v3973
        %4486 = vst [vmem:[%s179 + $0x230] sm:$0xff] %v3974
        %4487 = vst [vmem:[%s179 + $0x238] sm:$0xff] %v3975
        %4488 = vst [vmem:[%s179 + $0x240] sm:$0xff] %v3976
        %4489 = vst [vmem:[%s179 + $0x248] sm:$0xff] %v3977
        %4490 = vst [vmem:[%s179 + $0x250] sm:$0xff] %v3978
        %4491 = vst [vmem:[%s179 + $0x258] sm:$0xff] %v3979
        %4492 = vst [vmem:[%s179 + $0x260] sm:$0xff] %v3980
        %4493 = vst [vmem:[%s179 + $0x268] sm:$0xff] %v3981
        %4494 = vst [vmem:[%s179 + $0x270] sm:$0xff] %v3982
        %4495 = vst [vmem:[%s179 + $0x278] sm:$0xff] %v3983
        %4496 = vst [vmem:[%s179 + $0x280] sm:$0xff] %v3984
        %4497 = vst [vmem:[%s179 + $0x288] sm:$0xff] %v3985
        %4498 = vst [vmem:[%s179 + $0x290] sm:$0xff] %v3986
        %4499 = vst [vmem:[%s179 + $0x298] sm:$0xff] %v3987
        %4500 = vst [vmem:[%s179 + $0x2a0] sm:$0xff] %v3988
        %4501 = vst [vmem:[%s179 + $0x2a8] sm:$0xff] %v3989
        %4502 = vst [vmem:[%s179 + $0x2b0] sm:$0xff] %v3990
        %4503 = vst [vmem:[%s179 + $0x2b8] sm:$0xff] %v3991
        %4504 = vst [vmem:[%s179 + $0x2c0] sm:$0xff] %v3992
        %4505 = vst [vmem:[%s179 + $0x2c8] sm:$0xff] %v3993
        %4506 = vst [vmem:[%s179 + $0x2d0] sm:$0xff] %v3994
        %4507 = vst [vmem:[%s179 + $0x2d8] sm:$0xff] %v3995
        %4508 = vst [vmem:[%s179 + $0x2e0] sm:$0xff] %v3996
        %4509 = vst [vmem:[%s179 + $0x2e8] sm:$0xff] %v3997
        %4510 = vst [vmem:[%s179 + $0x2f0] sm:$0xff] %v3998
        %4511 = vst [vmem:[%s179 + $0x2f8] sm:$0xff] %v3999
        %4512 = vst [vmem:[%s179 + $0x300] sm:$0xff] %v4000
        %4513 = vst [vmem:[%s179 + $0x308] sm:$0xff] %v4001
        %4514 = vst [vmem:[%s179 + $0x310] sm:$0xff] %v4002
        %4515 = vst [vmem:[%s179 + $0x318] sm:$0xff] %v4003
        %4516 = vst [vmem:[%s179 + $0x320] sm:$0xff] %v4004
        %4517 = vst [vmem:[%s179 + $0x328] sm:$0xff] %v4005
        %4518 = vst [vmem:[%s179 + $0x330] sm:$0xff] %v4006
        %4519 = vst [vmem:[%s179 + $0x338] sm:$0xff] %v4007
        %4520 = vst [vmem:[%s179 + $0x340] sm:$0xff] %v4008
        %4521 = vst [vmem:[%s179 + $0x348] sm:$0xff] %v4009
        %4522 = vst [vmem:[%s179 + $0x350] sm:$0xff] %v4010
        %4523 = vst [vmem:[%s179 + $0x358] sm:$0xff] %v4011
        %4524 = vst [vmem:[%s179 + $0x360] sm:$0xff] %v4012
        %4525 = vst [vmem:[%s179 + $0x368] sm:$0xff] %v4013
        %4526 = vst [vmem:[%s179 + $0x370] sm:$0xff] %v4014
        %4527 = vst [vmem:[%s179 + $0x378] sm:$0xff] %v4015
        %4528 = vst [vmem:[%s179 + $0x380] sm:$0xff] %v4016
        %4529 = vst [vmem:[%s179 + $0x388] sm:$0xff] %v4017
        %4530 = vst [vmem:[%s179 + $0x390] sm:$0xff] %v4018
        %4531 = vst [vmem:[%s179 + $0x398] sm:$0xff] %v4019
        %4532 = vst [vmem:[%s179 + $0x3a0] sm:$0xff] %v4020
        %4533 = vst [vmem:[%s179 + $0x3a8] sm:$0xff] %v4021
        %4534 = vst [vmem:[%s179 + $0x3b0] sm:$0xff] %v4022
        %4535 = vst [vmem:[%s179 + $0x3b8] sm:$0xff] %v4023
        %4536 = vst [vmem:[%s179 + $0x3c0] sm:$0xff] %v4024
        %4537 = vst [vmem:[%s179 + $0x3c8] sm:$0xff] %v4025
        %4538 = vst [vmem:[%s179 + $0x3d0] sm:$0xff] %v4026
        %4539 = vst [vmem:[%s179 + $0x3d8] sm:$0xff] %v4027
        %4540 = vst [vmem:[%s179 + $0x3e0] sm:$0xff] %v4028
        %4541 = vst [vmem:[%s179 + $0x3e8] sm:$0xff] %v4029
        %4542 = vst [vmem:[%s179 + $0x3f0] sm:$0xff] %v4030
        %4543 = vst [vmem:[%s179 + $0x3f8] sm:$0xff] %v4031
        %4544 = vst [vmem:[%s179 + $0x400] sm:$0xff] %v4032
        %4545 = vst [vmem:[%s179 + $0x408] sm:$0xff] %v4033
        %4546 = vst [vmem:[%s179 + $0x410] sm:$0xff] %v4034
        %4547 = vst [vmem:[%s179 + $0x418] sm:$0xff] %v4035
        %4548 = vst [vmem:[%s179 + $0x420] sm:$0xff] %v4036
        %4549 = vst [vmem:[%s179 + $0x428] sm:$0xff] %v4037
        %4550 = vst [vmem:[%s179 + $0x430] sm:$0xff] %v4038
        %4551 = vst [vmem:[%s179 + $0x438] sm:$0xff] %v4039
        %4552 = vst [vmem:[%s179 + $0x440] sm:$0xff] %v4040
        %4553 = vst [vmem:[%s179 + $0x448] sm:$0xff] %v4041
        %4554 = vst [vmem:[%s179 + $0x450] sm:$0xff] %v4042
        %4555 = vst [vmem:[%s179 + $0x458] sm:$0xff] %v4043
        %4556 = vst [vmem:[%s179 + $0x460] sm:$0xff] %v4044
        %4557 = vst [vmem:[%s179 + $0x468] sm:$0xff] %v4045
        %4558 = vst [vmem:[%s179 + $0x470] sm:$0xff] %v4046
        %4559 = vst [vmem:[%s179 + $0x478] sm:$0xff] %v4047
        %4560 = vst [vmem:[%s179 + $0x480] sm:$0xff] %v4048
        %4561 = vst [vmem:[%s179 + $0x488] sm:$0xff] %v4049
        %4562 = vst [vmem:[%s179 + $0x490] sm:$0xff] %v4050
        %4563 = vst [vmem:[%s179 + $0x498] sm:$0xff] %v4051
        %4564 = vst [vmem:[%s179 + $0x4a0] sm:$0xff] %v4052
        %4565 = vst [vmem:[%s179 + $0x4a8] sm:$0xff] %v4053
        %4566 = vst [vmem:[%s179 + $0x4b0] sm:$0xff] %v4054
        %4567 = vst [vmem:[%s179 + $0x4b8] sm:$0xff] %v4055
        %4568 = vst [vmem:[%s179 + $0x4c0] sm:$0xff] %v4056
        %4569 = vst [vmem:[%s179 + $0x4c8] sm:$0xff] %v4057
        %4570 = vst [vmem:[%s179 + $0x4d0] sm:$0xff] %v4058
        %4571 = vst [vmem:[%s179 + $0x4d8] sm:$0xff] %v4059
        %4572 = vst [vmem:[%s179 + $0x4e0] sm:$0xff] %v4060
        %4573 = vst [vmem:[%s179 + $0x4e8] sm:$0xff] %v4061
        %4574 = vst [vmem:[%s179 + $0x4f0] sm:$0xff] %v4062
        %4575 = vst [vmem:[%s179 + $0x4f8] sm:$0xff] %v4063
        %4576 = vst [vmem:[%s179 + $0x500] sm:$0xff] %v4064
        %4577 = vst [vmem:[%s179 + $0x508] sm:$0xff] %v4065
        %4578 = vst [vmem:[%s179 + $0x510] sm:$0xff] %v4066
        %4579 = vst [vmem:[%s179 + $0x518] sm:$0xff] %v4067
        %4580 = vst [vmem:[%s179 + $0x520] sm:$0xff] %v4068
        %4581 = vst [vmem:[%s179 + $0x528] sm:$0xff] %v4069
        %4582 = vst [vmem:[%s179 + $0x530] sm:$0xff] %v4070
        %4583 = vst [vmem:[%s179 + $0x538] sm:$0xff] %v4071
        %4584 = vst [vmem:[%s179 + $0x540] sm:$0xff] %v4072
        %4585 = vst [vmem:[%s179 + $0x548] sm:$0xff] %v4073
        %4586 = vst [vmem:[%s179 + $0x550] sm:$0xff] %v4074
        %4587 = vst [vmem:[%s179 + $0x558] sm:$0xff] %v4075
        %4588 = vst [vmem:[%s179 + $0x560] sm:$0xff] %v4076
        %4589 = vst [vmem:[%s179 + $0x568] sm:$0xff] %v4077
        %4590 = vst [vmem:[%s179 + $0x570] sm:$0xff] %v4078
        %4591 = vst [vmem:[%s179 + $0x578] sm:$0xff] %v4079
        %4592 = vst [vmem:[%s179 + $0x580] sm:$0xff] %v4080
        %4593 = vst [vmem:[%s179 + $0x588] sm:$0xff] %v4081
        %4594 = vst [vmem:[%s179 + $0x590] sm:$0xff] %v4082
        %4595 = vst [vmem:[%s179 + $0x598] sm:$0xff] %v4083
        %4596 = vst [vmem:[%s179 + $0x5a0] sm:$0xff] %v4084
        %4597 = vst [vmem:[%s179 + $0x5a8] sm:$0xff] %v4085
        %4598 = vst [vmem:[%s179 + $0x5b0] sm:$0xff] %v4086
        %4599 = vst [vmem:[%s179 + $0x5b8] sm:$0xff] %v4087
        %4600 = vst [vmem:[%s179 + $0x5c0] sm:$0xff] %v4088
        %4601 = vst [vmem:[%s179 + $0x5c8] sm:$0xff] %v4089
        %4602 = vst [vmem:[%s179 + $0x5d0] sm:$0xff] %v4090
        %4603 = vst [vmem:[%s179 + $0x5d8] sm:$0xff] %v4091
        %4604 = vst [vmem:[%s179 + $0x5e0] sm:$0xff] %v4092
        %4605 = vst [vmem:[%s179 + $0x5e8] sm:$0xff] %v4093
        %4606 = vst [vmem:[%s179 + $0x5f0] sm:$0xff] %v4094
        %4607 = vst [vmem:[%s179 + $0x5f8] sm:$0xff] %v4095
        %4608 = vst [vmem:[%s179 + $0x600] sm:$0xff] %v4096
        %4609 = vst [vmem:[%s179 + $0x608] sm:$0xff] %v4097
        %4610 = vst [vmem:[%s179 + $0x610] sm:$0xff] %v4098
        %4611 = vst [vmem:[%s179 + $0x618] sm:$0xff] %v4099
        %4612 = vst [vmem:[%s179 + $0x620] sm:$0xff] %v4100
        %4613 = vst [vmem:[%s179 + $0x628] sm:$0xff] %v4101
        %4614 = vst [vmem:[%s179 + $0x630] sm:$0xff] %v4102
        %4615 = vst [vmem:[%s179 + $0x638] sm:$0xff] %v4103
        %4616 = vst [vmem:[%s179 + $0x640] sm:$0xff] %v4104
        %4617 = vst [vmem:[%s179 + $0x648] sm:$0xff] %v4105
        %4618 = vst [vmem:[%s179 + $0x650] sm:$0xff] %v4106
        %4619 = vst [vmem:[%s179 + $0x658] sm:$0xff] %v4107
        %4620 = vst [vmem:[%s179 + $0x660] sm:$0xff] %v4108
        %4621 = vst [vmem:[%s179 + $0x668] sm:$0xff] %v4109
        %4622 = vst [vmem:[%s179 + $0x670] sm:$0xff] %v4110
        %4623 = vst [vmem:[%s179 + $0x678] sm:$0xff] %v4111
        %4624 = vst [vmem:[%s179 + $0x680] sm:$0xff] %v4112
        %4625 = vst [vmem:[%s179 + $0x688] sm:$0xff] %v4113
        %4626 = vst [vmem:[%s179 + $0x690] sm:$0xff] %v4114
        %4627 = vst [vmem:[%s179 + $0x698] sm:$0xff] %v4115
        %4628 = vst [vmem:[%s179 + $0x6a0] sm:$0xff] %v4116
        %4629 = vst [vmem:[%s179 + $0x6a8] sm:$0xff] %v4117
        %4630 = vst [vmem:[%s179 + $0x6b0] sm:$0xff] %v4118
        %4631 = vst [vmem:[%s179 + $0x6b8] sm:$0xff] %v4119
        %4632 = vst [vmem:[%s179 + $0x6c0] sm:$0xff] %v4120
        %4633 = vst [vmem:[%s179 + $0x6c8] sm:$0xff] %v4121
        %4634 = vst [vmem:[%s179 + $0x6d0] sm:$0xff] %v4122
        %4635 = vst [vmem:[%s179 + $0x6d8] sm:$0xff] %v4123
        %4636 = vst [vmem:[%s179 + $0x6e0] sm:$0xff] %v4124
        %4637 = vst [vmem:[%s179 + $0x6e8] sm:$0xff] %v4125
        %4638 = vst [vmem:[%s179 + $0x6f0] sm:$0xff] %v4126
        %4639 = vst [vmem:[%s179 + $0x6f8] sm:$0xff] %v4127
        %4640 = vst [vmem:[%s179 + $0x700] sm:$0xff] %v4128
        %4641 = vst [vmem:[%s179 + $0x708] sm:$0xff] %v4129
        %4642 = vst [vmem:[%s179 + $0x710] sm:$0xff] %v4130
        %4643 = vst [vmem:[%s179 + $0x718] sm:$0xff] %v4131
        %4644 = vst [vmem:[%s179 + $0x720] sm:$0xff] %v4132
        %4645 = vst [vmem:[%s179 + $0x728] sm:$0xff] %v4133
        %4646 = vst [vmem:[%s179 + $0x730] sm:$0xff] %v4134
        %4647 = vst [vmem:[%s179 + $0x738] sm:$0xff] %v4135
        %4648 = vst [vmem:[%s179 + $0x740] sm:$0xff] %v4136
        %4649 = vst [vmem:[%s179 + $0x748] sm:$0xff] %v4137
        %4650 = vst [vmem:[%s179 + $0x750] sm:$0xff] %v4138
        %4651 = vst [vmem:[%s179 + $0x758] sm:$0xff] %v4139
        %4652 = vst [vmem:[%s179 + $0x760] sm:$0xff] %v4140
        %4653 = vst [vmem:[%s179 + $0x768] sm:$0xff] %v4141
        %4654 = vst [vmem:[%s179 + $0x770] sm:$0xff] %v4142
        %4655 = vst [vmem:[%s179 + $0x778] sm:$0xff] %v4143
        %4656 = vst [vmem:[%s179 + $0x780] sm:$0xff] %v4144
        %4657 = vst [vmem:[%s179 + $0x788] sm:$0xff] %v4145
        %4658 = vst [vmem:[%s179 + $0x790] sm:$0xff] %v4146
        %4659 = vst [vmem:[%s179 + $0x798] sm:$0xff] %v4147
        %4660 = vst [vmem:[%s179 + $0x7a0] sm:$0xff] %v4148
        %4661 = vst [vmem:[%s179 + $0x7a8] sm:$0xff] %v4149
        %4662 = vst [vmem:[%s179 + $0x7b0] sm:$0xff] %v4150
        %4663 = vst [vmem:[%s179 + $0x7b8] sm:$0xff] %v4151
        %4664 = vst [vmem:[%s179 + $0x7c0] sm:$0xff] %v4152
        %4665 = vst [vmem:[%s179 + $0x7c8] sm:$0xff] %v4153
        %4666 = vst [vmem:[%s179 + $0x7d0] sm:$0xff] %v4154
        %4667 = vst [vmem:[%s179 + $0x7d8] sm:$0xff] %v4155
        %4668 = vst [vmem:[%s179 + $0x7e0] sm:$0xff] %v4156
        %4669 = vst [vmem:[%s179 + $0x7e8] sm:$0xff] %v4157
        %4670 = vst [vmem:[%s179 + $0x7f0] sm:$0xff] %v4158
        %4671 = vst [vmem:[%s179 + $0x7f8] sm:$0xff] %v4159
        %4672 = vst [vmem:[%s179 + $0x800] sm:$0xff] %v4160
        %4673 = vst [vmem:[%s179 + $0x808] sm:$0xff] %v4161
        %4674 = vst [vmem:[%s179 + $0x810] sm:$0xff] %v4162
        %4675 = vst [vmem:[%s179 + $0x818] sm:$0xff] %v4163
        %4676 = vst [vmem:[%s179 + $0x820] sm:$0xff] %v4164
        %4677 = vst [vmem:[%s179 + $0x828] sm:$0xff] %v4165
        %4678 = vst [vmem:[%s179 + $0x830] sm:$0xff] %v4166
        %4679 = vst [vmem:[%s179 + $0x838] sm:$0xff] %v4167
        %4680 = vst [vmem:[%s179 + $0x840] sm:$0xff] %v4168
        %4681 = vst [vmem:[%s179 + $0x848] sm:$0xff] %v4169
        %4682 = vst [vmem:[%s179 + $0x850] sm:$0xff] %v4170
        %4683 = vst [vmem:[%s179 + $0x858] sm:$0xff] %v4171
        %4684 = vst [vmem:[%s179 + $0x860] sm:$0xff] %v4172
        %4685 = vst [vmem:[%s179 + $0x868] sm:$0xff] %v4173
        %4686 = vst [vmem:[%s179 + $0x870] sm:$0xff] %v4174
        %4687 = vst [vmem:[%s179 + $0x878] sm:$0xff] %v4175
        %4688 = vst [vmem:[%s179 + $0x880] sm:$0xff] %v4176
        %4689 = vst [vmem:[%s179 + $0x888] sm:$0xff] %v4177
        %4690 = vst [vmem:[%s179 + $0x890] sm:$0xff] %v4178
        %4691 = vst [vmem:[%s179 + $0x898] sm:$0xff] %v4179
        %4692 = vst [vmem:[%s179 + $0x8a0] sm:$0xff] %v4180
        %4693 = vst [vmem:[%s179 + $0x8a8] sm:$0xff] %v4181
        %4694 = vst [vmem:[%s179 + $0x8b0] sm:$0xff] %v4182
        %4695 = vst [vmem:[%s179 + $0x8b8] sm:$0xff] %v4183
        %4696 = vst [vmem:[%s179 + $0x8c0] sm:$0xff] %v4184
        %4697 = vst [vmem:[%s179 + $0x8c8] sm:$0xff] %v4185
        %4698 = vst [vmem:[%s179 + $0x8d0] sm:$0xff] %v4186
        %4699 = vst [vmem:[%s179 + $0x8d8] sm:$0xff] %v4187
        %4700 = vst [vmem:[%s179 + $0x8e0] sm:$0xff] %v4188
        %4701 = vst [vmem:[%s179 + $0x8e8] sm:$0xff] %v4189
        %4702 = vst [vmem:[%s179 + $0x8f0] sm:$0xff] %v4190
        %4703 = vst [vmem:[%s179 + $0x8f8] sm:$0xff] %v4191
        %4704 = vst [vmem:[%s179 + $0x900] sm:$0xff] %v4192
        %4705 = vst [vmem:[%s179 + $0x908] sm:$0xff] %v4193
        %4706 = vst [vmem:[%s179 + $0x910] sm:$0xff] %v4194
        %4707 = vst [vmem:[%s179 + $0x918] sm:$0xff] %v4195
        %4708 = vst [vmem:[%s179 + $0x920] sm:$0xff] %v4196
        %4709 = vst [vmem:[%s179 + $0x928] sm:$0xff] %v4197
        %4710 = vst [vmem:[%s179 + $0x930] sm:$0xff] %v4198
        %4711 = vst [vmem:[%s179 + $0x938] sm:$0xff] %v4199
        %4712 = vst [vmem:[%s179 + $0x940] sm:$0xff] %v4200
        %4713 = vst [vmem:[%s179 + $0x948] sm:$0xff] %v4201
        %4714 = vst [vmem:[%s179 + $0x950] sm:$0xff] %v4202
        %4715 = vst [vmem:[%s179 + $0x958] sm:$0xff] %v4203
        %4716 = vst [vmem:[%s179 + $0x960] sm:$0xff] %v4204
        %4717 = vst [vmem:[%s179 + $0x968] sm:$0xff] %v4205
        %4718 = vst [vmem:[%s179 + $0x970] sm:$0xff] %v4206
        %4719 = vst [vmem:[%s179 + $0x978] sm:$0xff] %v4207
        %4720 = vst [vmem:[%s179 + $0x980] sm:$0xff] %v4208
        %4721 = vst [vmem:[%s179 + $0x988] sm:$0xff] %v4209
        %4722 = vst [vmem:[%s179 + $0x990] sm:$0xff] %v4210
        %4723 = vst [vmem:[%s179 + $0x998] sm:$0xff] %v4211
        %4724 = vst [vmem:[%s179 + $0x9a0] sm:$0xff] %v4212
        %4725 = vst [vmem:[%s179 + $0x9a8] sm:$0xff] %v4213
        %4726 = vst [vmem:[%s179 + $0x9b0] sm:$0xff] %v4214
        %4727 = vst [vmem:[%s179 + $0x9b8] sm:$0xff] %v4215
        %4728 = vst [vmem:[%s179 + $0x9c0] sm:$0xff] %v4216
        %4729 = vst [vmem:[%s179 + $0x9c8] sm:$0xff] %v4217
        %4730 = vst [vmem:[%s179 + $0x9d0] sm:$0xff] %v4218
        %4731 = vst [vmem:[%s179 + $0x9d8] sm:$0xff] %v4219
        %4732 = vst [vmem:[%s179 + $0x9e0] sm:$0xff] %v4220
        %4733 = vst [vmem:[%s179 + $0x9e8] sm:$0xff] %v4221
        %4734 = vst [vmem:[%s179 + $0x9f0] sm:$0xff] %v4222
        %4735 = vst [vmem:[%s179 + $0x9f8] sm:$0xff] %v4223
        %4736 = vst [vmem:[%s179 + $0xa00] sm:$0xff] %v4224
        %4737 = vst [vmem:[%s179 + $0xa08] sm:$0xff] %v4225
        %4738 = vst [vmem:[%s179 + $0xa10] sm:$0xff] %v4226
        %4739 = vst [vmem:[%s179 + $0xa18] sm:$0xff] %v4227
        %4740 = vst [vmem:[%s179 + $0xa20] sm:$0xff] %v4228
        %4741 = vst [vmem:[%s179 + $0xa28] sm:$0xff] %v4229
        %4742 = vst [vmem:[%s179 + $0xa30] sm:$0xff] %v4230
        %4743 = vst [vmem:[%s179 + $0xa38] sm:$0xff] %v4231
        %4744 = vst [vmem:[%s179 + $0xa40] sm:$0xff] %v4232
        %4745 = vst [vmem:[%s179 + $0xa48] sm:$0xff] %v4233
        %4746 = vst [vmem:[%s179 + $0xa50] sm:$0xff] %v4234
        %4747 = vst [vmem:[%s179 + $0xa58] sm:$0xff] %v4235
        %4748 = vst [vmem:[%s179 + $0xa60] sm:$0xff] %v4236
        %4749 = vst [vmem:[%s179 + $0xa68] sm:$0xff] %v4237
        %4750 = vst [vmem:[%s179 + $0xa70] sm:$0xff] %v4238
        %4751 = vst [vmem:[%s179 + $0xa78] sm:$0xff] %v4239
        %4752 = vst [vmem:[%s179 + $0xa80] sm:$0xff] %v4240
        %4753 = vst [vmem:[%s179 + $0xa88] sm:$0xff] %v4241
        %4754 = vst [vmem:[%s179 + $0xa90] sm:$0xff] %v4242
        %4755 = vst [vmem:[%s179 + $0xa98] sm:$0xff] %v4243
        %4756 = vst [vmem:[%s179 + $0xaa0] sm:$0xff] %v4244
        %4757 = vst [vmem:[%s179 + $0xaa8] sm:$0xff] %v4245
        %4758 = vst [vmem:[%s179 + $0xab0] sm:$0xff] %v4246
        %4759 = vst [vmem:[%s179 + $0xab8] sm:$0xff] %v4247
        %4760 = vst [vmem:[%s179 + $0xac0] sm:$0xff] %v4248
        %4761 = vst [vmem:[%s179 + $0xac8] sm:$0xff] %v4249
        %4762 = vst [vmem:[%s179 + $0xad0] sm:$0xff] %v4250
        %4763 = vst [vmem:[%s179 + $0xad8] sm:$0xff] %v4251
        %4764 = vst [vmem:[%s179 + $0xae0] sm:$0xff] %v4252
        %4765 = vst [vmem:[%s179 + $0xae8] sm:$0xff] %v4253
        %4766 = vst [vmem:[%s179 + $0xaf0] sm:$0xff] %v4254
        %4767 = vst [vmem:[%s179 + $0xaf8] sm:$0xff] %v4255
        %4768 = vst [vmem:[%s179 + $0xb00] sm:$0xff] %v4256
        %4769 = vst [vmem:[%s179 + $0xb08] sm:$0xff] %v4257
        %4770 = vst [vmem:[%s179 + $0xb10] sm:$0xff] %v4258
        %4771 = vst [vmem:[%s179 + $0xb18] sm:$0xff] %v4259
        %4772 = vst [vmem:[%s179 + $0xb20] sm:$0xff] %v4260
        %4773 = vst [vmem:[%s179 + $0xb28] sm:$0xff] %v4261
        %4774 = vst [vmem:[%s179 + $0xb30] sm:$0xff] %v4262
        %4775 = vst [vmem:[%s179 + $0xb38] sm:$0xff] %v4263
        %4776 = vst [vmem:[%s179 + $0xb40] sm:$0xff] %v4264
        %4777 = vst [vmem:[%s179 + $0xb48] sm:$0xff] %v4265
        %4778 = vst [vmem:[%s179 + $0xb50] sm:$0xff] %v4266
        %4779 = vst [vmem:[%s179 + $0xb58] sm:$0xff] %v4267
        %4780 = vst [vmem:[%s179 + $0xb60] sm:$0xff] %v4268
        %4781 = vst [vmem:[%s179 + $0xb68] sm:$0xff] %v4269
        %4782 = vst [vmem:[%s179 + $0xb70] sm:$0xff] %v4270
        %4783 = vst [vmem:[%s179 + $0xb78] sm:$0xff] %v4271
        %4784 = vst [vmem:[%s179 + $0xb80] sm:$0xff] %v4272
        %4785 = vst [vmem:[%s179 + $0xb88] sm:$0xff] %v4273
        %4786 = vst [vmem:[%s179 + $0xb90] sm:$0xff] %v4274
        %4787 = vst [vmem:[%s179 + $0xb98] sm:$0xff] %v4275
        %4788 = vst [vmem:[%s179 + $0xba0] sm:$0xff] %v4276
        %4789 = vst [vmem:[%s179 + $0xba8] sm:$0xff] %v4277
        %4790 = vst [vmem:[%s179 + $0xbb0] sm:$0xff] %v4278
        %4791 = vst [vmem:[%s179 + $0xbb8] sm:$0xff] %v4279
        %4792 = vst [vmem:[%s179 + $0xbc0] sm:$0xff] %v4280
        %4793 = vst [vmem:[%s179 + $0xbc8] sm:$0xff] %v4281
        %4794 = vst [vmem:[%s179 + $0xbd0] sm:$0xff] %v4282
        %4795 = vst [vmem:[%s179 + $0xbd8] sm:$0xff] %v4283
        %4796 = vst [vmem:[%s179 + $0xbe0] sm:$0xff] %v4284
        %4797 = vst [vmem:[%s179 + $0xbe8] sm:$0xff] %v4285
        %4798 = vst [vmem:[%s179 + $0xbf0] sm:$0xff] %v4286
        %4799 = vst [vmem:[%s179 + $0xbf8] sm:$0xff] %v4287
        %4800 = vst [vmem:[%s179 + $0xc00] sm:$0xff] %v4288
        %4801 = vst [vmem:[%s179 + $0xc08] sm:$0xff] %v4289
        %4802 = vst [vmem:[%s179 + $0xc10] sm:$0xff] %v4290
        %4803 = vst [vmem:[%s179 + $0xc18] sm:$0xff] %v4291
        %4804 = vst [vmem:[%s179 + $0xc20] sm:$0xff] %v4292
        %4805 = vst [vmem:[%s179 + $0xc28] sm:$0xff] %v4293
        %4806 = vst [vmem:[%s179 + $0xc30] sm:$0xff] %v4294
        %4807 = vst [vmem:[%s179 + $0xc38] sm:$0xff] %v4295
        %4808 = vst [vmem:[%s179 + $0xc40] sm:$0xff] %v4296
        %4809 = vst [vmem:[%s179 + $0xc48] sm:$0xff] %v4297
        %4810 = vst [vmem:[%s179 + $0xc50] sm:$0xff] %v4298
        %4811 = vst [vmem:[%s179 + $0xc58] sm:$0xff] %v4299
        %4812 = vst [vmem:[%s179 + $0xc60] sm:$0xff] %v4300
        %4813 = vst [vmem:[%s179 + $0xc68] sm:$0xff] %v4301
        %4814 = vst [vmem:[%s179 + $0xc70] sm:$0xff] %v4302
        %4815 = vst [vmem:[%s179 + $0xc78] sm:$0xff] %v4303
        %4816 = vst [vmem:[%s179 + $0xc80] sm:$0xff] %v4304
        %4817 = vst [vmem:[%s179 + $0xc88] sm:$0xff] %v4305
        %4818 = vst [vmem:[%s179 + $0xc90] sm:$0xff] %v4306
        %4819 = vst [vmem:[%s179 + $0xc98] sm:$0xff] %v4307
        %4820 = vst [vmem:[%s179 + $0xca0] sm:$0xff] %v4308
        %4821 = vst [vmem:[%s179 + $0xca8] sm:$0xff] %v4309
        %4822 = vst [vmem:[%s179 + $0xcb0] sm:$0xff] %v4310
        %4823 = vst [vmem:[%s179 + $0xcb8] sm:$0xff] %v4311
        %4824 = vst [vmem:[%s179 + $0xcc0] sm:$0xff] %v4312
        %4825 = vst [vmem:[%s179 + $0xcc8] sm:$0xff] %v4313
        %4826 = vst [vmem:[%s179 + $0xcd0] sm:$0xff] %v4314
        %4827 = vst [vmem:[%s179 + $0xcd8] sm:$0xff] %v4315
        %4828 = vst [vmem:[%s179 + $0xce0] sm:$0xff] %v4316
        %4829 = vst [vmem:[%s179 + $0xce8] sm:$0xff] %v4317
        %4830 = vst [vmem:[%s179 + $0xcf0] sm:$0xff] %v4318
        %4831 = vst [vmem:[%s179 + $0xcf8] sm:$0xff] %v4319
        %4832 = vst [vmem:[%s179 + $0xd00] sm:$0xff] %v4320
        %4833 = vst [vmem:[%s179 + $0xd08] sm:$0xff] %v4321
        %4834 = vst [vmem:[%s179 + $0xd10] sm:$0xff] %v4322
        %4835 = vst [vmem:[%s179 + $0xd18] sm:$0xff] %v4323
        %4836 = vst [vmem:[%s179 + $0xd20] sm:$0xff] %v4324
        %4837 = vst [vmem:[%s179 + $0xd28] sm:$0xff] %v4325
        %4838 = vst [vmem:[%s179 + $0xd30] sm:$0xff] %v4326
        %4839 = vst [vmem:[%s179 + $0xd38] sm:$0xff] %v4327
        %4840 = vst [vmem:[%s179 + $0xd40] sm:$0xff] %v4328
        %4841 = vst [vmem:[%s179 + $0xd48] sm:$0xff] %v4329
        %4842 = vst [vmem:[%s179 + $0xd50] sm:$0xff] %v4330
        %4843 = vst [vmem:[%s179 + $0xd58] sm:$0xff] %v4331
        %4844 = vst [vmem:[%s179 + $0xd60] sm:$0xff] %v4332
        %4845 = vst [vmem:[%s179 + $0xd68] sm:$0xff] %v4333
        %4846 = vst [vmem:[%s179 + $0xd70] sm:$0xff] %v4334
        %4847 = vst [vmem:[%s179 + $0xd78] sm:$0xff] %v4335
        %4848 = vst [vmem:[%s179 + $0xd80] sm:$0xff] %v4336
        %4849 = vst [vmem:[%s179 + $0xd88] sm:$0xff] %v4337
        %4850 = vst [vmem:[%s179 + $0xd90] sm:$0xff] %v4338
        %4851 = vst [vmem:[%s179 + $0xd98] sm:$0xff] %v4339
        %4852 = vst [vmem:[%s179 + $0xda0] sm:$0xff] %v4340
        %4853 = vst [vmem:[%s179 + $0xda8] sm:$0xff] %v4341
        %4854 = vst [vmem:[%s179 + $0xdb0] sm:$0xff] %v4342
        %4855 = vst [vmem:[%s179 + $0xdb8] sm:$0xff] %v4343
        %4856 = vst [vmem:[%s179 + $0xdc0] sm:$0xff] %v4344
        %4857 = vst [vmem:[%s179 + $0xdc8] sm:$0xff] %v4345
        %4858 = vst [vmem:[%s179 + $0xdd0] sm:$0xff] %v4346
        %4859 = vst [vmem:[%s179 + $0xdd8] sm:$0xff] %v4347
        %4860 = vst [vmem:[%s179 + $0xde0] sm:$0xff] %v4348
        %4861 = vst [vmem:[%s179 + $0xde8] sm:$0xff] %v4349
        %4862 = vst [vmem:[%s179 + $0xdf0] sm:$0xff] %v4350
        %4863 = vst [vmem:[%s179 + $0xdf8] sm:$0xff] %v4351
        %4864 = vst [vmem:[%s179 + $0xe00] sm:$0xff] %v4352
        %4865 = vst [vmem:[%s179 + $0xe08] sm:$0xff] %v4353
        %4866 = vst [vmem:[%s179 + $0xe10] sm:$0xff] %v4354
        %4867 = vst [vmem:[%s179 + $0xe18] sm:$0xff] %v4355
        %4868 = vst [vmem:[%s179 + $0xe20] sm:$0xff] %v4356
        %4869 = vst [vmem:[%s179 + $0xe28] sm:$0xff] %v4357
        %4870 = vst [vmem:[%s179 + $0xe30] sm:$0xff] %v4358
        %4871 = vst [vmem:[%s179 + $0xe38] sm:$0xff] %v4359
        %4872 = vst [vmem:[%s179 + $0xe40] sm:$0xff] %v4360
        %4873 = vst [vmem:[%s179 + $0xe48] sm:$0xff] %v4361
        %4874 = vst [vmem:[%s179 + $0xe50] sm:$0xff] %v4362
        %4875 = vst [vmem:[%s179 + $0xe58] sm:$0xff] %v4363
        %4876 = vst [vmem:[%s179 + $0xe60] sm:$0xff] %v4364
        %4877 = vst [vmem:[%s179 + $0xe68] sm:$0xff] %v4365
        %4878 = vst [vmem:[%s179 + $0xe70] sm:$0xff] %v4366
        %4879 = vst [vmem:[%s179 + $0xe78] sm:$0xff] %v4367
        %4880 = vst [vmem:[%s179 + $0xe80] sm:$0xff] %v4368
        %4881 = vst [vmem:[%s179 + $0xe88] sm:$0xff] %v4369
        %4882 = vst [vmem:[%s179 + $0xe90] sm:$0xff] %v4370
        %4883 = vst [vmem:[%s179 + $0xe98] sm:$0xff] %v4371
        %4884 = vst [vmem:[%s179 + $0xea0] sm:$0xff] %v4372
        %4885 = vst [vmem:[%s179 + $0xea8] sm:$0xff] %v4373
        %4886 = vst [vmem:[%s179 + $0xeb0] sm:$0xff] %v4374
        %4887 = vst [vmem:[%s179 + $0xeb8] sm:$0xff] %v4375
        %4888 = vst [vmem:[%s179 + $0xec0] sm:$0xff] %v4376
        %4889 = vst [vmem:[%s179 + $0xec8] sm:$0xff] %v4377
        %4890 = vst [vmem:[%s179 + $0xed0] sm:$0xff] %v4378
        %4891 = vst [vmem:[%s179 + $0xed8] sm:$0xff] %v4379
        %4892 = vst [vmem:[%s179 + $0xee0] sm:$0xff] %v4380
        %4893 = vst [vmem:[%s179 + $0xee8] sm:$0xff] %v4381
        %4894 = vst [vmem:[%s179 + $0xef0] sm:$0xff] %v4382
        %4895 = vst [vmem:[%s179 + $0xef8] sm:$0xff] %v4383
        %4896 = vst [vmem:[%s179 + $0xf00] sm:$0xff] %v4384
        %4897 = vst [vmem:[%s179 + $0xf08] sm:$0xff] %v4385
        %4898 = vst [vmem:[%s179 + $0xf10] sm:$0xff] %v4386
        %4899 = vst [vmem:[%s179 + $0xf18] sm:$0xff] %v4387
        %4900 = vst [vmem:[%s179 + $0xf20] sm:$0xff] %v4388
        %4901 = vst [vmem:[%s179 + $0xf28] sm:$0xff] %v4389
        %4902 = vst [vmem:[%s179 + $0xf30] sm:$0xff] %v4390
        %4903 = vst [vmem:[%s179 + $0xf38] sm:$0xff] %v4391
        %4904 = vst [vmem:[%s179 + $0xf40] sm:$0xff] %v4392
        %4905 = vst [vmem:[%s179 + $0xf48] sm:$0xff] %v4393
        %4906 = vst [vmem:[%s179 + $0xf50] sm:$0xff] %v4394
        %4907 = vst [vmem:[%s179 + $0xf58] sm:$0xff] %v4395
        %4908 = vst [vmem:[%s179 + $0xf60] sm:$0xff] %v4396
        %4909 = vst [vmem:[%s179 + $0xf68] sm:$0xff] %v4397
        %4910 = vst [vmem:[%s179 + $0xf70] sm:$0xff] %v4398
        %4911 = vst [vmem:[%s179 + $0xf78] sm:$0xff] %v4399
        %4912 = vst [vmem:[%s179 + $0xf80] sm:$0xff] %v4400
        %4913 = vst [vmem:[%s179 + $0xf88] sm:$0xff] %v4401
        %4914 = vst [vmem:[%s179 + $0xf90] sm:$0xff] %v4402
        %4915 = vst [vmem:[%s179 + $0xf98] sm:$0xff] %v4403
        %4916 = vst [vmem:[%s179 + $0xfa0] sm:$0xff] %v4404
        %4917 = vst [vmem:[%s179 + $0xfa8] sm:$0xff] %v4405
        %4918 = vst [vmem:[%s179 + $0xfb0] sm:$0xff] %v4406
        %4919 = vst [vmem:[%s179 + $0xfb8] sm:$0xff] %v4407
        %4920 = vst [vmem:[%s179 + $0xfc0] sm:$0xff] %v4408
        %4921 = vst [vmem:[%s179 + $0xfc8] sm:$0xff] %v4409
        %4922 = vst [vmem:[%s179 + $0xfd0] sm:$0xff] %v4410
        %4923 = vst [vmem:[%s179 + $0xfd8] sm:$0xff] %v4411
        %4924 = vst [vmem:[%s179 + $0xfe0] sm:$0xff] %v4412
        %4925 = vst [vmem:[%s179 + $0xfe8] sm:$0xff] %v4413
        %4926 = vst [vmem:[%s179 + $0xff0] sm:$0xff] %v4414
        %4927 = vst [vmem:[%s179 + $0xff8] sm:$0xff] %v4415
        %s4928 = sand.u32 %s75, 1
        %s4929 = scalar_lea.sflag [#allocation4], %s4928
        %s4930 = sand.u32 %s75, 1
        %s4931 = smul.addr %s4930, 4096
        %s4932 = scalar_lea.vmem [#allocation7], %s4931
        // Predicated region
        $region37: #{tpu_custom_call.1} parent=27 // pred_check
          %p4933 = pneg %p85
        $region38: #{tpu_custom_call.1} parent=27 // pred_check_branch
          %4935 = sbr.rel (%p4933) target = $region40
        $region39: #{tpu_custom_call.1} parent=27 // pred_region
          %s4936 = smul.u32 128, %s20
          %4938 = vsyncadd %s4929, 0
          %s4939 = smul.addr %s4936, 4
          %s4940 = smul.addr %s4939, 8
          %s4941 = scalar_lea.hbm %s2, %s4940
          %s4942 = sshll.u32 %s4932, 4
          %s4943 = int_to_ptr.vmem [resolvable:$true] %s4942
          %s4944 = sshll.u32 %s4941, 4
          %s4945 = int_to_ptr.hbm [resolvable:$true] %s4944
          %4950 = dma.vmem_to_hbm [thread:$0]  %s4943, 65536, %s4945, %s4929, 512, 512, 32
        $region40: #{tpu_custom_call.1} parent=27 // pred_fallthru
          _
      $region28: #{tpu_custom_call.1} parent=5 // pred_fallthru
        _
      %p4951 = scmp.le.s32.totalorder 2, %s15
      // Predicated region
      $region41: #{tpu_custom_call.1} parent=5 // pred_check
        %p4952 = pneg %p4951
      $region42: #{tpu_custom_call.1} parent=5 // pred_check_branch
        %4954 = sbr.rel (%p4952) target = $region44
      $region43: #{tpu_custom_call.1} parent=5 // pred_region
        %s4955 = ssub.s32 %s15, 2
        // Predicated region
        $region45: #{tpu_custom_call.1} parent=43 // pred_check
          %p4956 = pneg %p91
        $region46: #{tpu_custom_call.1} parent=43 // pred_check_branch
          %4958 = sbr.rel (%p4956) target = $region48
        $region47: #{tpu_custom_call.1} parent=43 // pred_region
          %s4959 = sand.u32 %s76, 1
          %s4960 = scalar_lea.sflag [#allocation4], %s4959
          %s4961 = sand.u32 %s76, 1
          %s4962 = smul.addr %s4961, 4096
          %s4963 = scalar_lea.vmem [#allocation7], %s4962
          %4965 = dma.done %s4960, 65536
        $region48: #{tpu_custom_call.1} parent=43 // pred_fallthru
          _
      $region44: #{tpu_custom_call.1} parent=5 // pred_fallthru
        _
    $region6: #{tpu_custom_call.1} parent=1 // loop_footer
      %s19 = sadd.s32 1, %s15
    $region7: #{tpu_custom_call.1} parent=1 // loop_footer_branch
      %14 = sbr.rel target = $region3
    $region8: #{tpu_custom_call.1} parent=1 // loop_exit
      _
    %4966 = vsyncpa [#allocation3], 1
    %s4967 = scalar_lea.sflag [#allocation3], 1
    %4968 = vsyncpa %s4967, 1
    %4969 = vsyncpa [#allocation6], 1
    %4970 = vsyncpa [#allocation4], 1
    %s4971 = scalar_lea.sflag [#allocation4], 1
    %4972 = vsyncpa %s4971, 1

</llo_original>
